<compile_context>
chip_gen: v7x
topology: tpu7x:2x2x1
jax: 0.10.0
libtpu: 0.0.40
codegen_flags: <defaults>
</compile_context>

<pallas_src>
import jax
import jax.numpy as jnp
from jax import lax
from jax.experimental import pallas as pl
from jax.experimental.pallas import tpu as pltpu

NEG_BIG = -1e9  # matches torch masked_fill(mask == 0, -1000000000.0)


def _luong_decoder_kernel(x_ref, h0_ref, c0_ref, keys_ref, vals_ref,
                          tlen_ref, mlen_ref,
                          w_ih_ref, w_hh_ref, b_ref, w_join_ref, w_out_ref,
                          out_ref, attn_ref,
                          xg_sc, rnn_sc):
    T, B, H = x_ref.shape
    M = keys_ref.shape[1]
    V = out_ref.shape[-1]
    mxu_dt = w_hh_ref.dtype  # f32 by default; bf16 when prepared for MXU peak

    # ---- (1) input projection hoisted out of the recurrence: one (T*B, H)@(H, 4H) ----
    x_flat = x_ref[...].reshape(T * B, H)
    xg = jnp.dot(x_flat.astype(mxu_dt), w_ih_ref[...],
                 preferred_element_type=jnp.float32) + b_ref[...]
    xg_sc[...] = xg.reshape(T, B, 4 * H)

    # ---- (2) serial LSTM recurrence (PyTorch gate order [i, f, g, o]) ----
    def step(t, carry):
        h_prev, c_prev = carry
        gates = xg_sc[t] + jnp.dot(h_prev.astype(mxu_dt), w_hh_ref[...],
                                   preferred_element_type=jnp.float32)  # (B, 4H) f32
        i_g = jax.nn.sigmoid(gates[:, 0 * H:1 * H])
        f_g = jax.nn.sigmoid(gates[:, 1 * H:2 * H])
        g_g = jnp.tanh(gates[:, 2 * H:3 * H])
        o_g = jax.nn.sigmoid(gates[:, 3 * H:4 * H])
        c_new = f_g * c_prev + i_g * g_g
        h_new = o_g * jnp.tanh(c_new)
        rnn_sc[t] = h_new
        return (h_new, c_new)

    lax.fori_loop(0, T, step,
                  (h0_ref[...].astype(jnp.float32),
                   c0_ref[...].astype(jnp.float32)),
                  unroll=True)

    # ---- (3) everything below runs ONCE over all T*B rows ----
    # packed-sequence semantics: rnn_output rows are zero for t >= target_length[b]
    t_idx = lax.broadcasted_iota(jnp.int32, (T, B, 1), 0)
    rnn = jnp.where(t_idx < tlen_ref[...][None, :, :], rnn_sc[...], 0.0)  # (T, B, H)

    # masked Luong attention (Attention.forward_mask, rescale=False) on the VPU/XLU
    keys = keys_ref[...]                                                  # (B, M, H)
    vals = vals_ref[...]                                                  # (B, M, H)
    scores = jnp.sum(rnn[:, :, None, :] * keys[None, :, :, :], axis=-1)   # (T, B, M)
    mvalid = lax.broadcasted_iota(jnp.int32, (B, M), 1) < mlen_ref[...]   # (B, M)
    scores = jnp.where(mvalid[None, :, :], scores, NEG_BIG)
    s_max = jnp.max(scores, axis=-1, keepdims=True)
    p = jnp.exp(scores - s_max)
    attn = p * pl.reciprocal(jnp.sum(p, axis=-1, keepdims=True), approx=True)  # (T,B,M)
    ctx = jnp.sum(attn[:, :, :, None] * vals[None, :, :, :], axis=2)      # (T, B, H)

    # relu(join_context([rnn, ctx])) then hidden_to_output (both bias-free),
    # batched at M = T*B rows; the lane concat is 128-aligned (layout-free).
    joint = jnp.concatenate([rnn.reshape(T * B, H), ctx.reshape(T * B, H)], axis=-1)
    jc = jnp.maximum(jnp.dot(joint.astype(mxu_dt), w_join_ref[...],
                             preferred_element_type=jnp.float32), 0.0)    # (T*B, H)
    logits = jnp.dot(jc.astype(mxu_dt), w_out_ref[...],
                     preferred_element_type=jnp.float32)                  # (T*B, V)

    out_ref[...] = logits.reshape(T, B, V).astype(out_ref.dtype)
    attn_ref[...] = attn.astype(attn_ref.dtype)


def prepare_params(params, mxu_dtype=jnp.float32):
    """One-time layout prep (run once, OUTSIDE the hot path):
    * weights stored as (in_features, out_features) so the kernel never transposes,
    * LSTM biases pre-summed, join_context kept fused as one (2H, H) weight,
    * mxu_dtype=jnp.bfloat16 recommended for production on v5e/v6e/v7x
      (f32 accumulation is kept inside the kernel)."""
    return {
        'embedding': params['embedding'].astype(mxu_dtype),               # (V, H), row 0 = 0
        'w_ih_t': params['weight_ih_l0'].T.astype(mxu_dtype),             # (H, 4H)
        'w_hh_t': params['weight_hh_l0'].T.astype(mxu_dtype),             # (H, 4H)
        'b_gates': (params['bias_ih_l0'] + params['bias_hh_l0']
                    ).reshape(1, -1).astype(jnp.float32),                 # (1, 4H)
        'w_join_t': params['join_context'].T.astype(mxu_dtype),           # (2H, H)
        'w_out_t': params['hidden_to_output'].T.astype(mxu_dtype),        # (H, V)
    }


@jax.jit
def luong_decoder_forward(prepped, target_tokens, target_lengths, hidden,
                          attention_keys, attention_values,
                          attention_values_lengths):
    """Mirrors LuongDecoder.forward (attention=True, conditional_attention=False,
    num_layers=1, eval mode).  Returns (output [T,B,V], seq_len, attention_weights [B,T,M])."""
    h0_all, c0_all = hidden
    h0, c0 = h0_all[0], c0_all[0]                 # layer 0 of [num_layers, B, H]
    B, T = target_tokens.shape
    M, _, H = attention_keys.shape
    V = prepped['w_out_t'].shape[1]

    # Embedding gather straight into seq-major (T, B, H): no H-sized activation transpose.
    x_tbh = jnp.take(prepped['embedding'], target_tokens.T, axis=0)
    # Module interface is memory-major [M, B, H]; attention math is batch-major.
    keys_bmh = jnp.transpose(attention_keys, (1, 0, 2)).astype(jnp.float32)
    vals_bmh = jnp.transpose(attention_values, (1, 0, 2)).astype(jnp.float32)
    tlen = target_lengths.astype(jnp.int32).reshape(B, 1)
    mlen = attention_values_lengths.astype(jnp.int32).reshape(B, 1)

    flops = 2 * T * B * (2 * H * 4 * H        # x@W_ih + h@W_hh
                         + 2 * M * H          # attention scores + context
                         + 2 * H * H          # join_context
                         + H * V)             # hidden_to_output
    cost = pl.CostEstimate(
        flops=flops,
        transcendentals=T * B * (5 * H + M + 1),
        bytes_accessed=4 * (T * B * (H + V + M) + 2 * B * M * H + 2 * B * H
                            + 2 * H * 4 * H + 4 * H + 2 * H * H + H * V))

    vmem = pl.BlockSpec(memory_space=pltpu.MemorySpace.VMEM)
    out_tbv, attn_tbm = pl.pallas_call(
        _luong_decoder_kernel,
        out_shape=(jax.ShapeDtypeStruct((T, B, V), jnp.float32),
                   jax.ShapeDtypeStruct((T, B, M), jnp.float32)),
        in_specs=[vmem] * 12,                 # everything fits & stays resident in VMEM
        out_specs=(vmem, vmem),
        scratch_shapes=[pltpu.VMEM((T, B, 4 * H), jnp.float32),   # hoisted x@W_ih + b
                        pltpu.VMEM((T, B, H), jnp.float32)],      # rnn_output buffer
        cost_estimate=cost,
    )(x_tbh, h0, c0, keys_bmh, vals_bmh, tlen, mlen,
      prepped['w_ih_t'], prepped['w_hh_t'], prepped['b_gates'],
      prepped['w_join_t'], prepped['w_out_t'])

    attention_weights = jnp.transpose(attn_tbm, (1, 0, 2))        # [B, T, M] like PyTorch
    return out_tbv, target_lengths, attention_weights


if __name__ == "__main__":
    key = jax.random.PRNGKey(0)
    ks = jax.random.split(key, 12)

    B, T, M = 8, 8, 8          # batch, max_target_length, num_memory
    H, V = 128, 128            # hidden_size, output_size (lane-dense)
    PAD = 0                    # padding_idx

    def uinit(k, shape, fan_in):
        bound = 1.0 / jnp.sqrt(jnp.float32(fan_in))
        return jax.random.uniform(k, shape, jnp.float32, minval=-bound, maxval=bound)

    # ---- parameters in PyTorch layouts, prepared once for the kernel ----
    embedding = jax.random.normal(ks[0], (V, H), jnp.float32)
    embedding = embedding.at[PAD].set(0.0)                      # padding_idx=0
    params = {
        'embedding': embedding,
        'weight_ih_l0': uinit(ks[1], (4 * H, H), H),
        'weight_hh_l0': uinit(ks[2], (4 * H, H), H),
        'bias_ih_l0': uinit(ks[3], (4 * H,), H),
        'bias_hh_l0': uinit(ks[4], (4 * H,), H),
        'join_context': uinit(ks[5], (H, 2 * H), 2 * H),        # Linear(2H -> H, bias=False)
        'hidden_to_output': uinit(ks[6], (V, H), H),            # Linear(H -> V, bias=False)
    }
    prepped = prepare_params(params)   # use mxu_dtype=jnp.bfloat16 in production (all gens)

    # ---- inputs ----
    target_tokens = jax.random.randint(ks[7], (B, T), 1, V)
    target_lengths = jnp.array([8, 7, 5, 8, 5, 4, 6, 3], dtype=jnp.int32)
    tmask = jnp.arange(T)[None, :] < target_lengths[:, None]
    target_tokens = jnp.where(tmask, target_tokens, PAD)        # padded positions -> PAD

    encoder_message = jax.random.normal(ks[8], (B, H), jnp.float32) * 0.1
    hidden = (encoder_message[None, :, :], encoder_message[None, :, :])   # initialize_hidden

    attention_keys = jax.random.normal(ks[9], (M, B, H), jnp.float32) * 0.1
    attention_values = jax.random.normal(ks[10], (M, B, H), jnp.float32) * 0.1
    attention_values_lengths = jnp.array([8, 6, 8, 5, 7, 4, 8, 6], dtype=jnp.int32)

    out, seq_len, attn_w = luong_decoder_forward(
        prepped, target_tokens, target_lengths, hidden,
        attention_keys, attention_values, attention_values_lengths)
    out, attn_w = jax.block_until_ready((out, attn_w))

    # ---- plain-JAX reference of LuongDecoder.forward (eval mode) ----
    def reference():
        x = jnp.take(params['embedding'], target_tokens, axis=0)        # (B, T, H)
        x = jnp.transpose(x, (1, 0, 2))                                  # (T, B, H)
        h = encoder_message
        c = encoder_message
        outs = []
        for t in range(T):
            gates = (x[t] @ params['weight_ih_l0'].T + params['bias_ih_l0']
                     + h @ params['weight_hh_l0'].T + params['bias_hh_l0'])
            i = jax.nn.sigmoid(gates[:, :H]); f = jax.nn.sigmoid(gates[:, H:2 * H])
            g = jnp.tanh(gates[:, 2 * H:3 * H]); o = jax.nn.sigmoid(gates[:, 3 * H:])
            c = f * c + i * g
            h = o * jnp.tanh(c)
            outs.append(h)
        rnn = jnp.stack(outs)                                            # (T, B, H)
        rnn = rnn * (jnp.arange(T)[:, None] < target_lengths[None, :])[:, :, None]
        q = jnp.transpose(rnn, (1, 0, 2))
        k = jnp.transpose(attention_keys, (1, 0, 2))
        v = jnp.transpose(attention_values, (1, 0, 2))
        scores = jnp.einsum('bth,bmh->btm', q, k)
        mvalid = jnp.arange(M)[None, None, :] < attention_values_lengths[:, None, None]
        scores = jnp.where(mvalid, scores, NEG_BIG)
        attn = jax.nn.softmax(scores, axis=-1)                           # (B, T, M)
        ctx = jnp.einsum('btm,bmh->bth', attn, v)
        ctx = jnp.transpose(ctx, (1, 0, 2))                              # (T, B, H)
        joint = jnp.concatenate([rnn, ctx], axis=-1)                     # (T, B, 2H)
        jc = jax.nn.relu(joint @ params['join_context'].T)
        return jc @ params['hidden_to_output'].T, attn

    out_ref, attn_ref = reference()

    assert out.shape == (T, B, V) and attn_w.shape == (B, T, M)
    # tolerance accounts for TPU matmul-pass precision + approx reciprocal in softmax
    assert jnp.allclose(out, out_ref, atol=2e-2, rtol=2e-2)
    assert jnp.allclose(attn_w, attn_ref, atol=2e-2, rtol=2e-2)

    print("KERNEL_OK")
</pallas_src>

<mosaic_0001>
module attributes {stable_mosaic.version = 11 : i64} {
  func.func @_luong_decoder_kernel(%arg0: memref<8x8x128xf32, #tpu.memory_space<vmem>>, %arg1: memref<8x128xf32, #tpu.memory_space<vmem>>, %arg2: memref<8x128xf32, #tpu.memory_space<vmem>>, %arg3: memref<8x8x128xf32, #tpu.memory_space<vmem>>, %arg4: memref<8x8x128xf32, #tpu.memory_space<vmem>>, %arg5: memref<8x1xi32, #tpu.memory_space<vmem>>, %arg6: memref<8x1xi32, #tpu.memory_space<vmem>>, %arg7: memref<128x512xf32, #tpu.memory_space<vmem>>, %arg8: memref<128x512xf32, #tpu.memory_space<vmem>>, %arg9: memref<1x512xf32, #tpu.memory_space<vmem>>, %arg10: memref<256x128xf32, #tpu.memory_space<vmem>>, %arg11: memref<128x128xf32, #tpu.memory_space<vmem>>, %arg12: memref<8x8x128xf32, #tpu.memory_space<vmem>>, %arg13: memref<8x8x8xf32, #tpu.memory_space<vmem>>, %arg14: memref<8x8x512xf32, #tpu.memory_space<vmem>>, %arg15: memref<8x8x128xf32, #tpu.memory_space<vmem>>) attributes {dimension_semantics = [], scalar_prefetch = 0 : i64, scratch_operands = 2 : i64, tpu.core_type = #tpu.core_type<tc>} {
    %c0 = arith.constant 0 : index
    %c0_0 = arith.constant 0 : index
    %c0_1 = arith.constant 0 : index
    %0 = vector.load %arg0[%c0, %c0_0, %c0_1] : memref<8x8x128xf32, #tpu.memory_space<vmem>>, vector<8x8x128xf32>
    %1 = vector.shape_cast %0 : vector<8x8x128xf32> to vector<64x128xf32>
    %c0_2 = arith.constant 0 : index
    %c0_3 = arith.constant 0 : index
    %2 = vector.load %arg7[%c0_2, %c0_3] : memref<128x512xf32, #tpu.memory_space<vmem>>, vector<128x512xf32>
    %cst = arith.constant dense<0.000000e+00> : vector<64x512xf32>
    %3 = tpu.matmul %1, %2, %cst {dimension_numbers = #tpu.dot_dimension_numbers<[1], [0], [0], [1], [0, 0, 1, 1], [], []>} : vector<64x128xf32>, vector<128x512xf32>, vector<64x512xf32> -> vector<64x512xf32>
    %c0_4 = arith.constant 0 : index
    %c0_5 = arith.constant 0 : index
    %4 = vector.load %arg9[%c0_4, %c0_5] : memref<1x512xf32, #tpu.memory_space<vmem>>, vector<1x512xf32>
    %5 = vector.broadcast %4 : vector<1x512xf32> to vector<64x512xf32>
    %6 = arith.addf %3, %5 : vector<64x512xf32>
    %7 = vector.shape_cast %6 : vector<64x512xf32> to vector<8x8x512xf32>
    %c0_6 = arith.constant 0 : index
    %c0_7 = arith.constant 0 : index
    %c0_8 = arith.constant 0 : index
    %8 = vector.load %arg14[%c0_6, %c0_7, %c0_8] : memref<8x8x512xf32, #tpu.memory_space<vmem>>, vector<8x8x512xf32>
    tpu.vector_store %arg14[%c0_6, %c0_7, %c0_8], %7 {strides = array<i32>} : memref<8x8x512xf32, #tpu.memory_space<vmem>>, vector<8x8x512xf32>,
    %c0_9 = arith.constant 0 : index
    %c0_10 = arith.constant 0 : index
    %9 = vector.load %arg1[%c0_9, %c0_10] : memref<8x128xf32, #tpu.memory_space<vmem>>, vector<8x128xf32>
    %c0_11 = arith.constant 0 : index
    %c0_12 = arith.constant 0 : index
    %10 = vector.load %arg2[%c0_11, %c0_12] : memref<8x128xf32, #tpu.memory_space<vmem>>, vector<8x128xf32>
    %c0_i32 = arith.constant 0 : i32
    %11 = arith.index_cast %c0_i32 : i32 to index
    %c0_13 = arith.constant 0 : index
    %c0_14 = arith.constant 0 : index
    %12 = vector.load %arg14[%11, %c0_13, %c0_14] : memref<8x8x512xf32, #tpu.memory_space<vmem>>, vector<1x8x512xf32>
    %13 = vector.shape_cast %12 : vector<1x8x512xf32> to vector<8x512xf32>
    %c0_15 = arith.constant 0 : index
    %c0_16 = arith.constant 0 : index
    %14 = vector.load %arg8[%c0_15, %c0_16] : memref<128x512xf32, #tpu.memory_space<vmem>>, vector<128x512xf32>
    %cst_17 = arith.constant dense<0.000000e+00> : vector<8x512xf32>
    %15 = tpu.matmul %9, %14, %cst_17 {dimension_numbers = #tpu.dot_dimension_numbers<[1], [0], [0], [1], [0, 0, 1, 1], [], []>} : vector<8x128xf32>, vector<128x512xf32>, vector<8x512xf32> -> vector<8x512xf32>
    %16 = arith.addf %13, %15 : vector<8x512xf32>
    %17 = vector.extract_strided_slice %16 {offsets = [0, 0], sizes = [8, 128], strides = [1, 1]} : vector<8x512xf32> to vector<8x128xf32>
    %18 = arith.negf %17 : vector<8x128xf32>
    %19 = math.exp %18 : vector<8x128xf32>
    %cst_18 = arith.constant 1.000000e+00 : f32
    %20 = vector.broadcast %cst_18 : f32 to vector<8x128xf32>
    %21 = arith.addf %20, %19 : vector<8x128xf32>
    %22 = arith.divf %20, %21 : vector<8x128xf32>
    %23 = vector.extract_strided_slice %16 {offsets = [0, 128], sizes = [8, 128], strides = [1, 1]} : vector<8x512xf32> to vector<8x128xf32>
    %24 = arith.negf %23 : vector<8x128xf32>
    %25 = math.exp %24 : vector<8x128xf32>
    %cst_19 = arith.constant 1.000000e+00 : f32
    %26 = vector.broadcast %cst_19 : f32 to vector<8x128xf32>
    %27 = arith.addf %26, %25 : vector<8x128xf32>
    %28 = arith.divf %26, %27 : vector<8x128xf32>
    %29 = vector.extract_strided_slice %16 {offsets = [0, 256], sizes = [8, 128], strides = [1, 1]} : vector<8x512xf32> to vector<8x128xf32>
    %30 = math.tanh %29 : vector<8x128xf32>
    %31 = vector.extract_strided_slice %16 {offsets = [0, 384], sizes = [8, 128], strides = [1, 1]} : vector<8x512xf32> to vector<8x128xf32>
    %32 = arith.negf %31 : vector<8x128xf32>
    %33 = math.exp %32 : vector<8x128xf32>
    %cst_20 = arith.constant 1.000000e+00 : f32
    %34 = vector.broadcast %cst_20 : f32 to vector<8x128xf32>
    %35 = arith.addf %34, %33 : vector<8x128xf32>
    %36 = arith.divf %34, %35 : vector<8x128xf32>
    %37 = arith.mulf %28, %10 : vector<8x128xf32>
    %38 = arith.mulf %22, %30 : vector<8x128xf32>
    %39 = arith.addf %37, %38 : vector<8x128xf32>
    %40 = math.tanh %39 : vector<8x128xf32>
    %41 = arith.mulf %36, %40 : vector<8x128xf32>
    %42 = arith.index_cast %c0_i32 : i32 to index
    %c0_21 = arith.constant 0 : index
    %c0_22 = arith.constant 0 : index
    %43 = vector.load %arg15[%42, %c0_21, %c0_22] : memref<8x8x128xf32, #tpu.memory_space<vmem>>, vector<1x8x128xf32>
    %44 = vector.shape_cast %43 : vector<1x8x128xf32> to vector<8x128xf32>
    %45 = vector.shape_cast %41 : vector<8x128xf32> to vector<1x8x128xf32>
    tpu.vector_store %arg15[%42, %c0_21, %c0_22], %45 {strides = array<i32>} : memref<8x8x128xf32, #tpu.memory_space<vmem>>, vector<1x8x128xf32>,
    %c1_i32 = arith.constant 1 : i32
    %46 = arith.index_cast %c1_i32 : i32 to index
    %c0_23 = arith.constant 0 : index
    %c0_24 = arith.constant 0 : index
    %47 = vector.load %arg14[%46, %c0_23, %c0_24] : memref<8x8x512xf32, #tpu.memory_space<vmem>>, vector<1x8x512xf32>
    %48 = vector.shape_cast %47 : vector<1x8x512xf32> to vector<8x512xf32>
    %c0_25 = arith.constant 0 : index
    %c0_26 = arith.constant 0 : index
    %49 = vector.load %arg8[%c0_25, %c0_26] : memref<128x512xf32, #tpu.memory_space<vmem>>, vector<128x512xf32>
    %cst_27 = arith.constant dense<0.000000e+00> : vector<8x512xf32>
    %50 = tpu.matmul %41, %49, %cst_27 {dimension_numbers = #tpu.dot_dimension_numbers<[1], [0], [0], [1], [0, 0, 1, 1], [], []>} : vector<8x128xf32>, vector<128x512xf32>, vector<8x512xf32> -> vector<8x512xf32>
    %51 = arith.addf %48, %50 : vector<8x512xf32>
    %52 = vector.extract_strided_slice %51 {offsets = [0, 0], sizes = [8, 128], strides = [1, 1]} : vector<8x512xf32> to vector<8x128xf32>
    %53 = arith.negf %52 : vector<8x128xf32>
    %54 = math.exp %53 : vector<8x128xf32>
    %cst_28 = arith.constant 1.000000e+00 : f32
    %55 = vector.broadcast %cst_28 : f32 to vector<8x128xf32>
    %56 = arith.addf %55, %54 : vector<8x128xf32>
    %57 = arith.divf %55, %56 : vector<8x128xf32>
    %58 = vector.extract_strided_slice %51 {offsets = [0, 128], sizes = [8, 128], strides = [1, 1]} : vector<8x512xf32> to vector<8x128xf32>
    %59 = arith.negf %58 : vector<8x128xf32>
    %60 = math.exp %59 : vector<8x128xf32>
    %cst_29 = arith.constant 1.000000e+00 : f32
    %61 = vector.broadcast %cst_29 : f32 to vector<8x128xf32>
    %62 = arith.addf %61, %60 : vector<8x128xf32>
    %63 = arith.divf %61, %62 : vector<8x128xf32>
    %64 = vector.extract_strided_slice %51 {offsets = [0, 256], sizes = [8, 128], strides = [1, 1]} : vector<8x512xf32> to vector<8x128xf32>
    %65 = math.tanh %64 : vector<8x128xf32>
    %66 = vector.extract_strided_slice %51 {offsets = [0, 384], sizes = [8, 128], strides = [1, 1]} : vector<8x512xf32> to vector<8x128xf32>
    %67 = arith.negf %66 : vector<8x128xf32>
    %68 = math.exp %67 : vector<8x128xf32>
    %cst_30 = arith.constant 1.000000e+00 : f32
    %69 = vector.broadcast %cst_30 : f32 to vector<8x128xf32>
    %70 = arith.addf %69, %68 : vector<8x128xf32>
    %71 = arith.divf %69, %70 : vector<8x128xf32>
    %72 = arith.mulf %63, %39 : vector<8x128xf32>
    %73 = arith.mulf %57, %65 : vector<8x128xf32>
    %74 = arith.addf %72, %73 : vector<8x128xf32>
    %75 = math.tanh %74 : vector<8x128xf32>
    %76 = arith.mulf %71, %75 : vector<8x128xf32>
    %77 = arith.index_cast %c1_i32 : i32 to index
    %c0_31 = arith.constant 0 : index
    %c0_32 = arith.constant 0 : index
    %78 = vector.load %arg15[%77, %c0_31, %c0_32] : memref<8x8x128xf32, #tpu.memory_space<vmem>>, vector<1x8x128xf32>
    %79 = vector.shape_cast %78 : vector<1x8x128xf32> to vector<8x128xf32>
    %80 = vector.shape_cast %76 : vector<8x128xf32> to vector<1x8x128xf32>
    tpu.vector_store %arg15[%77, %c0_31, %c0_32], %80 {strides = array<i32>} : memref<8x8x128xf32, #tpu.memory_space<vmem>>, vector<1x8x128xf32>,
    %c2_i32 = arith.constant 2 : i32
    %81 = arith.index_cast %c2_i32 : i32 to index
    %c0_33 = arith.constant 0 : index
    %c0_34 = arith.constant 0 : index
    %82 = vector.load %arg14[%81, %c0_33, %c0_34] : memref<8x8x512xf32, #tpu.memory_space<vmem>>, vector<1x8x512xf32>
    %83 = vector.shape_cast %82 : vector<1x8x512xf32> to vector<8x512xf32>
    %c0_35 = arith.constant 0 : index
    %c0_36 = arith.constant 0 : index
    %84 = vector.load %arg8[%c0_35, %c0_36] : memref<128x512xf32, #tpu.memory_space<vmem>>, vector<128x512xf32>
    %cst_37 = arith.constant dense<0.000000e+00> : vector<8x512xf32>
    %85 = tpu.matmul %76, %84, %cst_37 {dimension_numbers = #tpu.dot_dimension_numbers<[1], [0], [0], [1], [0, 0, 1, 1], [], []>} : vector<8x128xf32>, vector<128x512xf32>, vector<8x512xf32> -> vector<8x512xf32>
    %86 = arith.addf %83, %85 : vector<8x512xf32>
    %87 = vector.extract_strided_slice %86 {offsets = [0, 0], sizes = [8, 128], strides = [1, 1]} : vector<8x512xf32> to vector<8x128xf32>
    %88 = arith.negf %87 : vector<8x128xf32>
    %89 = math.exp %88 : vector<8x128xf32>
    %cst_38 = arith.constant 1.000000e+00 : f32
    %90 = vector.broadcast %cst_38 : f32 to vector<8x128xf32>
    %91 = arith.addf %90, %89 : vector<8x128xf32>
    %92 = arith.divf %90, %91 : vector<8x128xf32>
    %93 = vector.extract_strided_slice %86 {offsets = [0, 128], sizes = [8, 128], strides = [1, 1]} : vector<8x512xf32> to vector<8x128xf32>
    %94 = arith.negf %93 : vector<8x128xf32>
    %95 = math.exp %94 : vector<8x128xf32>
    %cst_39 = arith.constant 1.000000e+00 : f32
    %96 = vector.broadcast %cst_39 : f32 to vector<8x128xf32>
    %97 = arith.addf %96, %95 : vector<8x128xf32>
    %98 = arith.divf %96, %97 : vector<8x128xf32>
    %99 = vector.extract_strided_slice %86 {offsets = [0, 256], sizes = [8, 128], strides = [1, 1]} : vector<8x512xf32> to vector<8x128xf32>
    %100 = math.tanh %99 : vector<8x128xf32>
    %101 = vector.extract_strided_slice %86 {offsets = [0, 384], sizes = [8, 128], strides = [1, 1]} : vector<8x512xf32> to vector<8x128xf32>
    %102 = arith.negf %101 : vector<8x128xf32>
    %103 = math.exp %102 : vector<8x128xf32>
    %cst_40 = arith.constant 1.000000e+00 : f32
    %104 = vector.broadcast %cst_40 : f32 to vector<8x128xf32>
    %105 = arith.addf %104, %103 : vector<8x128xf32>
    %106 = arith.divf %104, %105 : vector<8x128xf32>
    %107 = arith.mulf %98, %74 : vector<8x128xf32>
    %108 = arith.mulf %92, %100 : vector<8x128xf32>
    %109 = arith.addf %107, %108 : vector<8x128xf32>
    %110 = math.tanh %109 : vector<8x128xf32>
    %111 = arith.mulf %106, %110 : vector<8x128xf32>
    %112 = arith.index_cast %c2_i32 : i32 to index
    %c0_41 = arith.constant 0 : index
    %c0_42 = arith.constant 0 : index
    %113 = vector.load %arg15[%112, %c0_41, %c0_42] : memref<8x8x128xf32, #tpu.memory_space<vmem>>, vector<1x8x128xf32>
    %114 = vector.shape_cast %113 : vector<1x8x128xf32> to vector<8x128xf32>
    %115 = vector.shape_cast %111 : vector<8x128xf32> to vector<1x8x128xf32>
    tpu.vector_store %arg15[%112, %c0_41, %c0_42], %115 {strides = array<i32>} : memref<8x8x128xf32, #tpu.memory_space<vmem>>, vector<1x8x128xf32>,
    %c3_i32 = arith.constant 3 : i32
    %116 = arith.index_cast %c3_i32 : i32 to index
    %c0_43 = arith.constant 0 : index
    %c0_44 = arith.constant 0 : index
    %117 = vector.load %arg14[%116, %c0_43, %c0_44] : memref<8x8x512xf32, #tpu.memory_space<vmem>>, vector<1x8x512xf32>
    %118 = vector.shape_cast %117 : vector<1x8x512xf32> to vector<8x512xf32>
    %c0_45 = arith.constant 0 : index
    %c0_46 = arith.constant 0 : index
    %119 = vector.load %arg8[%c0_45, %c0_46] : memref<128x512xf32, #tpu.memory_space<vmem>>, vector<128x512xf32>
    %cst_47 = arith.constant dense<0.000000e+00> : vector<8x512xf32>
    %120 = tpu.matmul %111, %119, %cst_47 {dimension_numbers = #tpu.dot_dimension_numbers<[1], [0], [0], [1], [0, 0, 1, 1], [], []>} : vector<8x128xf32>, vector<128x512xf32>, vector<8x512xf32> -> vector<8x512xf32>
    %121 = arith.addf %118, %120 : vector<8x512xf32>
    %122 = vector.extract_strided_slice %121 {offsets = [0, 0], sizes = [8, 128], strides = [1, 1]} : vector<8x512xf32> to vector<8x128xf32>
    %123 = arith.negf %122 : vector<8x128xf32>
    %124 = math.exp %123 : vector<8x128xf32>
    %cst_48 = arith.constant 1.000000e+00 : f32
    %125 = vector.broadcast %cst_48 : f32 to vector<8x128xf32>
    %126 = arith.addf %125, %124 : vector<8x128xf32>
    %127 = arith.divf %125, %126 : vector<8x128xf32>
    %128 = vector.extract_strided_slice %121 {offsets = [0, 128], sizes = [8, 128], strides = [1, 1]} : vector<8x512xf32> to vector<8x128xf32>
    %129 = arith.negf %128 : vector<8x128xf32>
    %130 = math.exp %129 : vector<8x128xf32>
    %cst_49 = arith.constant 1.000000e+00 : f32
    %131 = vector.broadcast %cst_49 : f32 to vector<8x128xf32>
    %132 = arith.addf %131, %130 : vector<8x128xf32>
    %133 = arith.divf %131, %132 : vector<8x128xf32>
    %134 = vector.extract_strided_slice %121 {offsets = [0, 256], sizes = [8, 128], strides = [1, 1]} : vector<8x512xf32> to vector<8x128xf32>
    %135 = math.tanh %134 : vector<8x128xf32>
    %136 = vector.extract_strided_slice %121 {offsets = [0, 384], sizes = [8, 128], strides = [1, 1]} : vector<8x512xf32> to vector<8x128xf32>
    %137 = arith.negf %136 : vector<8x128xf32>
    %138 = math.exp %137 : vector<8x128xf32>
    %cst_50 = arith.constant 1.000000e+00 : f32
    %139 = vector.broadcast %cst_50 : f32 to vector<8x128xf32>
    %140 = arith.addf %139, %138 : vector<8x128xf32>
    %141 = arith.divf %139, %140 : vector<8x128xf32>
    %142 = arith.mulf %133, %109 : vector<8x128xf32>
    %143 = arith.mulf %127, %135 : vector<8x128xf32>
    %144 = arith.addf %142, %143 : vector<8x128xf32>
    %145 = math.tanh %144 : vector<8x128xf32>
    %146 = arith.mulf %141, %145 : vector<8x128xf32>
    %147 = arith.index_cast %c3_i32 : i32 to index
    %c0_51 = arith.constant 0 : index
    %c0_52 = arith.constant 0 : index
    %148 = vector.load %arg15[%147, %c0_51, %c0_52] : memref<8x8x128xf32, #tpu.memory_space<vmem>>, vector<1x8x128xf32>
    %149 = vector.shape_cast %148 : vector<1x8x128xf32> to vector<8x128xf32>
    %150 = vector.shape_cast %146 : vector<8x128xf32> to vector<1x8x128xf32>
    tpu.vector_store %arg15[%147, %c0_51, %c0_52], %150 {strides = array<i32>} : memref<8x8x128xf32, #tpu.memory_space<vmem>>, vector<1x8x128xf32>,
    %c4_i32 = arith.constant 4 : i32
    %151 = arith.index_cast %c4_i32 : i32 to index
    %c0_53 = arith.constant 0 : index
    %c0_54 = arith.constant 0 : index
    %152 = vector.load %arg14[%151, %c0_53, %c0_54] : memref<8x8x512xf32, #tpu.memory_space<vmem>>, vector<1x8x512xf32>
    %153 = vector.shape_cast %152 : vector<1x8x512xf32> to vector<8x512xf32>
    %c0_55 = arith.constant 0 : index
    %c0_56 = arith.constant 0 : index
    %154 = vector.load %arg8[%c0_55, %c0_56] : memref<128x512xf32, #tpu.memory_space<vmem>>, vector<128x512xf32>
    %cst_57 = arith.constant dense<0.000000e+00> : vector<8x512xf32>
    %155 = tpu.matmul %146, %154, %cst_57 {dimension_numbers = #tpu.dot_dimension_numbers<[1], [0], [0], [1], [0, 0, 1, 1], [], []>} : vector<8x128xf32>, vector<128x512xf32>, vector<8x512xf32> -> vector<8x512xf32>
    %156 = arith.addf %153, %155 : vector<8x512xf32>
    %157 = vector.extract_strided_slice %156 {offsets = [0, 0], sizes = [8, 128], strides = [1, 1]} : vector<8x512xf32> to vector<8x128xf32>
    %158 = arith.negf %157 : vector<8x128xf32>
    %159 = math.exp %158 : vector<8x128xf32>
    %cst_58 = arith.constant 1.000000e+00 : f32
    %160 = vector.broadcast %cst_58 : f32 to vector<8x128xf32>
    %161 = arith.addf %160, %159 : vector<8x128xf32>
    %162 = arith.divf %160, %161 : vector<8x128xf32>
    %163 = vector.extract_strided_slice %156 {offsets = [0, 128], sizes = [8, 128], strides = [1, 1]} : vector<8x512xf32> to vector<8x128xf32>
    %164 = arith.negf %163 : vector<8x128xf32>
    %165 = math.exp %164 : vector<8x128xf32>
    %cst_59 = arith.constant 1.000000e+00 : f32
    %166 = vector.broadcast %cst_59 : f32 to vector<8x128xf32>
    %167 = arith.addf %166, %165 : vector<8x128xf32>
    %168 = arith.divf %166, %167 : vector<8x128xf32>
    %169 = vector.extract_strided_slice %156 {offsets = [0, 256], sizes = [8, 128], strides = [1, 1]} : vector<8x512xf32> to vector<8x128xf32>
    %170 = math.tanh %169 : vector<8x128xf32>
    %171 = vector.extract_strided_slice %156 {offsets = [0, 384], sizes = [8, 128], strides = [1, 1]} : vector<8x512xf32> to vector<8x128xf32>
    %172 = arith.negf %171 : vector<8x128xf32>
    %173 = math.exp %172 : vector<8x128xf32>
    %cst_60 = arith.constant 1.000000e+00 : f32
    %174 = vector.broadcast %cst_60 : f32 to vector<8x128xf32>
    %175 = arith.addf %174, %173 : vector<8x128xf32>
    %176 = arith.divf %174, %175 : vector<8x128xf32>
    %177 = arith.mulf %168, %144 : vector<8x128xf32>
    %178 = arith.mulf %162, %170 : vector<8x128xf32>
    %179 = arith.addf %177, %178 : vector<8x128xf32>
    %180 = math.tanh %179 : vector<8x128xf32>
    %181 = arith.mulf %176, %180 : vector<8x128xf32>
    %182 = arith.index_cast %c4_i32 : i32 to index
    %c0_61 = arith.constant 0 : index
    %c0_62 = arith.constant 0 : index
    %183 = vector.load %arg15[%182, %c0_61, %c0_62] : memref<8x8x128xf32, #tpu.memory_space<vmem>>, vector<1x8x128xf32>
    %184 = vector.shape_cast %183 : vector<1x8x128xf32> to vector<8x128xf32>
    %185 = vector.shape_cast %181 : vector<8x128xf32> to vector<1x8x128xf32>
    tpu.vector_store %arg15[%182, %c0_61, %c0_62], %185 {strides = array<i32>} : memref<8x8x128xf32, #tpu.memory_space<vmem>>, vector<1x8x128xf32>,
    %c5_i32 = arith.constant 5 : i32
    %186 = arith.index_cast %c5_i32 : i32 to index
    %c0_63 = arith.constant 0 : index
    %c0_64 = arith.constant 0 : index
    %187 = vector.load %arg14[%186, %c0_63, %c0_64] : memref<8x8x512xf32, #tpu.memory_space<vmem>>, vector<1x8x512xf32>
    %188 = vector.shape_cast %187 : vector<1x8x512xf32> to vector<8x512xf32>
    %c0_65 = arith.constant 0 : index
    %c0_66 = arith.constant 0 : index
    %189 = vector.load %arg8[%c0_65, %c0_66] : memref<128x512xf32, #tpu.memory_space<vmem>>, vector<128x512xf32>
    %cst_67 = arith.constant dense<0.000000e+00> : vector<8x512xf32>
    %190 = tpu.matmul %181, %189, %cst_67 {dimension_numbers = #tpu.dot_dimension_numbers<[1], [0], [0], [1], [0, 0, 1, 1], [], []>} : vector<8x128xf32>, vector<128x512xf32>, vector<8x512xf32> -> vector<8x512xf32>
    %191 = arith.addf %188, %190 : vector<8x512xf32>
    %192 = vector.extract_strided_slice %191 {offsets = [0, 0], sizes = [8, 128], strides = [1, 1]} : vector<8x512xf32> to vector<8x128xf32>
    %193 = arith.negf %192 : vector<8x128xf32>
    %194 = math.exp %193 : vector<8x128xf32>
    %cst_68 = arith.constant 1.000000e+00 : f32
    %195 = vector.broadcast %cst_68 : f32 to vector<8x128xf32>
    %196 = arith.addf %195, %194 : vector<8x128xf32>
    %197 = arith.divf %195, %196 : vector<8x128xf32>
    %198 = vector.extract_strided_slice %191 {offsets = [0, 128], sizes = [8, 128], strides = [1, 1]} : vector<8x512xf32> to vector<8x128xf32>
    %199 = arith.negf %198 : vector<8x128xf32>
    %200 = math.exp %199 : vector<8x128xf32>
    %cst_69 = arith.constant 1.000000e+00 : f32
    %201 = vector.broadcast %cst_69 : f32 to vector<8x128xf32>
    %202 = arith.addf %201, %200 : vector<8x128xf32>
    %203 = arith.divf %201, %202 : vector<8x128xf32>
    %204 = vector.extract_strided_slice %191 {offsets = [0, 256], sizes = [8, 128], strides = [1, 1]} : vector<8x512xf32> to vector<8x128xf32>
    %205 = math.tanh %204 : vector<8x128xf32>
    %206 = vector.extract_strided_slice %191 {offsets = [0, 384], sizes = [8, 128], strides = [1, 1]} : vector<8x512xf32> to vector<8x128xf32>
    %207 = arith.negf %206 : vector<8x128xf32>
    %208 = math.exp %207 : vector<8x128xf32>
    %cst_70 = arith.constant 1.000000e+00 : f32
    %209 = vector.broadcast %cst_70 : f32 to vector<8x128xf32>
    %210 = arith.addf %209, %208 : vector<8x128xf32>
    %211 = arith.divf %209, %210 : vector<8x128xf32>
    %212 = arith.mulf %203, %179 : vector<8x128xf32>
    %213 = arith.mulf %197, %205 : vector<8x128xf32>
    %214 = arith.addf %212, %213 : vector<8x128xf32>
    %215 = math.tanh %214 : vector<8x128xf32>
    %216 = arith.mulf %211, %215 : vector<8x128xf32>
    %217 = arith.index_cast %c5_i32 : i32 to index
    %c0_71 = arith.constant 0 : index
    %c0_72 = arith.constant 0 : index
    %218 = vector.load %arg15[%217, %c0_71, %c0_72] : memref<8x8x128xf32, #tpu.memory_space<vmem>>, vector<1x8x128xf32>
    %219 = vector.shape_cast %218 : vector<1x8x128xf32> to vector<8x128xf32>
    %220 = vector.shape_cast %216 : vector<8x128xf32> to vector<1x8x128xf32>
    tpu.vector_store %arg15[%217, %c0_71, %c0_72], %220 {strides = array<i32>} : memref<8x8x128xf32, #tpu.memory_space<vmem>>, vector<1x8x128xf32>,
    %c6_i32 = arith.constant 6 : i32
    %221 = arith.index_cast %c6_i32 : i32 to index
    %c0_73 = arith.constant 0 : index
    %c0_74 = arith.constant 0 : index
    %222 = vector.load %arg14[%221, %c0_73, %c0_74] : memref<8x8x512xf32, #tpu.memory_space<vmem>>, vector<1x8x512xf32>
    %223 = vector.shape_cast %222 : vector<1x8x512xf32> to vector<8x512xf32>
    %c0_75 = arith.constant 0 : index
    %c0_76 = arith.constant 0 : index
    %224 = vector.load %arg8[%c0_75, %c0_76] : memref<128x512xf32, #tpu.memory_space<vmem>>, vector<128x512xf32>
    %cst_77 = arith.constant dense<0.000000e+00> : vector<8x512xf32>
    %225 = tpu.matmul %216, %224, %cst_77 {dimension_numbers = #tpu.dot_dimension_numbers<[1], [0], [0], [1], [0, 0, 1, 1], [], []>} : vector<8x128xf32>, vector<128x512xf32>, vector<8x512xf32> -> vector<8x512xf32>
    %226 = arith.addf %223, %225 : vector<8x512xf32>
    %227 = vector.extract_strided_slice %226 {offsets = [0, 0], sizes = [8, 128], strides = [1, 1]} : vector<8x512xf32> to vector<8x128xf32>
    %228 = arith.negf %227 : vector<8x128xf32>
    %229 = math.exp %228 : vector<8x128xf32>
    %cst_78 = arith.constant 1.000000e+00 : f32
    %230 = vector.broadcast %cst_78 : f32 to vector<8x128xf32>
    %231 = arith.addf %230, %229 : vector<8x128xf32>
    %232 = arith.divf %230, %231 : vector<8x128xf32>
    %233 = vector.extract_strided_slice %226 {offsets = [0, 128], sizes = [8, 128], strides = [1, 1]} : vector<8x512xf32> to vector<8x128xf32>
    %234 = arith.negf %233 : vector<8x128xf32>
    %235 = math.exp %234 : vector<8x128xf32>
    %cst_79 = arith.constant 1.000000e+00 : f32
    %236 = vector.broadcast %cst_79 : f32 to vector<8x128xf32>
    %237 = arith.addf %236, %235 : vector<8x128xf32>
    %238 = arith.divf %236, %237 : vector<8x128xf32>
    %239 = vector.extract_strided_slice %226 {offsets = [0, 256], sizes = [8, 128], strides = [1, 1]} : vector<8x512xf32> to vector<8x128xf32>
    %240 = math.tanh %239 : vector<8x128xf32>
    %241 = vector.extract_strided_slice %226 {offsets = [0, 384], sizes = [8, 128], strides = [1, 1]} : vector<8x512xf32> to vector<8x128xf32>
    %242 = arith.negf %241 : vector<8x128xf32>
    %243 = math.exp %242 : vector<8x128xf32>
    %cst_80 = arith.constant 1.000000e+00 : f32
    %244 = vector.broadcast %cst_80 : f32 to vector<8x128xf32>
    %245 = arith.addf %244, %243 : vector<8x128xf32>
    %246 = arith.divf %244, %245 : vector<8x128xf32>
    %247 = arith.mulf %238, %214 : vector<8x128xf32>
    %248 = arith.mulf %232, %240 : vector<8x128xf32>
    %249 = arith.addf %247, %248 : vector<8x128xf32>
    %250 = math.tanh %249 : vector<8x128xf32>
    %251 = arith.mulf %246, %250 : vector<8x128xf32>
    %252 = arith.index_cast %c6_i32 : i32 to index
    %c0_81 = arith.constant 0 : index
    %c0_82 = arith.constant 0 : index
    %253 = vector.load %arg15[%252, %c0_81, %c0_82] : memref<8x8x128xf32, #tpu.memory_space<vmem>>, vector<1x8x128xf32>
    %254 = vector.shape_cast %253 : vector<1x8x128xf32> to vector<8x128xf32>
    %255 = vector.shape_cast %251 : vector<8x128xf32> to vector<1x8x128xf32>
    tpu.vector_store %arg15[%252, %c0_81, %c0_82], %255 {strides = array<i32>} : memref<8x8x128xf32, #tpu.memory_space<vmem>>, vector<1x8x128xf32>,
    %c7_i32 = arith.constant 7 : i32
    %256 = arith.index_cast %c7_i32 : i32 to index
    %c0_83 = arith.constant 0 : index
    %c0_84 = arith.constant 0 : index
    %257 = vector.load %arg14[%256, %c0_83, %c0_84] : memref<8x8x512xf32, #tpu.memory_space<vmem>>, vector<1x8x512xf32>
    %258 = vector.shape_cast %257 : vector<1x8x512xf32> to vector<8x512xf32>
    %c0_85 = arith.constant 0 : index
    %c0_86 = arith.constant 0 : index
    %259 = vector.load %arg8[%c0_85, %c0_86] : memref<128x512xf32, #tpu.memory_space<vmem>>, vector<128x512xf32>
    %cst_87 = arith.constant dense<0.000000e+00> : vector<8x512xf32>
    %260 = tpu.matmul %251, %259, %cst_87 {dimension_numbers = #tpu.dot_dimension_numbers<[1], [0], [0], [1], [0, 0, 1, 1], [], []>} : vector<8x128xf32>, vector<128x512xf32>, vector<8x512xf32> -> vector<8x512xf32>
    %261 = arith.addf %258, %260 : vector<8x512xf32>
    %262 = vector.extract_strided_slice %261 {offsets = [0, 0], sizes = [8, 128], strides = [1, 1]} : vector<8x512xf32> to vector<8x128xf32>
    %263 = arith.negf %262 : vector<8x128xf32>
    %264 = math.exp %263 : vector<8x128xf32>
    %cst_88 = arith.constant 1.000000e+00 : f32
    %265 = vector.broadcast %cst_88 : f32 to vector<8x128xf32>
    %266 = arith.addf %265, %264 : vector<8x128xf32>
    %267 = arith.divf %265, %266 : vector<8x128xf32>
    %268 = vector.extract_strided_slice %261 {offsets = [0, 128], sizes = [8, 128], strides = [1, 1]} : vector<8x512xf32> to vector<8x128xf32>
    %269 = arith.negf %268 : vector<8x128xf32>
    %270 = math.exp %269 : vector<8x128xf32>
    %cst_89 = arith.constant 1.000000e+00 : f32
    %271 = vector.broadcast %cst_89 : f32 to vector<8x128xf32>
    %272 = arith.addf %271, %270 : vector<8x128xf32>
    %273 = arith.divf %271, %272 : vector<8x128xf32>
    %274 = vector.extract_strided_slice %261 {offsets = [0, 256], sizes = [8, 128], strides = [1, 1]} : vector<8x512xf32> to vector<8x128xf32>
    %275 = math.tanh %274 : vector<8x128xf32>
    %276 = vector.extract_strided_slice %261 {offsets = [0, 384], sizes = [8, 128], strides = [1, 1]} : vector<8x512xf32> to vector<8x128xf32>
    %277 = arith.negf %276 : vector<8x128xf32>
    %278 = math.exp %277 : vector<8x128xf32>
    %cst_90 = arith.constant 1.000000e+00 : f32
    %279 = vector.broadcast %cst_90 : f32 to vector<8x128xf32>
    %280 = arith.addf %279, %278 : vector<8x128xf32>
    %281 = arith.divf %279, %280 : vector<8x128xf32>
    %282 = arith.mulf %273, %249 : vector<8x128xf32>
    %283 = arith.mulf %267, %275 : vector<8x128xf32>
    %284 = arith.addf %282, %283 : vector<8x128xf32>
    %285 = math.tanh %284 : vector<8x128xf32>
    %286 = arith.mulf %281, %285 : vector<8x128xf32>
    %287 = arith.index_cast %c7_i32 : i32 to index
    %c0_91 = arith.constant 0 : index
    %c0_92 = arith.constant 0 : index
    %288 = vector.load %arg15[%287, %c0_91, %c0_92] : memref<8x8x128xf32, #tpu.memory_space<vmem>>, vector<1x8x128xf32>
    %289 = vector.shape_cast %288 : vector<1x8x128xf32> to vector<8x128xf32>
    %290 = vector.shape_cast %286 : vector<8x128xf32> to vector<1x8x128xf32>
    tpu.vector_store %arg15[%287, %c0_91, %c0_92], %290 {strides = array<i32>} : memref<8x8x128xf32, #tpu.memory_space<vmem>>, vector<1x8x128xf32>,
    %c8_i32 = arith.constant 8 : i32
    %291 = tpu.iota {dimensions = array<i32: 0>} : vector<8x8x1xi32>
    %c0_93 = arith.constant 0 : index
    %c0_94 = arith.constant 0 : index
    %292 = vector.load %arg5[%c0_93, %c0_94] : memref<8x1xi32, #tpu.memory_space<vmem>>, vector<8x1xi32>
    %293 = vector.shape_cast %292 : vector<8x1xi32> to vector<1x8x1xi32>
    %294 = vector.broadcast %293 : vector<1x8x1xi32> to vector<8x8x1xi32>
    %295 = arith.cmpi slt, %291, %294 : vector<8x8x1xi32>
    %c0_95 = arith.constant 0 : index
    %c0_96 = arith.constant 0 : index
    %c0_97 = arith.constant 0 : index
    %296 = vector.load %arg15[%c0_95, %c0_96, %c0_97] : memref<8x8x128xf32, #tpu.memory_space<vmem>>, vector<8x8x128xf32>
    %cst_98 = arith.constant 0.000000e+00 : f32
    %297 = vector.shape_cast %295 : vector<8x8x1xi1> to vector<8x8x1xi1>
    %298 = vector.broadcast %297 : vector<8x8x1xi1> to vector<8x8x128xi1>
    %299 = vector.broadcast %cst_98 : f32 to vector<8x8x128xf32>
    %300 = arith.select %298, %296, %299 : vector<8x8x128xi1>, vector<8x8x128xf32>
    %c0_99 = arith.constant 0 : index
    %c0_100 = arith.constant 0 : index
    %c0_101 = arith.constant 0 : index
    %301 = vector.load %arg3[%c0_99, %c0_100, %c0_101] : memref<8x8x128xf32, #tpu.memory_space<vmem>>, vector<8x8x128xf32>
    %c0_102 = arith.constant 0 : index
    %c0_103 = arith.constant 0 : index
    %c0_104 = arith.constant 0 : index
    %302 = vector.load %arg4[%c0_102, %c0_103, %c0_104] : memref<8x8x128xf32, #tpu.memory_space<vmem>>, vector<8x8x128xf32>
    %303 = vector.shape_cast %300 : vector<8x8x128xf32> to vector<8x8x1x128xf32>
    %304 = vector.shape_cast %301 : vector<8x8x128xf32> to vector<1x8x8x128xf32>
    %305 = vector.broadcast %303 : vector<8x8x1x128xf32> to vector<8x8x8x128xf32>
    %306 = vector.broadcast %304 : vector<1x8x8x128xf32> to vector<8x8x8x128xf32>
    %307 = arith.mulf %305, %306 : vector<8x8x8x128xf32>
    %cst_105 = arith.constant dense<0.000000e+00> : vector<8x8x8xf32>
    %308 = vector.multi_reduction <add>, %307, %cst_105 [3] : vector<8x8x8x128xf32> to vector<8x8x8xf32>
    %309 = tpu.iota {dimensions = array<i32: 1>} : vector<8x8xi32>
    %c0_106 = arith.constant 0 : index
    %c0_107 = arith.constant 0 : index
    %310 = vector.load %arg6[%c0_106, %c0_107] : memref<8x1xi32, #tpu.memory_space<vmem>>, vector<8x1xi32>
    %311 = vector.broadcast %310 : vector<8x1xi32> to vector<8x8xi32>
    %312 = arith.cmpi slt, %309, %311 : vector<8x8xi32>
    %313 = vector.shape_cast %312 : vector<8x8xi1> to vector<1x8x8xi1>
    %cst_108 = arith.constant -1.000000e+09 : f32
    %314 = vector.shape_cast %313 : vector<1x8x8xi1> to vector<1x8x8xi1>
    %315 = vector.broadcast %314 : vector<1x8x8xi1> to vector<8x8x8xi1>
    %316 = vector.broadcast %cst_108 : f32 to vector<8x8x8xf32>
    %317 = arith.select %315, %308, %316 : vector<8x8x8xi1>, vector<8x8x8xf32>
    %cst_109 = arith.constant dense<0xFF800000> : vector<8x8xf32>
    %318 = vector.multi_reduction <maximumf>, %317, %cst_109 [2] : vector<8x8x8xf32> to vector<8x8xf32>
    %319 = vector.shape_cast %318 : vector<8x8xf32> to vector<8x8x1xf32>
    %320 = vector.broadcast %319 : vector<8x8x1xf32> to vector<8x8x8xf32>
    %321 = arith.subf %317, %320 : vector<8x8x8xf32>
    %322 = math.exp %321 : vector<8x8x8xf32>
    %cst_110 = arith.constant dense<0.000000e+00> : vector<8x8xf32>
    %323 = vector.multi_reduction <add>, %322, %cst_110 [2] : vector<8x8x8xf32> to vector<8x8xf32>
    %324 = vector.shape_cast %323 : vector<8x8xf32> to vector<8x8x1xf32>
    %325 = tpu.reciprocal %324 {approx = true} : vector<8x8x1xf32> -> vector<8x8x1xf32>
    %326 = vector.broadcast %325 : vector<8x8x1xf32> to vector<8x8x8xf32>
    %327 = arith.mulf %322, %326 : vector<8x8x8xf32>
    %328 = vector.shape_cast %327 : vector<8x8x8xf32> to vector<8x8x8x1xf32>
    %329 = vector.shape_cast %302 : vector<8x8x128xf32> to vector<1x8x8x128xf32>
    %330 = vector.broadcast %328 : vector<8x8x8x1xf32> to vector<8x8x8x128xf32>
    %331 = vector.broadcast %329 : vector<1x8x8x128xf32> to vector<8x8x8x128xf32>
    %332 = arith.mulf %330, %331 : vector<8x8x8x128xf32>
    %cst_111 = arith.constant dense<0.000000e+00> : vector<8x8x128xf32>
    %333 = vector.multi_reduction <add>, %332, %cst_111 [2] : vector<8x8x8x128xf32> to vector<8x8x128xf32>
    %334 = vector.shape_cast %300 : vector<8x8x128xf32> to vector<64x128xf32>
    %335 = vector.shape_cast %333 : vector<8x8x128xf32> to vector<64x128xf32>
    %336 = tpu.concatenate %334, %335 in 1 : vector<64x128xf32>, vector<64x128xf32> -> vector<64x256xf32>
    %c0_112 = arith.constant 0 : index
    %c0_113 = arith.constant 0 : index
    %337 = vector.load %arg10[%c0_112, %c0_113] : memref<256x128xf32, #tpu.memory_space<vmem>>, vector<256x128xf32>
    %cst_114 = arith.constant dense<0.000000e+00> : vector<64x128xf32>
    %338 = tpu.matmul %336, %337, %cst_114 {dimension_numbers = #tpu.dot_dimension_numbers<[1], [0], [0], [1], [0, 0, 1, 1], [], []>} : vector<64x256xf32>, vector<256x128xf32>, vector<64x128xf32> -> vector<64x128xf32>
    %cst_115 = arith.constant 0.000000e+00 : f32
    %339 = vector.broadcast %cst_115 : f32 to vector<64x128xf32>
    %340 = arith.maximumf %338, %339 : vector<64x128xf32>
    %c0_116 = arith.constant 0 : index
    %c0_117 = arith.constant 0 : index
    %341 = vector.load %arg11[%c0_116, %c0_117] : memref<128x128xf32, #tpu.memory_space<vmem>>, vector<128x128xf32>
    %cst_118 = arith.constant dense<0.000000e+00> : vector<64x128xf32>
    %342 = tpu.matmul %340, %341, %cst_118 {dimension_numbers = #tpu.dot_dimension_numbers<[1], [0], [0], [1], [0, 0, 1, 1], [], []>} : vector<64x128xf32>, vector<128x128xf32>, vector<64x128xf32> -> vector<64x128xf32>
    %343 = vector.shape_cast %342 : vector<64x128xf32> to vector<8x8x128xf32>
    %c0_119 = arith.constant 0 : index
    %c0_120 = arith.constant 0 : index
    %c0_121 = arith.constant 0 : index
    %344 = vector.load %arg12[%c0_119, %c0_120, %c0_121] : memref<8x8x128xf32, #tpu.memory_space<vmem>>, vector<8x8x128xf32>
    tpu.vector_store %arg12[%c0_119, %c0_120, %c0_121], %343 {strides = array<i32>} : memref<8x8x128xf32, #tpu.memory_space<vmem>>, vector<8x8x128xf32>,
    %c0_122 = arith.constant 0 : index
    %c0_123 = arith.constant 0 : index
    %c0_124 = arith.constant 0 : index
    %345 = vector.load %arg13[%c0_122, %c0_123, %c0_124] : memref<8x8x8xf32, #tpu.memory_space<vmem>>, vector<8x8x8xf32>
    tpu.vector_store %arg13[%c0_122, %c0_123, %c0_124], %327 {strides = array<i32>} : memref<8x8x8xf32, #tpu.memory_space<vmem>>, vector<8x8x8xf32>,
    return
  }
}

</mosaic_0001>

<llo_original>
// kernel: luong_decoder_forward.1
$region0: #{luong_decoder_forward.1}
  #allocation0 [shape = 'u32[]', space=smem, size = 0x4, offset = 0x4, fixed_abs, tag = 'smem constant byte address 0x4 - core index']
  #allocation1 [shape = 'u32[144,128]{1,0:T(1,128)}', space=vmem, size = 0x12000, scoped, tag = 'internal scratch']
  #allocation2 [shape = 'f32[8,8,512]{2,1,0:T(8,128)}', space=vmem, size = 0x20000, scoped, tag = 'scratch operand']
  #allocation3 [shape = 'f32[8,8,128]{2,1,0:T(8,128)}', space=vmem, size = 0x8000, scoped, tag = 'scratch operand']
  %s0 = inlined_call_operand.vmem [shape: f32[8,8,128], index: 0, kind: input, shape index: {}]
  %s1 = inlined_call_operand.vmem [shape: f32[8,128], index: 1, kind: input, shape index: {}]
  %s2 = inlined_call_operand.vmem [shape: f32[8,128], index: 2, kind: input, shape index: {}]
  %s3 = inlined_call_operand.vmem [shape: f32[8,8,128], index: 3, kind: input, shape index: {}]
  %s4 = inlined_call_operand.vmem [shape: f32[8,8,128], index: 4, kind: input, shape index: {}]
  %s5 = inlined_call_operand.vmem [shape: s32[8,1], index: 5, kind: input, shape index: {}]
  %s6 = inlined_call_operand.vmem [shape: s32[8,1], index: 6, kind: input, shape index: {}]
  %s7 = inlined_call_operand.vmem [shape: f32[128,512], index: 7, kind: input, shape index: {}]
  %s8 = inlined_call_operand.vmem [shape: f32[128,512], index: 8, kind: input, shape index: {}]
  %s9 = inlined_call_operand.vmem [shape: f32[1,512], index: 9, kind: input, shape index: {}]
  %s10 = inlined_call_operand.hbm [shape: f32[256,128], index: 10, kind: input, shape index: {}]
  %s11 = inlined_call_operand.hbm [shape: f32[128,128], index: 11, kind: input, shape index: {}]
  %s12 = inlined_call_operand.hbm [shape: f32[8,8,128], index: 12, kind: output, shape index: {0}]
  %s13 = inlined_call_operand.vmem [shape: f32[8,8,8], index: 13, kind: output, shape index: {1}]
  %14 = xla_tuple %s12, %s13
  %s15 = sld [smem:[#allocation0]]
  $region74: #{luong_decoder_forward.1} parent=0
    _
  %s17 = ssub.s32 1, %s15
  %s18 = scalar_select 0, %s17, %s15
  $region1: #{luong_decoder_forward.1} parent=0
    #allocation4 [shape = 'u8[131072]{0}', space=vmem, size = 0x20000, scoped, tag = 'input window, operand 10, single buffered']
    #allocation5 [shape = 's32[1]{0}', space=sflag, size = 0x4, scoped, tag = 'scoped memory for luong_decoder_forward.1']
    #allocation6 [shape = 's32[1]{0}', space=sflag, size = 0x4, scoped, tag = 'scoped memory for luong_decoder_forward.1']
    #allocation7 [shape = 'u8[65536]{0}', space=vmem, size = 0x10000, scoped, tag = 'input window, operand 11, single buffered']
    #allocation8 [shape = 's32[1]{0}', space=sflag, size = 0x4, scoped, tag = 'scoped memory for luong_decoder_forward.1']
    #allocation9 [shape = 'u8[32768]{0}', space=vmem, size = 0x8000, scoped, tag = 'output window, operand 0, single buffered']
    %19 = vsyncpa [#allocation5], 0
    %20 = vsyncpa [#allocation8], 0
    %21 = vsyncpa [#allocation6], 0
    // Predicated region
    $region2: #{luong_decoder_forward.1} parent=1 // pred_check
      _
    $region3: #{luong_decoder_forward.1} parent=1 // pred_check_branch
      %23 = sbr.rel (0) target = $region5
    $region4: #{luong_decoder_forward.1} parent=1 // pred_region
      _
    $region5: #{luong_decoder_forward.1} parent=1 // pred_fallthru
      _
    // Predicated region
    $region6: #{luong_decoder_forward.1} parent=1 // pred_check
      _
    $region7: #{luong_decoder_forward.1} parent=1 // pred_check_branch
      %25 = sbr.rel (0) target = $region9
    $region8: #{luong_decoder_forward.1} parent=1 // pred_region
      _
    $region9: #{luong_decoder_forward.1} parent=1 // pred_fallthru
      _
    // Predicated region
    $region10: #{luong_decoder_forward.1} parent=1 // pred_check
      _
    $region11: #{luong_decoder_forward.1} parent=1 // pred_check_branch
      %27 = sbr.rel (0) target = $region13
    $region12: #{luong_decoder_forward.1} parent=1 // pred_region
      _
    $region13: #{luong_decoder_forward.1} parent=1 // pred_fallthru
      _
    // Predicated region
    $region14: #{luong_decoder_forward.1} parent=1 // pred_check
      _
    $region15: #{luong_decoder_forward.1} parent=1 // pred_check_branch
      %29 = sbr.rel (0) target = $region17
    $region16: #{luong_decoder_forward.1} parent=1 // pred_region
      _
    $region17: #{luong_decoder_forward.1} parent=1 // pred_fallthru
      _
    // Predicated region
    $region18: #{luong_decoder_forward.1} parent=1 // pred_check
      _
    $region19: #{luong_decoder_forward.1} parent=1 // pred_check_branch
      %31 = sbr.rel (0) target = $region21
    $region20: #{luong_decoder_forward.1} parent=1 // pred_region
      _
    $region21: #{luong_decoder_forward.1} parent=1 // pred_fallthru
      _
    // Predicated region
    $region22: #{luong_decoder_forward.1} parent=1 // pred_check
      _
    $region23: #{luong_decoder_forward.1} parent=1 // pred_check_branch
      %33 = sbr.rel (0) target = $region25
    $region24: #{luong_decoder_forward.1} parent=1 // pred_region
      _
    $region25: #{luong_decoder_forward.1} parent=1 // pred_fallthru
      _
    // Predicated region
    $region26: #{luong_decoder_forward.1} parent=1 // pred_check
      _
    $region27: #{luong_decoder_forward.1} parent=1 // pred_check_branch
      %35 = sbr.rel (0) target = $region29
    $region28: #{luong_decoder_forward.1} parent=1 // pred_region
      _
    $region29: #{luong_decoder_forward.1} parent=1 // pred_fallthru
      _
    // Predicated region
    $region30: #{luong_decoder_forward.1} parent=1 // pred_check
      _
    $region31: #{luong_decoder_forward.1} parent=1 // pred_check_branch
      %37 = sbr.rel (0) target = $region33
    $region32: #{luong_decoder_forward.1} parent=1 // pred_region
      _
    $region33: #{luong_decoder_forward.1} parent=1 // pred_fallthru
      _
    // Predicated region
    $region34: #{luong_decoder_forward.1} parent=1 // pred_check
      _
    $region35: #{luong_decoder_forward.1} parent=1 // pred_check_branch
      %39 = sbr.rel (0) target = $region37
    $region36: #{luong_decoder_forward.1} parent=1 // pred_region
      _
    $region37: #{luong_decoder_forward.1} parent=1 // pred_fallthru
      _
    // Predicated region
    $region38: #{luong_decoder_forward.1} parent=1 // pred_check
      _
    $region39: #{luong_decoder_forward.1} parent=1 // pred_check_branch
      %41 = sbr.rel (0) target = $region41
    $region40: #{luong_decoder_forward.1} parent=1 // pred_region
      _
    $region41: #{luong_decoder_forward.1} parent=1 // pred_fallthru
      _
    // Predicated region
    $region42: #{luong_decoder_forward.1} parent=1 // pred_check
      _
    $region43: #{luong_decoder_forward.1} parent=1 // pred_check_branch
      %43 = sbr.rel (0) target = $region45
    $region44: #{luong_decoder_forward.1} parent=1 // pred_region
      %s45 = ssub.s32 4096, 4096
      %46 = vsyncadd [#allocation5], %s45
      %s47 = sshll.u32 [#allocation4], 4
      %s48 = int_to_ptr.vmem [resolvable:$true] %s47
      %53 = dma.hbm_to_vmem [thread:$0]  %s10, 4096, %s48, [#allocation5], 128, 128, 8
    $region45: #{luong_decoder_forward.1} parent=1 // pred_fallthru
      _
    // Predicated region
    $region46: #{luong_decoder_forward.1} parent=1 // pred_check
      _
    $region47: #{luong_decoder_forward.1} parent=1 // pred_check_branch
      %55 = sbr.rel (0) target = $region49
    $region48: #{luong_decoder_forward.1} parent=1 // pred_region
      %s57 = ssub.s32 2048, 2048
      %58 = vsyncadd [#allocation8], %s57
      %s59 = sshll.u32 [#allocation7], 4
      %s60 = int_to_ptr.vmem [resolvable:$true] %s59
      %65 = dma.hbm_to_vmem [thread:$0]  %s11, 2048, %s60, [#allocation8], 128, 128, 8
    $region49: #{luong_decoder_forward.1} parent=1 // pred_fallthru
      _
    // Predicated region
    $region50: #{luong_decoder_forward.1} parent=1 // pred_check
      _
    $region51: #{luong_decoder_forward.1} parent=1 // pred_check_branch
      %67 = sbr.rel (0) target = $region53
    $region52: #{luong_decoder_forward.1} parent=1 // pred_region
      %68 = dma.done [#allocation5], 4096
    $region53: #{luong_decoder_forward.1} parent=1 // pred_fallthru
      _
    // Predicated region
    $region54: #{luong_decoder_forward.1} parent=1 // pred_check
      _
    $region55: #{luong_decoder_forward.1} parent=1 // pred_check_branch
      %70 = sbr.rel (0) target = $region57
    $region56: #{luong_decoder_forward.1} parent=1 // pred_region
      %71 = dma.done [#allocation8], 2048
    $region57: #{luong_decoder_forward.1} parent=1 // pred_fallthru
      _
    %v72 = vld [vmem:[%s0] sm:$0xff]
    %v73 = vld [vmem:[%s0 + $0x8] sm:$0xff]
    %v74 = vld [vmem:[%s0 + $0x10] sm:$0xff]
    %v75 = vld [vmem:[%s0 + $0x18] sm:$0xff]
    %v76 = vld [vmem:[%s0 + $0x20] sm:$0xff]
    %v77 = vld [vmem:[%s0 + $0x28] sm:$0xff]
    %v78 = vld [vmem:[%s0 + $0x30] sm:$0xff]
    %v79 = vld [vmem:[%s0 + $0x38] sm:$0xff]
    %v80 = vld [vmem:[%s7] sm:$0xff]
    %v81 = vld [vmem:[%s7 + $0x8] sm:$0xff]
    %v82 = vld [vmem:[%s7 + $0x10] sm:$0xff]
    %v83 = vld [vmem:[%s7 + $0x18] sm:$0xff]
    %v84 = vld [vmem:[%s7 + $0x20] sm:$0xff]
    %v85 = vld [vmem:[%s7 + $0x28] sm:$0xff]
    %v86 = vld [vmem:[%s7 + $0x30] sm:$0xff]
    %v87 = vld [vmem:[%s7 + $0x38] sm:$0xff]
    %v88 = vld [vmem:[%s7 + $0x40] sm:$0xff]
    %v89 = vld [vmem:[%s7 + $0x48] sm:$0xff]
    %v90 = vld [vmem:[%s7 + $0x50] sm:$0xff]
    %v91 = vld [vmem:[%s7 + $0x58] sm:$0xff]
    %v92 = vld [vmem:[%s7 + $0x60] sm:$0xff]
    %v93 = vld [vmem:[%s7 + $0x68] sm:$0xff]
    %v94 = vld [vmem:[%s7 + $0x70] sm:$0xff]
    %v95 = vld [vmem:[%s7 + $0x78] sm:$0xff]
    %v96 = vld [vmem:[%s7 + $0x80] sm:$0xff]
    %v97 = vld [vmem:[%s7 + $0x88] sm:$0xff]
    %v98 = vld [vmem:[%s7 + $0x90] sm:$0xff]
    %v99 = vld [vmem:[%s7 + $0x98] sm:$0xff]
    %v100 = vld [vmem:[%s7 + $0xa0] sm:$0xff]
    %v101 = vld [vmem:[%s7 + $0xa8] sm:$0xff]
    %v102 = vld [vmem:[%s7 + $0xb0] sm:$0xff]
    %v103 = vld [vmem:[%s7 + $0xb8] sm:$0xff]
    %v104 = vld [vmem:[%s7 + $0xc0] sm:$0xff]
    %v105 = vld [vmem:[%s7 + $0xc8] sm:$0xff]
    %v106 = vld [vmem:[%s7 + $0xd0] sm:$0xff]
    %v107 = vld [vmem:[%s7 + $0xd8] sm:$0xff]
    %v108 = vld [vmem:[%s7 + $0xe0] sm:$0xff]
    %v109 = vld [vmem:[%s7 + $0xe8] sm:$0xff]
    %v110 = vld [vmem:[%s7 + $0xf0] sm:$0xff]
    %v111 = vld [vmem:[%s7 + $0xf8] sm:$0xff]
    %v112 = vld [vmem:[%s7 + $0x100] sm:$0xff]
    %v113 = vld [vmem:[%s7 + $0x108] sm:$0xff]
    %v114 = vld [vmem:[%s7 + $0x110] sm:$0xff]
    %v115 = vld [vmem:[%s7 + $0x118] sm:$0xff]
    %v116 = vld [vmem:[%s7 + $0x120] sm:$0xff]
    %v117 = vld [vmem:[%s7 + $0x128] sm:$0xff]
    %v118 = vld [vmem:[%s7 + $0x130] sm:$0xff]
    %v119 = vld [vmem:[%s7 + $0x138] sm:$0xff]
    %v120 = vld [vmem:[%s7 + $0x140] sm:$0xff]
    %v121 = vld [vmem:[%s7 + $0x148] sm:$0xff]
    %v122 = vld [vmem:[%s7 + $0x150] sm:$0xff]
    %v123 = vld [vmem:[%s7 + $0x158] sm:$0xff]
    %v124 = vld [vmem:[%s7 + $0x160] sm:$0xff]
    %v125 = vld [vmem:[%s7 + $0x168] sm:$0xff]
    %v126 = vld [vmem:[%s7 + $0x170] sm:$0xff]
    %v127 = vld [vmem:[%s7 + $0x178] sm:$0xff]
    %v128 = vld [vmem:[%s7 + $0x180] sm:$0xff]
    %v129 = vld [vmem:[%s7 + $0x188] sm:$0xff]
    %v130 = vld [vmem:[%s7 + $0x190] sm:$0xff]
    %v131 = vld [vmem:[%s7 + $0x198] sm:$0xff]
    %v132 = vld [vmem:[%s7 + $0x1a0] sm:$0xff]
    %v133 = vld [vmem:[%s7 + $0x1a8] sm:$0xff]
    %v134 = vld [vmem:[%s7 + $0x1b0] sm:$0xff]
    %v135 = vld [vmem:[%s7 + $0x1b8] sm:$0xff]
    %v136 = vld [vmem:[%s7 + $0x1c0] sm:$0xff]
    %v137 = vld [vmem:[%s7 + $0x1c8] sm:$0xff]
    %v138 = vld [vmem:[%s7 + $0x1d0] sm:$0xff]
    %v139 = vld [vmem:[%s7 + $0x1d8] sm:$0xff]
    %v140 = vld [vmem:[%s7 + $0x1e0] sm:$0xff]
    %v141 = vld [vmem:[%s7 + $0x1e8] sm:$0xff]
    %v142 = vld [vmem:[%s7 + $0x1f0] sm:$0xff]
    %v143 = vld [vmem:[%s7 + $0x1f8] sm:$0xff]
    %v144 = vld [vmem:[%s9] sm:$0xf]
    %v146 = vlaneseq
    %v147 = vshrl.u32 %v146, 7
    %v148 = vsub.s32 0, %v147
    %v149 = vrot.slane %v144, %v148
    %v150 = vlaneseq
    %v151 = vshrl.u32 %v150, 7
    %v152 = vsub.s32 1, %v151
    %v153 = vrot.slane %v144, %v152
    %v154 = vlaneseq
    %v155 = vshrl.u32 %v154, 7
    %v156 = vsub.s32 2, %v155
    %v157 = vrot.slane %v144, %v156
    %v158 = vlaneseq
    %v159 = vshrl.u32 %v158, 7
    %v160 = vsub.s32 3, %v159
    %v161 = vrot.slane %v144, %v160
    %166 = vmatprep.subr.mxu0 %v81
    %167 = vmatpush1.msra.mxu0 %v80
    %168 = vmatprep.subr.mxu0 %v85
    %169 = vmatpush1.msra.mxu0 %v84
    %170 = vmatprep.subr.mxu0 %v89
    %171 = vmatpush1.msra.mxu0 %v88
    %172 = vmatprep.subr.mxu0 %v93
    %173 = vmatpush1.msra.mxu0 %v92
    %174 = vmatprep.subr.mxu0 %v97
    %175 = vmatpush1.msra.mxu0 %v96
    %176 = vmatprep.subr.mxu0 %v101
    %177 = vmatpush1.msra.mxu0 %v100
    %178 = vmatprep.subr.mxu0 %v105
    %179 = vmatpush1.msra.mxu0 %v104
    %180 = vmatprep.subr.mxu0 %v109
    %181 = vmatpush1.msra.mxu0 %v108
    %182 = vmatprep.subr.mxu0 %v113
    %183 = vmatpush1.msra.mxu0 %v112
    %184 = vmatprep.subr.mxu0 %v117
    %185 = vmatpush1.msra.mxu0 %v116
    %186 = vmatprep.subr.mxu0 %v121
    %187 = vmatpush1.msra.mxu0 %v120
    %188 = vmatprep.subr.mxu0 %v125
    %189 = vmatpush1.msra.mxu0 %v124
    %190 = vmatprep.subr.mxu0 %v129
    %191 = vmatpush1.msra.mxu0 %v128
    %192 = vmatprep.subr.mxu0 %v133
    %193 = vmatpush1.msra.mxu0 %v132
    %194 = vmatprep.subr.mxu0 %v137
    %195 = vmatpush1.msra.mxu0 %v136
    %196 = vmatprep.subr.mxu0 %v141
    %197 = vmatpush1.msra.mxu0 %v140
    %198 = vmatprep.subr.mxu0 0.0
    %199 = vmatpush1.msra.mxu0 0.0
    %200 = vmatprep.subr.mxu0 0.0
    %201 = vmatpush1.msra.mxu0 0.0
    %202 = vmatprep.subr.mxu0 0.0
    %203 = vmatpush1.msra.mxu0 0.0
    %204 = vmatprep.subr.mxu0 0.0
    %205 = vmatpush1.msra.mxu0 0.0
    %206 = vmatprep.subr.mxu0 0.0
    %207 = vmatpush1.msra.mxu0 0.0
    %208 = vmatprep.subr.mxu0 0.0
    %209 = vmatpush1.msra.mxu0 0.0
    %210 = vmatprep.subr.mxu0 0.0
    %211 = vmatpush1.msra.mxu0 0.0
    %212 = vmatprep.subr.mxu0 0.0
    %213 = vmatpush1.msra.mxu0 0.0
    %214 = vmatprep.subr.mxu0 0.0
    %215 = vmatpush1.msra.mxu0 0.0
    %216 = vmatprep.subr.mxu0 0.0
    %217 = vmatpush1.msra.mxu0 0.0
    %218 = vmatprep.subr.mxu0 0.0
    %219 = vmatpush1.msra.mxu0 0.0
    %220 = vmatprep.subr.mxu0 0.0
    %221 = vmatpush1.msra.mxu0 0.0
    %222 = vmatprep.subr.mxu0 0.0
    %223 = vmatpush1.msra.mxu0 0.0
    %224 = vmatprep.subr.mxu0 0.0
    %225 = vmatpush1.msra.mxu0 0.0
    %226 = vmatprep.subr.mxu0 0.0
    %227 = vmatpush1.msra.mxu0 0.0
    %228 = vmatprep.subr.mxu0 0.0
    %229 = vmatpush1.msra.mxu0 0.0
    %230 = vmatprep.mubr.f32.mxu0 0.0
    %231 = vmatmul.mubr.f32.gmra.mrb[0].mxu0 %v72
    %v232 = vpop.f32.mrb[0].mxu0
    %v233 = vadd.f32 %v149, %v232
    %v234 = vpop.f32.mrb[0].mxu0
    %v235 = vadd.f32 %v153, %v234
    %236 = vmatprep.mubr.f32.mxu0 0.0
    %237 = vmatmul.mubr.f32.gmra.mrb[0].mxu0 %v73
    %v238 = vpop.f32.mrb[0].mxu0
    %v239 = vadd.f32 %v149, %v238
    %v240 = vpop.f32.mrb[0].mxu0
    %v241 = vadd.f32 %v153, %v240
    %242 = vmatprep.mubr.f32.mxu0 0.0
    %243 = vmatmul.mubr.f32.gmra.mrb[0].mxu0 %v74
    %v244 = vpop.f32.mrb[0].mxu0
    %v245 = vadd.f32 %v149, %v244
    %v246 = vpop.f32.mrb[0].mxu0
    %v247 = vadd.f32 %v153, %v246
    %248 = vmatprep.mubr.f32.mxu0 0.0
    %249 = vmatmul.mubr.f32.gmra.mrb[0].mxu0 %v75
    %v250 = vpop.f32.mrb[0].mxu0
    %v251 = vadd.f32 %v149, %v250
    %v252 = vpop.f32.mrb[0].mxu0
    %v253 = vadd.f32 %v153, %v252
    %254 = vmatprep.mubr.f32.mxu0 0.0
    %255 = vmatmul.mubr.f32.gmra.mrb[0].mxu0 %v76
    %v256 = vpop.f32.mrb[0].mxu0
    %v257 = vadd.f32 %v149, %v256
    %v258 = vpop.f32.mrb[0].mxu0
    %v259 = vadd.f32 %v153, %v258
    %260 = vmatprep.mubr.f32.mxu0 0.0
    %261 = vmatmul.mubr.f32.gmra.mrb[0].mxu0 %v77
    %v262 = vpop.f32.mrb[0].mxu0
    %v263 = vadd.f32 %v149, %v262
    %v264 = vpop.f32.mrb[0].mxu0
    %v265 = vadd.f32 %v153, %v264
    %266 = vmatprep.mubr.f32.mxu0 0.0
    %267 = vmatmul.mubr.f32.gmra.mrb[0].mxu0 %v78
    %v268 = vpop.f32.mrb[0].mxu0
    %v269 = vadd.f32 %v149, %v268
    %v270 = vpop.f32.mrb[0].mxu0
    %v271 = vadd.f32 %v153, %v270
    %272 = vmatprep.mubr.f32.mxu0 0.0
    %273 = vmatmul.mubr.f32.gmra.mrb[0].mxu0 %v79
    %v274 = vpop.f32.mrb[0].mxu0
    %v275 = vadd.f32 %v149, %v274
    %v276 = vpop.f32.mrb[0].mxu0
    %v277 = vadd.f32 %v153, %v276
    %278 = vdwg.mxu0
    %279 = vmatprep.subr.mxu0 %v83
    %280 = vmatpush1.msra.mxu0 %v82
    %281 = vmatprep.subr.mxu0 %v87
    %282 = vmatpush1.msra.mxu0 %v86
    %283 = vmatprep.subr.mxu0 %v91
    %284 = vmatpush1.msra.mxu0 %v90
    %285 = vmatprep.subr.mxu0 %v95
    %286 = vmatpush1.msra.mxu0 %v94
    %287 = vmatprep.subr.mxu0 %v99
    %288 = vmatpush1.msra.mxu0 %v98
    %289 = vmatprep.subr.mxu0 %v103
    %290 = vmatpush1.msra.mxu0 %v102
    %291 = vmatprep.subr.mxu0 %v107
    %292 = vmatpush1.msra.mxu0 %v106
    %293 = vmatprep.subr.mxu0 %v111
    %294 = vmatpush1.msra.mxu0 %v110
    %295 = vmatprep.subr.mxu0 %v115
    %296 = vmatpush1.msra.mxu0 %v114
    %297 = vmatprep.subr.mxu0 %v119
    %298 = vmatpush1.msra.mxu0 %v118
    %299 = vmatprep.subr.mxu0 %v123
    %300 = vmatpush1.msra.mxu0 %v122
    %301 = vmatprep.subr.mxu0 %v127
    %302 = vmatpush1.msra.mxu0 %v126
    %303 = vmatprep.subr.mxu0 %v131
    %304 = vmatpush1.msra.mxu0 %v130
    %305 = vmatprep.subr.mxu0 %v135
    %306 = vmatpush1.msra.mxu0 %v134
    %307 = vmatprep.subr.mxu0 %v139
    %308 = vmatpush1.msra.mxu0 %v138
    %309 = vmatprep.subr.mxu0 %v143
    %310 = vmatpush1.msra.mxu0 %v142
    %311 = vmatprep.subr.mxu0 0.0
    %312 = vmatpush1.msra.mxu0 0.0
    %313 = vmatprep.subr.mxu0 0.0
    %314 = vmatpush1.msra.mxu0 0.0
    %315 = vmatprep.subr.mxu0 0.0
    %316 = vmatpush1.msra.mxu0 0.0
    %317 = vmatprep.subr.mxu0 0.0
    %318 = vmatpush1.msra.mxu0 0.0
    %319 = vmatprep.subr.mxu0 0.0
    %320 = vmatpush1.msra.mxu0 0.0
    %321 = vmatprep.subr.mxu0 0.0
    %322 = vmatpush1.msra.mxu0 0.0
    %323 = vmatprep.subr.mxu0 0.0
    %324 = vmatpush1.msra.mxu0 0.0
    %325 = vmatprep.subr.mxu0 0.0
    %326 = vmatpush1.msra.mxu0 0.0
    %327 = vmatprep.subr.mxu0 0.0
    %328 = vmatpush1.msra.mxu0 0.0
    %329 = vmatprep.subr.mxu0 0.0
    %330 = vmatpush1.msra.mxu0 0.0
    %331 = vmatprep.subr.mxu0 0.0
    %332 = vmatpush1.msra.mxu0 0.0
    %333 = vmatprep.subr.mxu0 0.0
    %334 = vmatpush1.msra.mxu0 0.0
    %335 = vmatprep.subr.mxu0 0.0
    %336 = vmatpush1.msra.mxu0 0.0
    %337 = vmatprep.subr.mxu0 0.0
    %338 = vmatpush1.msra.mxu0 0.0
    %339 = vmatprep.subr.mxu0 0.0
    %340 = vmatpush1.msra.mxu0 0.0
    %341 = vmatprep.subr.mxu0 0.0
    %342 = vmatpush1.msra.mxu0 0.0
    %343 = vmatprep.mubr.f32.mxu0 0.0
    %344 = vmatmul.mubr.f32.gmra.mrb[0].mxu0 %v72
    %v345 = vpop.f32.mrb[0].mxu0
    %v346 = vadd.f32 %v157, %v345
    %v347 = vpop.f32.mrb[0].mxu0
    %v348 = vadd.f32 %v161, %v347
    %349 = vmatprep.mubr.f32.mxu0 0.0
    %350 = vmatmul.mubr.f32.gmra.mrb[0].mxu0 %v73
    %v351 = vpop.f32.mrb[0].mxu0
    %v352 = vadd.f32 %v157, %v351
    %v353 = vpop.f32.mrb[0].mxu0
    %v354 = vadd.f32 %v161, %v353
    %355 = vmatprep.mubr.f32.mxu0 0.0
    %356 = vmatmul.mubr.f32.gmra.mrb[0].mxu0 %v74
    %v357 = vpop.f32.mrb[0].mxu0
    %v358 = vadd.f32 %v157, %v357
    %v359 = vpop.f32.mrb[0].mxu0
    %v360 = vadd.f32 %v161, %v359
    %361 = vmatprep.mubr.f32.mxu0 0.0
    %362 = vmatmul.mubr.f32.gmra.mrb[0].mxu0 %v75
    %v363 = vpop.f32.mrb[0].mxu0
    %v364 = vadd.f32 %v157, %v363
    %v365 = vpop.f32.mrb[0].mxu0
    %v366 = vadd.f32 %v161, %v365
    %367 = vmatprep.mubr.f32.mxu0 0.0
    %368 = vmatmul.mubr.f32.gmra.mrb[0].mxu0 %v76
    %v369 = vpop.f32.mrb[0].mxu0
    %v370 = vadd.f32 %v157, %v369
    %v371 = vpop.f32.mrb[0].mxu0
    %v372 = vadd.f32 %v161, %v371
    %373 = vmatprep.mubr.f32.mxu0 0.0
    %374 = vmatmul.mubr.f32.gmra.mrb[0].mxu0 %v77
    %v375 = vpop.f32.mrb[0].mxu0
    %v376 = vadd.f32 %v157, %v375
    %v377 = vpop.f32.mrb[0].mxu0
    %v378 = vadd.f32 %v161, %v377
    %379 = vmatprep.mubr.f32.mxu0 0.0
    %380 = vmatmul.mubr.f32.gmra.mrb[0].mxu0 %v78
    %v381 = vpop.f32.mrb[0].mxu0
    %v382 = vadd.f32 %v157, %v381
    %v383 = vpop.f32.mrb[0].mxu0
    %v384 = vadd.f32 %v161, %v383
    %385 = vmatprep.mubr.f32.mxu0 0.0
    %386 = vmatmul.mubr.f32.gmra.mrb[0].mxu0 %v79
    %v387 = vpop.f32.mrb[0].mxu0
    %v388 = vadd.f32 %v157, %v387
    %v389 = vpop.f32.mrb[0].mxu0
    %v390 = vadd.f32 %v161, %v389
    %391 = vdwg.mxu0
    %392 = vst [vmem:[#allocation2] sm:$0xff] %v233
    %393 = vst [vmem:[#allocation2 + $0x8] sm:$0xff] %v235
    %394 = vst [vmem:[#allocation2 + $0x10] sm:$0xff] %v346
    %395 = vst [vmem:[#allocation2 + $0x18] sm:$0xff] %v348
    %396 = vst [vmem:[#allocation2 + $0x20] sm:$0xff] %v239
    %397 = vst [vmem:[#allocation2 + $0x28] sm:$0xff] %v241
    %398 = vst [vmem:[#allocation2 + $0x30] sm:$0xff] %v352
    %399 = vst [vmem:[#allocation2 + $0x38] sm:$0xff] %v354
    %400 = vst [vmem:[#allocation2 + $0x40] sm:$0xff] %v245
    %401 = vst [vmem:[#allocation2 + $0x48] sm:$0xff] %v247
    %402 = vst [vmem:[#allocation2 + $0x50] sm:$0xff] %v358
    %403 = vst [vmem:[#allocation2 + $0x58] sm:$0xff] %v360
    %404 = vst [vmem:[#allocation2 + $0x60] sm:$0xff] %v251
    %405 = vst [vmem:[#allocation2 + $0x68] sm:$0xff] %v253
    %406 = vst [vmem:[#allocation2 + $0x70] sm:$0xff] %v364
    %407 = vst [vmem:[#allocation2 + $0x78] sm:$0xff] %v366
    %408 = vst [vmem:[#allocation2 + $0x80] sm:$0xff] %v257
    %409 = vst [vmem:[#allocation2 + $0x88] sm:$0xff] %v259
    %410 = vst [vmem:[#allocation2 + $0x90] sm:$0xff] %v370
    %411 = vst [vmem:[#allocation2 + $0x98] sm:$0xff] %v372
    %412 = vst [vmem:[#allocation2 + $0xa0] sm:$0xff] %v263
    %413 = vst [vmem:[#allocation2 + $0xa8] sm:$0xff] %v265
    %414 = vst [vmem:[#allocation2 + $0xb0] sm:$0xff] %v376
    %415 = vst [vmem:[#allocation2 + $0xb8] sm:$0xff] %v378
    %416 = vst [vmem:[#allocation2 + $0xc0] sm:$0xff] %v269
    %417 = vst [vmem:[#allocation2 + $0xc8] sm:$0xff] %v271
    %418 = vst [vmem:[#allocation2 + $0xd0] sm:$0xff] %v382
    %419 = vst [vmem:[#allocation2 + $0xd8] sm:$0xff] %v384
    %420 = vst [vmem:[#allocation2 + $0xe0] sm:$0xff] %v275
    %421 = vst [vmem:[#allocation2 + $0xe8] sm:$0xff] %v277
    %422 = vst [vmem:[#allocation2 + $0xf0] sm:$0xff] %v388
    %423 = vst [vmem:[#allocation2 + $0xf8] sm:$0xff] %v390
    %v424 = vld [vmem:[%s1] sm:$0xff]
    %v425 = vld [vmem:[%s2] sm:$0xff]
    %v426 = vld [vmem:[#allocation2] sm:$0xff]
    %v427 = vld [vmem:[#allocation2 + $0x8] sm:$0xff]
    %v428 = vld [vmem:[#allocation2 + $0x10] sm:$0xff]
    %v429 = vld [vmem:[#allocation2 + $0x18] sm:$0xff]
    %v430 = vld [vmem:[%s8] sm:$0xff]
    %v431 = vld [vmem:[%s8 + $0x8] sm:$0xff]
    %v432 = vld [vmem:[%s8 + $0x10] sm:$0xff]
    %v433 = vld [vmem:[%s8 + $0x18] sm:$0xff]
    %v434 = vld [vmem:[%s8 + $0x20] sm:$0xff]
    %v435 = vld [vmem:[%s8 + $0x28] sm:$0xff]
    %v436 = vld [vmem:[%s8 + $0x30] sm:$0xff]
    %v437 = vld [vmem:[%s8 + $0x38] sm:$0xff]
    %v438 = vld [vmem:[%s8 + $0x40] sm:$0xff]
    %v439 = vld [vmem:[%s8 + $0x48] sm:$0xff]
    %v440 = vld [vmem:[%s8 + $0x50] sm:$0xff]
    %v441 = vld [vmem:[%s8 + $0x58] sm:$0xff]
    %v442 = vld [vmem:[%s8 + $0x60] sm:$0xff]
    %v443 = vld [vmem:[%s8 + $0x68] sm:$0xff]
    %v444 = vld [vmem:[%s8 + $0x70] sm:$0xff]
    %v445 = vld [vmem:[%s8 + $0x78] sm:$0xff]
    %v446 = vld [vmem:[%s8 + $0x80] sm:$0xff]
    %v447 = vld [vmem:[%s8 + $0x88] sm:$0xff]
    %v448 = vld [vmem:[%s8 + $0x90] sm:$0xff]
    %v449 = vld [vmem:[%s8 + $0x98] sm:$0xff]
    %v450 = vld [vmem:[%s8 + $0xa0] sm:$0xff]
    %v451 = vld [vmem:[%s8 + $0xa8] sm:$0xff]
    %v452 = vld [vmem:[%s8 + $0xb0] sm:$0xff]
    %v453 = vld [vmem:[%s8 + $0xb8] sm:$0xff]
    %v454 = vld [vmem:[%s8 + $0xc0] sm:$0xff]
    %v455 = vld [vmem:[%s8 + $0xc8] sm:$0xff]
    %v456 = vld [vmem:[%s8 + $0xd0] sm:$0xff]
    %v457 = vld [vmem:[%s8 + $0xd8] sm:$0xff]
    %v458 = vld [vmem:[%s8 + $0xe0] sm:$0xff]
    %v459 = vld [vmem:[%s8 + $0xe8] sm:$0xff]
    %v460 = vld [vmem:[%s8 + $0xf0] sm:$0xff]
    %v461 = vld [vmem:[%s8 + $0xf8] sm:$0xff]
    %v462 = vld [vmem:[%s8 + $0x100] sm:$0xff]
    %v463 = vld [vmem:[%s8 + $0x108] sm:$0xff]
    %v464 = vld [vmem:[%s8 + $0x110] sm:$0xff]
    %v465 = vld [vmem:[%s8 + $0x118] sm:$0xff]
    %v466 = vld [vmem:[%s8 + $0x120] sm:$0xff]
    %v467 = vld [vmem:[%s8 + $0x128] sm:$0xff]
    %v468 = vld [vmem:[%s8 + $0x130] sm:$0xff]
    %v469 = vld [vmem:[%s8 + $0x138] sm:$0xff]
    %v470 = vld [vmem:[%s8 + $0x140] sm:$0xff]
    %v471 = vld [vmem:[%s8 + $0x148] sm:$0xff]
    %v472 = vld [vmem:[%s8 + $0x150] sm:$0xff]
    %v473 = vld [vmem:[%s8 + $0x158] sm:$0xff]
    %v474 = vld [vmem:[%s8 + $0x160] sm:$0xff]
    %v475 = vld [vmem:[%s8 + $0x168] sm:$0xff]
    %v476 = vld [vmem:[%s8 + $0x170] sm:$0xff]
    %v477 = vld [vmem:[%s8 + $0x178] sm:$0xff]
    %v478 = vld [vmem:[%s8 + $0x180] sm:$0xff]
    %v479 = vld [vmem:[%s8 + $0x188] sm:$0xff]
    %v480 = vld [vmem:[%s8 + $0x190] sm:$0xff]
    %v481 = vld [vmem:[%s8 + $0x198] sm:$0xff]
    %v482 = vld [vmem:[%s8 + $0x1a0] sm:$0xff]
    %v483 = vld [vmem:[%s8 + $0x1a8] sm:$0xff]
    %v484 = vld [vmem:[%s8 + $0x1b0] sm:$0xff]
    %v485 = vld [vmem:[%s8 + $0x1b8] sm:$0xff]
    %v486 = vld [vmem:[%s8 + $0x1c0] sm:$0xff]
    %v487 = vld [vmem:[%s8 + $0x1c8] sm:$0xff]
    %v488 = vld [vmem:[%s8 + $0x1d0] sm:$0xff]
    %v489 = vld [vmem:[%s8 + $0x1d8] sm:$0xff]
    %v490 = vld [vmem:[%s8 + $0x1e0] sm:$0xff]
    %v491 = vld [vmem:[%s8 + $0x1e8] sm:$0xff]
    %v492 = vld [vmem:[%s8 + $0x1f0] sm:$0xff]
    %v493 = vld [vmem:[%s8 + $0x1f8] sm:$0xff]
    %494 = vmatprep.subr.mxu0 %v431
    %495 = vmatpush1.msra.mxu0 %v430
    %496 = vmatprep.subr.mxu0 %v435
    %497 = vmatpush1.msra.mxu0 %v434
    %498 = vmatprep.subr.mxu0 %v439
    %499 = vmatpush1.msra.mxu0 %v438
    %500 = vmatprep.subr.mxu0 %v443
    %501 = vmatpush1.msra.mxu0 %v442
    %502 = vmatprep.subr.mxu0 %v447
    %503 = vmatpush1.msra.mxu0 %v446
    %504 = vmatprep.subr.mxu0 %v451
    %505 = vmatpush1.msra.mxu0 %v450
    %506 = vmatprep.subr.mxu0 %v455
    %507 = vmatpush1.msra.mxu0 %v454
    %508 = vmatprep.subr.mxu0 %v459
    %509 = vmatpush1.msra.mxu0 %v458
    %510 = vmatprep.subr.mxu0 %v463
    %511 = vmatpush1.msra.mxu0 %v462
    %512 = vmatprep.subr.mxu0 %v467
    %513 = vmatpush1.msra.mxu0 %v466
    %514 = vmatprep.subr.mxu0 %v471
    %515 = vmatpush1.msra.mxu0 %v470
    %516 = vmatprep.subr.mxu0 %v475
    %517 = vmatpush1.msra.mxu0 %v474
    %518 = vmatprep.subr.mxu0 %v479
    %519 = vmatpush1.msra.mxu0 %v478
    %520 = vmatprep.subr.mxu0 %v483
    %521 = vmatpush1.msra.mxu0 %v482
    %522 = vmatprep.subr.mxu0 %v487
    %523 = vmatpush1.msra.mxu0 %v486
    %524 = vmatprep.subr.mxu0 %v491
    %525 = vmatpush1.msra.mxu0 %v490
    %526 = vmatprep.subr.mxu0 0.0
    %527 = vmatpush1.msra.mxu0 0.0
    %528 = vmatprep.subr.mxu0 0.0
    %529 = vmatpush1.msra.mxu0 0.0
    %530 = vmatprep.subr.mxu0 0.0
    %531 = vmatpush1.msra.mxu0 0.0
    %532 = vmatprep.subr.mxu0 0.0
    %533 = vmatpush1.msra.mxu0 0.0
    %534 = vmatprep.subr.mxu0 0.0
    %535 = vmatpush1.msra.mxu0 0.0
    %536 = vmatprep.subr.mxu0 0.0
    %537 = vmatpush1.msra.mxu0 0.0
    %538 = vmatprep.subr.mxu0 0.0
    %539 = vmatpush1.msra.mxu0 0.0
    %540 = vmatprep.subr.mxu0 0.0
    %541 = vmatpush1.msra.mxu0 0.0
    %542 = vmatprep.subr.mxu0 0.0
    %543 = vmatpush1.msra.mxu0 0.0
    %544 = vmatprep.subr.mxu0 0.0
    %545 = vmatpush1.msra.mxu0 0.0
    %546 = vmatprep.subr.mxu0 0.0
    %547 = vmatpush1.msra.mxu0 0.0
    %548 = vmatprep.subr.mxu0 0.0
    %549 = vmatpush1.msra.mxu0 0.0
    %550 = vmatprep.subr.mxu0 0.0
    %551 = vmatpush1.msra.mxu0 0.0
    %552 = vmatprep.subr.mxu0 0.0
    %553 = vmatpush1.msra.mxu0 0.0
    %554 = vmatprep.subr.mxu0 0.0
    %555 = vmatpush1.msra.mxu0 0.0
    %556 = vmatprep.subr.mxu0 0.0
    %557 = vmatpush1.msra.mxu0 0.0
    %558 = vmatprep.mubr.f32.mxu0 0.0
    %559 = vmatmul.mubr.f32.gmra.mrb[0].mxu0 %v424
    %v560 = vpop.f32.mrb[0].mxu0
    %v561 = vadd.f32 0.0, %v560
    %v562 = vpop.f32.mrb[0].mxu0
    %v563 = vadd.f32 0.0, %v562
    %564 = vdwg.mxu0
    %565 = vmatprep.subr.mxu0 %v433
    %566 = vmatpush1.msra.mxu0 %v432
    %567 = vmatprep.subr.mxu0 %v437
    %568 = vmatpush1.msra.mxu0 %v436
    %569 = vmatprep.subr.mxu0 %v441
    %570 = vmatpush1.msra.mxu0 %v440
    %571 = vmatprep.subr.mxu0 %v445
    %572 = vmatpush1.msra.mxu0 %v444
    %573 = vmatprep.subr.mxu0 %v449
    %574 = vmatpush1.msra.mxu0 %v448
    %575 = vmatprep.subr.mxu0 %v453
    %576 = vmatpush1.msra.mxu0 %v452
    %577 = vmatprep.subr.mxu0 %v457
    %578 = vmatpush1.msra.mxu0 %v456
    %579 = vmatprep.subr.mxu0 %v461
    %580 = vmatpush1.msra.mxu0 %v460
    %581 = vmatprep.subr.mxu0 %v465
    %582 = vmatpush1.msra.mxu0 %v464
    %583 = vmatprep.subr.mxu0 %v469
    %584 = vmatpush1.msra.mxu0 %v468
    %585 = vmatprep.subr.mxu0 %v473
    %586 = vmatpush1.msra.mxu0 %v472
    %587 = vmatprep.subr.mxu0 %v477
    %588 = vmatpush1.msra.mxu0 %v476
    %589 = vmatprep.subr.mxu0 %v481
    %590 = vmatpush1.msra.mxu0 %v480
    %591 = vmatprep.subr.mxu0 %v485
    %592 = vmatpush1.msra.mxu0 %v484
    %593 = vmatprep.subr.mxu0 %v489
    %594 = vmatpush1.msra.mxu0 %v488
    %595 = vmatprep.subr.mxu0 %v493
    %596 = vmatpush1.msra.mxu0 %v492
    %597 = vmatprep.subr.mxu0 0.0
    %598 = vmatpush1.msra.mxu0 0.0
    %599 = vmatprep.subr.mxu0 0.0
    %600 = vmatpush1.msra.mxu0 0.0
    %601 = vmatprep.subr.mxu0 0.0
    %602 = vmatpush1.msra.mxu0 0.0
    %603 = vmatprep.subr.mxu0 0.0
    %604 = vmatpush1.msra.mxu0 0.0
    %605 = vmatprep.subr.mxu0 0.0
    %606 = vmatpush1.msra.mxu0 0.0
    %607 = vmatprep.subr.mxu0 0.0
    %608 = vmatpush1.msra.mxu0 0.0
    %609 = vmatprep.subr.mxu0 0.0
    %610 = vmatpush1.msra.mxu0 0.0
    %611 = vmatprep.subr.mxu0 0.0
    %612 = vmatpush1.msra.mxu0 0.0
    %613 = vmatprep.subr.mxu0 0.0
    %614 = vmatpush1.msra.mxu0 0.0
    %615 = vmatprep.subr.mxu0 0.0
    %616 = vmatpush1.msra.mxu0 0.0
    %617 = vmatprep.subr.mxu0 0.0
    %618 = vmatpush1.msra.mxu0 0.0
    %619 = vmatprep.subr.mxu0 0.0
    %620 = vmatpush1.msra.mxu0 0.0
    %621 = vmatprep.subr.mxu0 0.0
    %622 = vmatpush1.msra.mxu0 0.0
    %623 = vmatprep.subr.mxu0 0.0
    %624 = vmatpush1.msra.mxu0 0.0
    %625 = vmatprep.subr.mxu0 0.0
    %626 = vmatpush1.msra.mxu0 0.0
    %627 = vmatprep.subr.mxu0 0.0
    %628 = vmatpush1.msra.mxu0 0.0
    %629 = vmatprep.mubr.f32.mxu0 0.0
    %630 = vmatmul.mubr.f32.gmra.mrb[0].mxu0 %v424
    %v631 = vpop.f32.mrb[0].mxu0
    %v632 = vadd.f32 0.0, %v631
    %v633 = vpop.f32.mrb[0].mxu0
    %v634 = vadd.f32 0.0, %v633
    %635 = vdwg.mxu0
    %v636 = vadd.f32 %v426, %v561
    %v637 = vadd.f32 %v427, %v563
    %v638 = vadd.f32 %v428, %v632
    %v639 = vadd.f32 %v429, %v634
    %v640 = vxor.u32 %v636, 2147483648
    %v641 = vmul.f32 %v640, 1.442695
    %v642 = vpow.pop %v641
    %v643 = vadd.f32 %v642, 1.0
    %v644 = vrcp.pop %v643
    %v645 = vmul.f32 1.0, %v644
    %v646 = vxor.u32 %v637, 2147483648
    %v647 = vmul.f32 %v646, 1.442695
    %v648 = vpow.pop %v647
    %v649 = vadd.f32 %v648, 1.0
    %v650 = vrcp.pop %v649
    %v651 = vmul.f32 1.0, %v650
    %v652 = vtanh.pop %v638
    %v653 = vxor.u32 %v639, 2147483648
    %v654 = vmul.f32 %v653, 1.442695
    %v655 = vpow.pop %v654
    %v656 = vadd.f32 %v655, 1.0
    %v657 = vrcp.pop %v656
    %v658 = vmul.f32 1.0, %v657
    %v659 = vmul.f32 %v651, %v425
    %v660 = vmul.f32 %v645, %v652
    %v661 = vadd.f32 %v659, %v660
    %v662 = vtanh.pop %v661
    %v663 = vmul.f32 %v658, %v662
    %664 = vst [vmem:[#allocation3] sm:$0xff] %v663
    %s665 = scalar_lea.vmem [#allocation2], 32
    %v666 = vld [vmem:[%s665] sm:$0xff]
    %v667 = vld [vmem:[%s665 + $0x8] sm:$0xff]
    %v668 = vld [vmem:[%s665 + $0x10] sm:$0xff]
    %v669 = vld [vmem:[%s665 + $0x18] sm:$0xff]
    %v670 = vld [vmem:[%s8] sm:$0xff]
    %v671 = vld [vmem:[%s8 + $0x8] sm:$0xff]
    %v672 = vld [vmem:[%s8 + $0x10] sm:$0xff]
    %v673 = vld [vmem:[%s8 + $0x18] sm:$0xff]
    %v674 = vld [vmem:[%s8 + $0x20] sm:$0xff]
    %v675 = vld [vmem:[%s8 + $0x28] sm:$0xff]
    %v676 = vld [vmem:[%s8 + $0x30] sm:$0xff]
    %v677 = vld [vmem:[%s8 + $0x38] sm:$0xff]
    %v678 = vld [vmem:[%s8 + $0x40] sm:$0xff]
    %v679 = vld [vmem:[%s8 + $0x48] sm:$0xff]
    %v680 = vld [vmem:[%s8 + $0x50] sm:$0xff]
    %v681 = vld [vmem:[%s8 + $0x58] sm:$0xff]
    %v682 = vld [vmem:[%s8 + $0x60] sm:$0xff]
    %v683 = vld [vmem:[%s8 + $0x68] sm:$0xff]
    %v684 = vld [vmem:[%s8 + $0x70] sm:$0xff]
    %v685 = vld [vmem:[%s8 + $0x78] sm:$0xff]
    %v686 = vld [vmem:[%s8 + $0x80] sm:$0xff]
    %v687 = vld [vmem:[%s8 + $0x88] sm:$0xff]
    %v688 = vld [vmem:[%s8 + $0x90] sm:$0xff]
    %v689 = vld [vmem:[%s8 + $0x98] sm:$0xff]
    %v690 = vld [vmem:[%s8 + $0xa0] sm:$0xff]
    %v691 = vld [vmem:[%s8 + $0xa8] sm:$0xff]
    %v692 = vld [vmem:[%s8 + $0xb0] sm:$0xff]
    %v693 = vld [vmem:[%s8 + $0xb8] sm:$0xff]
    %v694 = vld [vmem:[%s8 + $0xc0] sm:$0xff]
    %v695 = vld [vmem:[%s8 + $0xc8] sm:$0xff]
    %v696 = vld [vmem:[%s8 + $0xd0] sm:$0xff]
    %v697 = vld [vmem:[%s8 + $0xd8] sm:$0xff]
    %v698 = vld [vmem:[%s8 + $0xe0] sm:$0xff]
    %v699 = vld [vmem:[%s8 + $0xe8] sm:$0xff]
    %v700 = vld [vmem:[%s8 + $0xf0] sm:$0xff]
    %v701 = vld [vmem:[%s8 + $0xf8] sm:$0xff]
    %v702 = vld [vmem:[%s8 + $0x100] sm:$0xff]
    %v703 = vld [vmem:[%s8 + $0x108] sm:$0xff]
    %v704 = vld [vmem:[%s8 + $0x110] sm:$0xff]
    %v705 = vld [vmem:[%s8 + $0x118] sm:$0xff]
    %v706 = vld [vmem:[%s8 + $0x120] sm:$0xff]
    %v707 = vld [vmem:[%s8 + $0x128] sm:$0xff]
    %v708 = vld [vmem:[%s8 + $0x130] sm:$0xff]
    %v709 = vld [vmem:[%s8 + $0x138] sm:$0xff]
    %v710 = vld [vmem:[%s8 + $0x140] sm:$0xff]
    %v711 = vld [vmem:[%s8 + $0x148] sm:$0xff]
    %v712 = vld [vmem:[%s8 + $0x150] sm:$0xff]
    %v713 = vld [vmem:[%s8 + $0x158] sm:$0xff]
    %v714 = vld [vmem:[%s8 + $0x160] sm:$0xff]
    %v715 = vld [vmem:[%s8 + $0x168] sm:$0xff]
    %v716 = vld [vmem:[%s8 + $0x170] sm:$0xff]
    %v717 = vld [vmem:[%s8 + $0x178] sm:$0xff]
    %v718 = vld [vmem:[%s8 + $0x180] sm:$0xff]
    %v719 = vld [vmem:[%s8 + $0x188] sm:$0xff]
    %v720 = vld [vmem:[%s8 + $0x190] sm:$0xff]
    %v721 = vld [vmem:[%s8 + $0x198] sm:$0xff]
    %v722 = vld [vmem:[%s8 + $0x1a0] sm:$0xff]
    %v723 = vld [vmem:[%s8 + $0x1a8] sm:$0xff]
    %v724 = vld [vmem:[%s8 + $0x1b0] sm:$0xff]
    %v725 = vld [vmem:[%s8 + $0x1b8] sm:$0xff]
    %v726 = vld [vmem:[%s8 + $0x1c0] sm:$0xff]
    %v727 = vld [vmem:[%s8 + $0x1c8] sm:$0xff]
    %v728 = vld [vmem:[%s8 + $0x1d0] sm:$0xff]
    %v729 = vld [vmem:[%s8 + $0x1d8] sm:$0xff]
    %v730 = vld [vmem:[%s8 + $0x1e0] sm:$0xff]
    %v731 = vld [vmem:[%s8 + $0x1e8] sm:$0xff]
    %v732 = vld [vmem:[%s8 + $0x1f0] sm:$0xff]
    %v733 = vld [vmem:[%s8 + $0x1f8] sm:$0xff]
    %734 = vmatprep.subr.mxu0 %v671
    %735 = vmatpush1.msra.mxu0 %v670
    %736 = vmatprep.subr.mxu0 %v675
    %737 = vmatpush1.msra.mxu0 %v674
    %738 = vmatprep.subr.mxu0 %v679
    %739 = vmatpush1.msra.mxu0 %v678
    %740 = vmatprep.subr.mxu0 %v683
    %741 = vmatpush1.msra.mxu0 %v682
    %742 = vmatprep.subr.mxu0 %v687
    %743 = vmatpush1.msra.mxu0 %v686
    %744 = vmatprep.subr.mxu0 %v691
    %745 = vmatpush1.msra.mxu0 %v690
    %746 = vmatprep.subr.mxu0 %v695
    %747 = vmatpush1.msra.mxu0 %v694
    %748 = vmatprep.subr.mxu0 %v699
    %749 = vmatpush1.msra.mxu0 %v698
    %750 = vmatprep.subr.mxu0 %v703
    %751 = vmatpush1.msra.mxu0 %v702
    %752 = vmatprep.subr.mxu0 %v707
    %753 = vmatpush1.msra.mxu0 %v706
    %754 = vmatprep.subr.mxu0 %v711
    %755 = vmatpush1.msra.mxu0 %v710
    %756 = vmatprep.subr.mxu0 %v715
    %757 = vmatpush1.msra.mxu0 %v714
    %758 = vmatprep.subr.mxu0 %v719
    %759 = vmatpush1.msra.mxu0 %v718
    %760 = vmatprep.subr.mxu0 %v723
    %761 = vmatpush1.msra.mxu0 %v722
    %762 = vmatprep.subr.mxu0 %v727
    %763 = vmatpush1.msra.mxu0 %v726
    %764 = vmatprep.subr.mxu0 %v731
    %765 = vmatpush1.msra.mxu0 %v730
    %766 = vmatprep.subr.mxu0 0.0
    %767 = vmatpush1.msra.mxu0 0.0
    %768 = vmatprep.subr.mxu0 0.0
    %769 = vmatpush1.msra.mxu0 0.0
    %770 = vmatprep.subr.mxu0 0.0
    %771 = vmatpush1.msra.mxu0 0.0
    %772 = vmatprep.subr.mxu0 0.0
    %773 = vmatpush1.msra.mxu0 0.0
    %774 = vmatprep.subr.mxu0 0.0
    %775 = vmatpush1.msra.mxu0 0.0
    %776 = vmatprep.subr.mxu0 0.0
    %777 = vmatpush1.msra.mxu0 0.0
    %778 = vmatprep.subr.mxu0 0.0
    %779 = vmatpush1.msra.mxu0 0.0
    %780 = vmatprep.subr.mxu0 0.0
    %781 = vmatpush1.msra.mxu0 0.0
    %782 = vmatprep.subr.mxu0 0.0
    %783 = vmatpush1.msra.mxu0 0.0
    %784 = vmatprep.subr.mxu0 0.0
    %785 = vmatpush1.msra.mxu0 0.0
    %786 = vmatprep.subr.mxu0 0.0
    %787 = vmatpush1.msra.mxu0 0.0
    %788 = vmatprep.subr.mxu0 0.0
    %789 = vmatpush1.msra.mxu0 0.0
    %790 = vmatprep.subr.mxu0 0.0
    %791 = vmatpush1.msra.mxu0 0.0
    %792 = vmatprep.subr.mxu0 0.0
    %793 = vmatpush1.msra.mxu0 0.0
    %794 = vmatprep.subr.mxu0 0.0
    %795 = vmatpush1.msra.mxu0 0.0
    %796 = vmatprep.subr.mxu0 0.0
    %797 = vmatpush1.msra.mxu0 0.0
    %798 = vmatprep.mubr.f32.mxu0 0.0
    %799 = vmatmul.mubr.f32.gmra.mrb[0].mxu0 %v663
    %v800 = vpop.f32.mrb[0].mxu0
    %v801 = vadd.f32 0.0, %v800
    %v802 = vpop.f32.mrb[0].mxu0
    %v803 = vadd.f32 0.0, %v802
    %804 = vdwg.mxu0
    %805 = vmatprep.subr.mxu0 %v673
    %806 = vmatpush1.msra.mxu0 %v672
    %807 = vmatprep.subr.mxu0 %v677
    %808 = vmatpush1.msra.mxu0 %v676
    %809 = vmatprep.subr.mxu0 %v681
    %810 = vmatpush1.msra.mxu0 %v680
    %811 = vmatprep.subr.mxu0 %v685
    %812 = vmatpush1.msra.mxu0 %v684
    %813 = vmatprep.subr.mxu0 %v689
    %814 = vmatpush1.msra.mxu0 %v688
    %815 = vmatprep.subr.mxu0 %v693
    %816 = vmatpush1.msra.mxu0 %v692
    %817 = vmatprep.subr.mxu0 %v697
    %818 = vmatpush1.msra.mxu0 %v696
    %819 = vmatprep.subr.mxu0 %v701
    %820 = vmatpush1.msra.mxu0 %v700
    %821 = vmatprep.subr.mxu0 %v705
    %822 = vmatpush1.msra.mxu0 %v704
    %823 = vmatprep.subr.mxu0 %v709
    %824 = vmatpush1.msra.mxu0 %v708
    %825 = vmatprep.subr.mxu0 %v713
    %826 = vmatpush1.msra.mxu0 %v712
    %827 = vmatprep.subr.mxu0 %v717
    %828 = vmatpush1.msra.mxu0 %v716
    %829 = vmatprep.subr.mxu0 %v721
    %830 = vmatpush1.msra.mxu0 %v720
    %831 = vmatprep.subr.mxu0 %v725
    %832 = vmatpush1.msra.mxu0 %v724
    %833 = vmatprep.subr.mxu0 %v729
    %834 = vmatpush1.msra.mxu0 %v728
    %835 = vmatprep.subr.mxu0 %v733
    %836 = vmatpush1.msra.mxu0 %v732
    %837 = vmatprep.subr.mxu0 0.0
    %838 = vmatpush1.msra.mxu0 0.0
    %839 = vmatprep.subr.mxu0 0.0
    %840 = vmatpush1.msra.mxu0 0.0
    %841 = vmatprep.subr.mxu0 0.0
    %842 = vmatpush1.msra.mxu0 0.0
    %843 = vmatprep.subr.mxu0 0.0
    %844 = vmatpush1.msra.mxu0 0.0
    %845 = vmatprep.subr.mxu0 0.0
    %846 = vmatpush1.msra.mxu0 0.0
    %847 = vmatprep.subr.mxu0 0.0
    %848 = vmatpush1.msra.mxu0 0.0
    %849 = vmatprep.subr.mxu0 0.0
    %850 = vmatpush1.msra.mxu0 0.0
    %851 = vmatprep.subr.mxu0 0.0
    %852 = vmatpush1.msra.mxu0 0.0
    %853 = vmatprep.subr.mxu0 0.0
    %854 = vmatpush1.msra.mxu0 0.0
    %855 = vmatprep.subr.mxu0 0.0
    %856 = vmatpush1.msra.mxu0 0.0
    %857 = vmatprep.subr.mxu0 0.0
    %858 = vmatpush1.msra.mxu0 0.0
    %859 = vmatprep.subr.mxu0 0.0
    %860 = vmatpush1.msra.mxu0 0.0
    %861 = vmatprep.subr.mxu0 0.0
    %862 = vmatpush1.msra.mxu0 0.0
    %863 = vmatprep.subr.mxu0 0.0
    %864 = vmatpush1.msra.mxu0 0.0
    %865 = vmatprep.subr.mxu0 0.0
    %866 = vmatpush1.msra.mxu0 0.0
    %867 = vmatprep.subr.mxu0 0.0
    %868 = vmatpush1.msra.mxu0 0.0
    %869 = vmatprep.mubr.f32.mxu0 0.0
    %870 = vmatmul.mubr.f32.gmra.mrb[0].mxu0 %v663
    %v871 = vpop.f32.mrb[0].mxu0
    %v872 = vadd.f32 0.0, %v871
    %v873 = vpop.f32.mrb[0].mxu0
    %v874 = vadd.f32 0.0, %v873
    %875 = vdwg.mxu0
    %v876 = vadd.f32 %v666, %v801
    %v877 = vadd.f32 %v667, %v803
    %v878 = vadd.f32 %v668, %v872
    %v879 = vadd.f32 %v669, %v874
    %v880 = vxor.u32 %v876, 2147483648
    %v881 = vmul.f32 %v880, 1.442695
    %v882 = vpow.pop %v881
    %v883 = vadd.f32 %v882, 1.0
    %v884 = vrcp.pop %v883
    %v885 = vmul.f32 1.0, %v884
    %v886 = vxor.u32 %v877, 2147483648
    %v887 = vmul.f32 %v886, 1.442695
    %v888 = vpow.pop %v887
    %v889 = vadd.f32 %v888, 1.0
    %v890 = vrcp.pop %v889
    %v891 = vmul.f32 1.0, %v890
    %v892 = vtanh.pop %v878
    %v893 = vxor.u32 %v879, 2147483648
    %v894 = vmul.f32 %v893, 1.442695
    %v895 = vpow.pop %v894
    %v896 = vadd.f32 %v895, 1.0
    %v897 = vrcp.pop %v896
    %v898 = vmul.f32 1.0, %v897
    %v899 = vmul.f32 %v891, %v661
    %v900 = vmul.f32 %v885, %v892
    %v901 = vadd.f32 %v899, %v900
    %v902 = vtanh.pop %v901
    %v903 = vmul.f32 %v898, %v902
    %s904 = scalar_lea.vmem [#allocation3], 8
    %905 = vst [vmem:[%s904] sm:$0xff] %v903
    %s906 = scalar_lea.vmem [#allocation2], 64
    %v907 = vld [vmem:[%s906] sm:$0xff]
    %v908 = vld [vmem:[%s906 + $0x8] sm:$0xff]
    %v909 = vld [vmem:[%s906 + $0x10] sm:$0xff]
    %v910 = vld [vmem:[%s906 + $0x18] sm:$0xff]
    %v911 = vld [vmem:[%s8] sm:$0xff]
    %v912 = vld [vmem:[%s8 + $0x8] sm:$0xff]
    %v913 = vld [vmem:[%s8 + $0x10] sm:$0xff]
    %v914 = vld [vmem:[%s8 + $0x18] sm:$0xff]
    %v915 = vld [vmem:[%s8 + $0x20] sm:$0xff]
    %v916 = vld [vmem:[%s8 + $0x28] sm:$0xff]
    %v917 = vld [vmem:[%s8 + $0x30] sm:$0xff]
    %v918 = vld [vmem:[%s8 + $0x38] sm:$0xff]
    %v919 = vld [vmem:[%s8 + $0x40] sm:$0xff]
    %v920 = vld [vmem:[%s8 + $0x48] sm:$0xff]
    %v921 = vld [vmem:[%s8 + $0x50] sm:$0xff]
    %v922 = vld [vmem:[%s8 + $0x58] sm:$0xff]
    %v923 = vld [vmem:[%s8 + $0x60] sm:$0xff]
    %v924 = vld [vmem:[%s8 + $0x68] sm:$0xff]
    %v925 = vld [vmem:[%s8 + $0x70] sm:$0xff]
    %v926 = vld [vmem:[%s8 + $0x78] sm:$0xff]
    %v927 = vld [vmem:[%s8 + $0x80] sm:$0xff]
    %v928 = vld [vmem:[%s8 + $0x88] sm:$0xff]
    %v929 = vld [vmem:[%s8 + $0x90] sm:$0xff]
    %v930 = vld [vmem:[%s8 + $0x98] sm:$0xff]
    %v931 = vld [vmem:[%s8 + $0xa0] sm:$0xff]
    %v932 = vld [vmem:[%s8 + $0xa8] sm:$0xff]
    %v933 = vld [vmem:[%s8 + $0xb0] sm:$0xff]
    %v934 = vld [vmem:[%s8 + $0xb8] sm:$0xff]
    %v935 = vld [vmem:[%s8 + $0xc0] sm:$0xff]
    %v936 = vld [vmem:[%s8 + $0xc8] sm:$0xff]
    %v937 = vld [vmem:[%s8 + $0xd0] sm:$0xff]
    %v938 = vld [vmem:[%s8 + $0xd8] sm:$0xff]
    %v939 = vld [vmem:[%s8 + $0xe0] sm:$0xff]
    %v940 = vld [vmem:[%s8 + $0xe8] sm:$0xff]
    %v941 = vld [vmem:[%s8 + $0xf0] sm:$0xff]
    %v942 = vld [vmem:[%s8 + $0xf8] sm:$0xff]
    %v943 = vld [vmem:[%s8 + $0x100] sm:$0xff]
    %v944 = vld [vmem:[%s8 + $0x108] sm:$0xff]
    %v945 = vld [vmem:[%s8 + $0x110] sm:$0xff]
    %v946 = vld [vmem:[%s8 + $0x118] sm:$0xff]
    %v947 = vld [vmem:[%s8 + $0x120] sm:$0xff]
    %v948 = vld [vmem:[%s8 + $0x128] sm:$0xff]
    %v949 = vld [vmem:[%s8 + $0x130] sm:$0xff]
    %v950 = vld [vmem:[%s8 + $0x138] sm:$0xff]
    %v951 = vld [vmem:[%s8 + $0x140] sm:$0xff]
    %v952 = vld [vmem:[%s8 + $0x148] sm:$0xff]
    %v953 = vld [vmem:[%s8 + $0x150] sm:$0xff]
    %v954 = vld [vmem:[%s8 + $0x158] sm:$0xff]
    %v955 = vld [vmem:[%s8 + $0x160] sm:$0xff]
    %v956 = vld [vmem:[%s8 + $0x168] sm:$0xff]
    %v957 = vld [vmem:[%s8 + $0x170] sm:$0xff]
    %v958 = vld [vmem:[%s8 + $0x178] sm:$0xff]
    %v959 = vld [vmem:[%s8 + $0x180] sm:$0xff]
    %v960 = vld [vmem:[%s8 + $0x188] sm:$0xff]
    %v961 = vld [vmem:[%s8 + $0x190] sm:$0xff]
    %v962 = vld [vmem:[%s8 + $0x198] sm:$0xff]
    %v963 = vld [vmem:[%s8 + $0x1a0] sm:$0xff]
    %v964 = vld [vmem:[%s8 + $0x1a8] sm:$0xff]
    %v965 = vld [vmem:[%s8 + $0x1b0] sm:$0xff]
    %v966 = vld [vmem:[%s8 + $0x1b8] sm:$0xff]
    %v967 = vld [vmem:[%s8 + $0x1c0] sm:$0xff]
    %v968 = vld [vmem:[%s8 + $0x1c8] sm:$0xff]
    %v969 = vld [vmem:[%s8 + $0x1d0] sm:$0xff]
    %v970 = vld [vmem:[%s8 + $0x1d8] sm:$0xff]
    %v971 = vld [vmem:[%s8 + $0x1e0] sm:$0xff]
    %v972 = vld [vmem:[%s8 + $0x1e8] sm:$0xff]
    %v973 = vld [vmem:[%s8 + $0x1f0] sm:$0xff]
    %v974 = vld [vmem:[%s8 + $0x1f8] sm:$0xff]
    %975 = vmatprep.subr.mxu0 %v912
    %976 = vmatpush1.msra.mxu0 %v911
    %977 = vmatprep.subr.mxu0 %v916
    %978 = vmatpush1.msra.mxu0 %v915
    %979 = vmatprep.subr.mxu0 %v920
    %980 = vmatpush1.msra.mxu0 %v919
    %981 = vmatprep.subr.mxu0 %v924
    %982 = vmatpush1.msra.mxu0 %v923
    %983 = vmatprep.subr.mxu0 %v928
    %984 = vmatpush1.msra.mxu0 %v927
    %985 = vmatprep.subr.mxu0 %v932
    %986 = vmatpush1.msra.mxu0 %v931
    %987 = vmatprep.subr.mxu0 %v936
    %988 = vmatpush1.msra.mxu0 %v935
    %989 = vmatprep.subr.mxu0 %v940
    %990 = vmatpush1.msra.mxu0 %v939
    %991 = vmatprep.subr.mxu0 %v944
    %992 = vmatpush1.msra.mxu0 %v943
    %993 = vmatprep.subr.mxu0 %v948
    %994 = vmatpush1.msra.mxu0 %v947
    %995 = vmatprep.subr.mxu0 %v952
    %996 = vmatpush1.msra.mxu0 %v951
    %997 = vmatprep.subr.mxu0 %v956
    %998 = vmatpush1.msra.mxu0 %v955
    %999 = vmatprep.subr.mxu0 %v960
    %1000 = vmatpush1.msra.mxu0 %v959
    %1001 = vmatprep.subr.mxu0 %v964
    %1002 = vmatpush1.msra.mxu0 %v963
    %1003 = vmatprep.subr.mxu0 %v968
    %1004 = vmatpush1.msra.mxu0 %v967
    %1005 = vmatprep.subr.mxu0 %v972
    %1006 = vmatpush1.msra.mxu0 %v971
    %1007 = vmatprep.subr.mxu0 0.0
    %1008 = vmatpush1.msra.mxu0 0.0
    %1009 = vmatprep.subr.mxu0 0.0
    %1010 = vmatpush1.msra.mxu0 0.0
    %1011 = vmatprep.subr.mxu0 0.0
    %1012 = vmatpush1.msra.mxu0 0.0
    %1013 = vmatprep.subr.mxu0 0.0
    %1014 = vmatpush1.msra.mxu0 0.0
    %1015 = vmatprep.subr.mxu0 0.0
    %1016 = vmatpush1.msra.mxu0 0.0
    %1017 = vmatprep.subr.mxu0 0.0
    %1018 = vmatpush1.msra.mxu0 0.0
    %1019 = vmatprep.subr.mxu0 0.0
    %1020 = vmatpush1.msra.mxu0 0.0
    %1021 = vmatprep.subr.mxu0 0.0
    %1022 = vmatpush1.msra.mxu0 0.0
    %1023 = vmatprep.subr.mxu0 0.0
    %1024 = vmatpush1.msra.mxu0 0.0
    %1025 = vmatprep.subr.mxu0 0.0
    %1026 = vmatpush1.msra.mxu0 0.0
    %1027 = vmatprep.subr.mxu0 0.0
    %1028 = vmatpush1.msra.mxu0 0.0
    %1029 = vmatprep.subr.mxu0 0.0
    %1030 = vmatpush1.msra.mxu0 0.0
    %1031 = vmatprep.subr.mxu0 0.0
    %1032 = vmatpush1.msra.mxu0 0.0
    %1033 = vmatprep.subr.mxu0 0.0
    %1034 = vmatpush1.msra.mxu0 0.0
    %1035 = vmatprep.subr.mxu0 0.0
    %1036 = vmatpush1.msra.mxu0 0.0
    %1037 = vmatprep.subr.mxu0 0.0
    %1038 = vmatpush1.msra.mxu0 0.0
    %1039 = vmatprep.mubr.f32.mxu0 0.0
    %1040 = vmatmul.mubr.f32.gmra.mrb[0].mxu0 %v903
    %v1041 = vpop.f32.mrb[0].mxu0
    %v1042 = vadd.f32 0.0, %v1041
    %v1043 = vpop.f32.mrb[0].mxu0
    %v1044 = vadd.f32 0.0, %v1043
    %1045 = vdwg.mxu0
    %1046 = vmatprep.subr.mxu0 %v914
    %1047 = vmatpush1.msra.mxu0 %v913
    %1048 = vmatprep.subr.mxu0 %v918
    %1049 = vmatpush1.msra.mxu0 %v917
    %1050 = vmatprep.subr.mxu0 %v922
    %1051 = vmatpush1.msra.mxu0 %v921
    %1052 = vmatprep.subr.mxu0 %v926
    %1053 = vmatpush1.msra.mxu0 %v925
    %1054 = vmatprep.subr.mxu0 %v930
    %1055 = vmatpush1.msra.mxu0 %v929
    %1056 = vmatprep.subr.mxu0 %v934
    %1057 = vmatpush1.msra.mxu0 %v933
    %1058 = vmatprep.subr.mxu0 %v938
    %1059 = vmatpush1.msra.mxu0 %v937
    %1060 = vmatprep.subr.mxu0 %v942
    %1061 = vmatpush1.msra.mxu0 %v941
    %1062 = vmatprep.subr.mxu0 %v946
    %1063 = vmatpush1.msra.mxu0 %v945
    %1064 = vmatprep.subr.mxu0 %v950
    %1065 = vmatpush1.msra.mxu0 %v949
    %1066 = vmatprep.subr.mxu0 %v954
    %1067 = vmatpush1.msra.mxu0 %v953
    %1068 = vmatprep.subr.mxu0 %v958
    %1069 = vmatpush1.msra.mxu0 %v957
    %1070 = vmatprep.subr.mxu0 %v962
    %1071 = vmatpush1.msra.mxu0 %v961
    %1072 = vmatprep.subr.mxu0 %v966
    %1073 = vmatpush1.msra.mxu0 %v965
    %1074 = vmatprep.subr.mxu0 %v970
    %1075 = vmatpush1.msra.mxu0 %v969
    %1076 = vmatprep.subr.mxu0 %v974
    %1077 = vmatpush1.msra.mxu0 %v973
    %1078 = vmatprep.subr.mxu0 0.0
    %1079 = vmatpush1.msra.mxu0 0.0
    %1080 = vmatprep.subr.mxu0 0.0
    %1081 = vmatpush1.msra.mxu0 0.0
    %1082 = vmatprep.subr.mxu0 0.0
    %1083 = vmatpush1.msra.mxu0 0.0
    %1084 = vmatprep.subr.mxu0 0.0
    %1085 = vmatpush1.msra.mxu0 0.0
    %1086 = vmatprep.subr.mxu0 0.0
    %1087 = vmatpush1.msra.mxu0 0.0
    %1088 = vmatprep.subr.mxu0 0.0
    %1089 = vmatpush1.msra.mxu0 0.0
    %1090 = vmatprep.subr.mxu0 0.0
    %1091 = vmatpush1.msra.mxu0 0.0
    %1092 = vmatprep.subr.mxu0 0.0
    %1093 = vmatpush1.msra.mxu0 0.0
    %1094 = vmatprep.subr.mxu0 0.0
    %1095 = vmatpush1.msra.mxu0 0.0
    %1096 = vmatprep.subr.mxu0 0.0
    %1097 = vmatpush1.msra.mxu0 0.0
    %1098 = vmatprep.subr.mxu0 0.0
    %1099 = vmatpush1.msra.mxu0 0.0
    %1100 = vmatprep.subr.mxu0 0.0
    %1101 = vmatpush1.msra.mxu0 0.0
    %1102 = vmatprep.subr.mxu0 0.0
    %1103 = vmatpush1.msra.mxu0 0.0
    %1104 = vmatprep.subr.mxu0 0.0
    %1105 = vmatpush1.msra.mxu0 0.0
    %1106 = vmatprep.subr.mxu0 0.0
    %1107 = vmatpush1.msra.mxu0 0.0
    %1108 = vmatprep.subr.mxu0 0.0
    %1109 = vmatpush1.msra.mxu0 0.0
    %1110 = vmatprep.mubr.f32.mxu0 0.0
    %1111 = vmatmul.mubr.f32.gmra.mrb[0].mxu0 %v903
    %v1112 = vpop.f32.mrb[0].mxu0
    %v1113 = vadd.f32 0.0, %v1112
    %v1114 = vpop.f32.mrb[0].mxu0
    %v1115 = vadd.f32 0.0, %v1114
    %1116 = vdwg.mxu0
    %v1117 = vadd.f32 %v907, %v1042
    %v1118 = vadd.f32 %v908, %v1044
    %v1119 = vadd.f32 %v909, %v1113
    %v1120 = vadd.f32 %v910, %v1115
    %v1121 = vxor.u32 %v1117, 2147483648
    %v1122 = vmul.f32 %v1121, 1.442695
    %v1123 = vpow.pop %v1122
    %v1124 = vadd.f32 %v1123, 1.0
    %v1125 = vrcp.pop %v1124
    %v1126 = vmul.f32 1.0, %v1125
    %v1127 = vxor.u32 %v1118, 2147483648
    %v1128 = vmul.f32 %v1127, 1.442695
    %v1129 = vpow.pop %v1128
    %v1130 = vadd.f32 %v1129, 1.0
    %v1131 = vrcp.pop %v1130
    %v1132 = vmul.f32 1.0, %v1131
    %v1133 = vtanh.pop %v1119
    %v1134 = vxor.u32 %v1120, 2147483648
    %v1135 = vmul.f32 %v1134, 1.442695
    %v1136 = vpow.pop %v1135
    %v1137 = vadd.f32 %v1136, 1.0
    %v1138 = vrcp.pop %v1137
    %v1139 = vmul.f32 1.0, %v1138
    %v1140 = vmul.f32 %v1132, %v901
    %v1141 = vmul.f32 %v1126, %v1133
    %v1142 = vadd.f32 %v1140, %v1141
    %v1143 = vtanh.pop %v1142
    %v1144 = vmul.f32 %v1139, %v1143
    %s1145 = scalar_lea.vmem [#allocation3], 16
    %1146 = vst [vmem:[%s1145] sm:$0xff] %v1144
    %s1147 = scalar_lea.vmem [#allocation2], 96
    %v1148 = vld [vmem:[%s1147] sm:$0xff]
    %v1149 = vld [vmem:[%s1147 + $0x8] sm:$0xff]
    %v1150 = vld [vmem:[%s1147 + $0x10] sm:$0xff]
    %v1151 = vld [vmem:[%s1147 + $0x18] sm:$0xff]
    %v1152 = vld [vmem:[%s8] sm:$0xff]
    %v1153 = vld [vmem:[%s8 + $0x8] sm:$0xff]
    %v1154 = vld [vmem:[%s8 + $0x10] sm:$0xff]
    %v1155 = vld [vmem:[%s8 + $0x18] sm:$0xff]
    %v1156 = vld [vmem:[%s8 + $0x20] sm:$0xff]
    %v1157 = vld [vmem:[%s8 + $0x28] sm:$0xff]
    %v1158 = vld [vmem:[%s8 + $0x30] sm:$0xff]
    %v1159 = vld [vmem:[%s8 + $0x38] sm:$0xff]
    %v1160 = vld [vmem:[%s8 + $0x40] sm:$0xff]
    %v1161 = vld [vmem:[%s8 + $0x48] sm:$0xff]
    %v1162 = vld [vmem:[%s8 + $0x50] sm:$0xff]
    %v1163 = vld [vmem:[%s8 + $0x58] sm:$0xff]
    %v1164 = vld [vmem:[%s8 + $0x60] sm:$0xff]
    %v1165 = vld [vmem:[%s8 + $0x68] sm:$0xff]
    %v1166 = vld [vmem:[%s8 + $0x70] sm:$0xff]
    %v1167 = vld [vmem:[%s8 + $0x78] sm:$0xff]
    %v1168 = vld [vmem:[%s8 + $0x80] sm:$0xff]
    %v1169 = vld [vmem:[%s8 + $0x88] sm:$0xff]
    %v1170 = vld [vmem:[%s8 + $0x90] sm:$0xff]
    %v1171 = vld [vmem:[%s8 + $0x98] sm:$0xff]
    %v1172 = vld [vmem:[%s8 + $0xa0] sm:$0xff]
    %v1173 = vld [vmem:[%s8 + $0xa8] sm:$0xff]
    %v1174 = vld [vmem:[%s8 + $0xb0] sm:$0xff]
    %v1175 = vld [vmem:[%s8 + $0xb8] sm:$0xff]
    %v1176 = vld [vmem:[%s8 + $0xc0] sm:$0xff]
    %v1177 = vld [vmem:[%s8 + $0xc8] sm:$0xff]
    %v1178 = vld [vmem:[%s8 + $0xd0] sm:$0xff]
    %v1179 = vld [vmem:[%s8 + $0xd8] sm:$0xff]
    %v1180 = vld [vmem:[%s8 + $0xe0] sm:$0xff]
    %v1181 = vld [vmem:[%s8 + $0xe8] sm:$0xff]
    %v1182 = vld [vmem:[%s8 + $0xf0] sm:$0xff]
    %v1183 = vld [vmem:[%s8 + $0xf8] sm:$0xff]
    %v1184 = vld [vmem:[%s8 + $0x100] sm:$0xff]
    %v1185 = vld [vmem:[%s8 + $0x108] sm:$0xff]
    %v1186 = vld [vmem:[%s8 + $0x110] sm:$0xff]
    %v1187 = vld [vmem:[%s8 + $0x118] sm:$0xff]
    %v1188 = vld [vmem:[%s8 + $0x120] sm:$0xff]
    %v1189 = vld [vmem:[%s8 + $0x128] sm:$0xff]
    %v1190 = vld [vmem:[%s8 + $0x130] sm:$0xff]
    %v1191 = vld [vmem:[%s8 + $0x138] sm:$0xff]
    %v1192 = vld [vmem:[%s8 + $0x140] sm:$0xff]
    %v1193 = vld [vmem:[%s8 + $0x148] sm:$0xff]
    %v1194 = vld [vmem:[%s8 + $0x150] sm:$0xff]
    %v1195 = vld [vmem:[%s8 + $0x158] sm:$0xff]
    %v1196 = vld [vmem:[%s8 + $0x160] sm:$0xff]
    %v1197 = vld [vmem:[%s8 + $0x168] sm:$0xff]
    %v1198 = vld [vmem:[%s8 + $0x170] sm:$0xff]
    %v1199 = vld [vmem:[%s8 + $0x178] sm:$0xff]
    %v1200 = vld [vmem:[%s8 + $0x180] sm:$0xff]
    %v1201 = vld [vmem:[%s8 + $0x188] sm:$0xff]
    %v1202 = vld [vmem:[%s8 + $0x190] sm:$0xff]
    %v1203 = vld [vmem:[%s8 + $0x198] sm:$0xff]
    %v1204 = vld [vmem:[%s8 + $0x1a0] sm:$0xff]
    %v1205 = vld [vmem:[%s8 + $0x1a8] sm:$0xff]
    %v1206 = vld [vmem:[%s8 + $0x1b0] sm:$0xff]
    %v1207 = vld [vmem:[%s8 + $0x1b8] sm:$0xff]
    %v1208 = vld [vmem:[%s8 + $0x1c0] sm:$0xff]
    %v1209 = vld [vmem:[%s8 + $0x1c8] sm:$0xff]
    %v1210 = vld [vmem:[%s8 + $0x1d0] sm:$0xff]
    %v1211 = vld [vmem:[%s8 + $0x1d8] sm:$0xff]
    %v1212 = vld [vmem:[%s8 + $0x1e0] sm:$0xff]
    %v1213 = vld [vmem:[%s8 + $0x1e8] sm:$0xff]
    %v1214 = vld [vmem:[%s8 + $0x1f0] sm:$0xff]
    %v1215 = vld [vmem:[%s8 + $0x1f8] sm:$0xff]
    %1216 = vmatprep.subr.mxu0 %v1153
    %1217 = vmatpush1.msra.mxu0 %v1152
    %1218 = vmatprep.subr.mxu0 %v1157
    %1219 = vmatpush1.msra.mxu0 %v1156
    %1220 = vmatprep.subr.mxu0 %v1161
    %1221 = vmatpush1.msra.mxu0 %v1160
    %1222 = vmatprep.subr.mxu0 %v1165
    %1223 = vmatpush1.msra.mxu0 %v1164
    %1224 = vmatprep.subr.mxu0 %v1169
    %1225 = vmatpush1.msra.mxu0 %v1168
    %1226 = vmatprep.subr.mxu0 %v1173
    %1227 = vmatpush1.msra.mxu0 %v1172
    %1228 = vmatprep.subr.mxu0 %v1177
    %1229 = vmatpush1.msra.mxu0 %v1176
    %1230 = vmatprep.subr.mxu0 %v1181
    %1231 = vmatpush1.msra.mxu0 %v1180
    %1232 = vmatprep.subr.mxu0 %v1185
    %1233 = vmatpush1.msra.mxu0 %v1184
    %1234 = vmatprep.subr.mxu0 %v1189
    %1235 = vmatpush1.msra.mxu0 %v1188
    %1236 = vmatprep.subr.mxu0 %v1193
    %1237 = vmatpush1.msra.mxu0 %v1192
    %1238 = vmatprep.subr.mxu0 %v1197
    %1239 = vmatpush1.msra.mxu0 %v1196
    %1240 = vmatprep.subr.mxu0 %v1201
    %1241 = vmatpush1.msra.mxu0 %v1200
    %1242 = vmatprep.subr.mxu0 %v1205
    %1243 = vmatpush1.msra.mxu0 %v1204
    %1244 = vmatprep.subr.mxu0 %v1209
    %1245 = vmatpush1.msra.mxu0 %v1208
    %1246 = vmatprep.subr.mxu0 %v1213
    %1247 = vmatpush1.msra.mxu0 %v1212
    %1248 = vmatprep.subr.mxu0 0.0
    %1249 = vmatpush1.msra.mxu0 0.0
    %1250 = vmatprep.subr.mxu0 0.0
    %1251 = vmatpush1.msra.mxu0 0.0
    %1252 = vmatprep.subr.mxu0 0.0
    %1253 = vmatpush1.msra.mxu0 0.0
    %1254 = vmatprep.subr.mxu0 0.0
    %1255 = vmatpush1.msra.mxu0 0.0
    %1256 = vmatprep.subr.mxu0 0.0
    %1257 = vmatpush1.msra.mxu0 0.0
    %1258 = vmatprep.subr.mxu0 0.0
    %1259 = vmatpush1.msra.mxu0 0.0
    %1260 = vmatprep.subr.mxu0 0.0
    %1261 = vmatpush1.msra.mxu0 0.0
    %1262 = vmatprep.subr.mxu0 0.0
    %1263 = vmatpush1.msra.mxu0 0.0
    %1264 = vmatprep.subr.mxu0 0.0
    %1265 = vmatpush1.msra.mxu0 0.0
    %1266 = vmatprep.subr.mxu0 0.0
    %1267 = vmatpush1.msra.mxu0 0.0
    %1268 = vmatprep.subr.mxu0 0.0
    %1269 = vmatpush1.msra.mxu0 0.0
    %1270 = vmatprep.subr.mxu0 0.0
    %1271 = vmatpush1.msra.mxu0 0.0
    %1272 = vmatprep.subr.mxu0 0.0
    %1273 = vmatpush1.msra.mxu0 0.0
    %1274 = vmatprep.subr.mxu0 0.0
    %1275 = vmatpush1.msra.mxu0 0.0
    %1276 = vmatprep.subr.mxu0 0.0
    %1277 = vmatpush1.msra.mxu0 0.0
    %1278 = vmatprep.subr.mxu0 0.0
    %1279 = vmatpush1.msra.mxu0 0.0
    %1280 = vmatprep.mubr.f32.mxu0 0.0
    %1281 = vmatmul.mubr.f32.gmra.mrb[0].mxu0 %v1144
    %v1282 = vpop.f32.mrb[0].mxu0
    %v1283 = vadd.f32 0.0, %v1282
    %v1284 = vpop.f32.mrb[0].mxu0
    %v1285 = vadd.f32 0.0, %v1284
    %1286 = vdwg.mxu0
    %1287 = vmatprep.subr.mxu0 %v1155
    %1288 = vmatpush1.msra.mxu0 %v1154
    %1289 = vmatprep.subr.mxu0 %v1159
    %1290 = vmatpush1.msra.mxu0 %v1158
    %1291 = vmatprep.subr.mxu0 %v1163
    %1292 = vmatpush1.msra.mxu0 %v1162
    %1293 = vmatprep.subr.mxu0 %v1167
    %1294 = vmatpush1.msra.mxu0 %v1166
    %1295 = vmatprep.subr.mxu0 %v1171
    %1296 = vmatpush1.msra.mxu0 %v1170
    %1297 = vmatprep.subr.mxu0 %v1175
    %1298 = vmatpush1.msra.mxu0 %v1174
    %1299 = vmatprep.subr.mxu0 %v1179
    %1300 = vmatpush1.msra.mxu0 %v1178
    %1301 = vmatprep.subr.mxu0 %v1183
    %1302 = vmatpush1.msra.mxu0 %v1182
    %1303 = vmatprep.subr.mxu0 %v1187
    %1304 = vmatpush1.msra.mxu0 %v1186
    %1305 = vmatprep.subr.mxu0 %v1191
    %1306 = vmatpush1.msra.mxu0 %v1190
    %1307 = vmatprep.subr.mxu0 %v1195
    %1308 = vmatpush1.msra.mxu0 %v1194
    %1309 = vmatprep.subr.mxu0 %v1199
    %1310 = vmatpush1.msra.mxu0 %v1198
    %1311 = vmatprep.subr.mxu0 %v1203
    %1312 = vmatpush1.msra.mxu0 %v1202
    %1313 = vmatprep.subr.mxu0 %v1207
    %1314 = vmatpush1.msra.mxu0 %v1206
    %1315 = vmatprep.subr.mxu0 %v1211
    %1316 = vmatpush1.msra.mxu0 %v1210
    %1317 = vmatprep.subr.mxu0 %v1215
    %1318 = vmatpush1.msra.mxu0 %v1214
    %1319 = vmatprep.subr.mxu0 0.0
    %1320 = vmatpush1.msra.mxu0 0.0
    %1321 = vmatprep.subr.mxu0 0.0
    %1322 = vmatpush1.msra.mxu0 0.0
    %1323 = vmatprep.subr.mxu0 0.0
    %1324 = vmatpush1.msra.mxu0 0.0
    %1325 = vmatprep.subr.mxu0 0.0
    %1326 = vmatpush1.msra.mxu0 0.0
    %1327 = vmatprep.subr.mxu0 0.0
    %1328 = vmatpush1.msra.mxu0 0.0
    %1329 = vmatprep.subr.mxu0 0.0
    %1330 = vmatpush1.msra.mxu0 0.0
    %1331 = vmatprep.subr.mxu0 0.0
    %1332 = vmatpush1.msra.mxu0 0.0
    %1333 = vmatprep.subr.mxu0 0.0
    %1334 = vmatpush1.msra.mxu0 0.0
    %1335 = vmatprep.subr.mxu0 0.0
    %1336 = vmatpush1.msra.mxu0 0.0
    %1337 = vmatprep.subr.mxu0 0.0
    %1338 = vmatpush1.msra.mxu0 0.0
    %1339 = vmatprep.subr.mxu0 0.0
    %1340 = vmatpush1.msra.mxu0 0.0
    %1341 = vmatprep.subr.mxu0 0.0
    %1342 = vmatpush1.msra.mxu0 0.0
    %1343 = vmatprep.subr.mxu0 0.0
    %1344 = vmatpush1.msra.mxu0 0.0
    %1345 = vmatprep.subr.mxu0 0.0
    %1346 = vmatpush1.msra.mxu0 0.0
    %1347 = vmatprep.subr.mxu0 0.0
    %1348 = vmatpush1.msra.mxu0 0.0
    %1349 = vmatprep.subr.mxu0 0.0
    %1350 = vmatpush1.msra.mxu0 0.0
    %1351 = vmatprep.mubr.f32.mxu0 0.0
    %1352 = vmatmul.mubr.f32.gmra.mrb[0].mxu0 %v1144
    %v1353 = vpop.f32.mrb[0].mxu0
    %v1354 = vadd.f32 0.0, %v1353
    %v1355 = vpop.f32.mrb[0].mxu0
    %v1356 = vadd.f32 0.0, %v1355
    %1357 = vdwg.mxu0
    %v1358 = vadd.f32 %v1148, %v1283
    %v1359 = vadd.f32 %v1149, %v1285
    %v1360 = vadd.f32 %v1150, %v1354
    %v1361 = vadd.f32 %v1151, %v1356
    %v1362 = vxor.u32 %v1358, 2147483648
    %v1363 = vmul.f32 %v1362, 1.442695
    %v1364 = vpow.pop %v1363
    %v1365 = vadd.f32 %v1364, 1.0
    %v1366 = vrcp.pop %v1365
    %v1367 = vmul.f32 1.0, %v1366
    %v1368 = vxor.u32 %v1359, 2147483648
    %v1369 = vmul.f32 %v1368, 1.442695
    %v1370 = vpow.pop %v1369
    %v1371 = vadd.f32 %v1370, 1.0
    %v1372 = vrcp.pop %v1371
    %v1373 = vmul.f32 1.0, %v1372
    %v1374 = vtanh.pop %v1360
    %v1375 = vxor.u32 %v1361, 2147483648
    %v1376 = vmul.f32 %v1375, 1.442695
    %v1377 = vpow.pop %v1376
    %v1378 = vadd.f32 %v1377, 1.0
    %v1379 = vrcp.pop %v1378
    %v1380 = vmul.f32 1.0, %v1379
    %v1381 = vmul.f32 %v1373, %v1142
    %v1382 = vmul.f32 %v1367, %v1374
    %v1383 = vadd.f32 %v1381, %v1382
    %v1384 = vtanh.pop %v1383
    %v1385 = vmul.f32 %v1380, %v1384
    %s1386 = scalar_lea.vmem [#allocation3], 24
    %1387 = vst [vmem:[%s1386] sm:$0xff] %v1385
    %s1388 = scalar_lea.vmem [#allocation2], 128
    %v1389 = vld [vmem:[%s1388] sm:$0xff]
    %v1390 = vld [vmem:[%s1388 + $0x8] sm:$0xff]
    %v1391 = vld [vmem:[%s1388 + $0x10] sm:$0xff]
    %v1392 = vld [vmem:[%s1388 + $0x18] sm:$0xff]
    %v1393 = vld [vmem:[%s8] sm:$0xff]
    %v1394 = vld [vmem:[%s8 + $0x8] sm:$0xff]
    %v1395 = vld [vmem:[%s8 + $0x10] sm:$0xff]
    %v1396 = vld [vmem:[%s8 + $0x18] sm:$0xff]
    %v1397 = vld [vmem:[%s8 + $0x20] sm:$0xff]
    %v1398 = vld [vmem:[%s8 + $0x28] sm:$0xff]
    %v1399 = vld [vmem:[%s8 + $0x30] sm:$0xff]
    %v1400 = vld [vmem:[%s8 + $0x38] sm:$0xff]
    %v1401 = vld [vmem:[%s8 + $0x40] sm:$0xff]
    %v1402 = vld [vmem:[%s8 + $0x48] sm:$0xff]
    %v1403 = vld [vmem:[%s8 + $0x50] sm:$0xff]
    %v1404 = vld [vmem:[%s8 + $0x58] sm:$0xff]
    %v1405 = vld [vmem:[%s8 + $0x60] sm:$0xff]
    %v1406 = vld [vmem:[%s8 + $0x68] sm:$0xff]
    %v1407 = vld [vmem:[%s8 + $0x70] sm:$0xff]
    %v1408 = vld [vmem:[%s8 + $0x78] sm:$0xff]
    %v1409 = vld [vmem:[%s8 + $0x80] sm:$0xff]
    %v1410 = vld [vmem:[%s8 + $0x88] sm:$0xff]
    %v1411 = vld [vmem:[%s8 + $0x90] sm:$0xff]
    %v1412 = vld [vmem:[%s8 + $0x98] sm:$0xff]
    %v1413 = vld [vmem:[%s8 + $0xa0] sm:$0xff]
    %v1414 = vld [vmem:[%s8 + $0xa8] sm:$0xff]
    %v1415 = vld [vmem:[%s8 + $0xb0] sm:$0xff]
    %v1416 = vld [vmem:[%s8 + $0xb8] sm:$0xff]
    %v1417 = vld [vmem:[%s8 + $0xc0] sm:$0xff]
    %v1418 = vld [vmem:[%s8 + $0xc8] sm:$0xff]
    %v1419 = vld [vmem:[%s8 + $0xd0] sm:$0xff]
    %v1420 = vld [vmem:[%s8 + $0xd8] sm:$0xff]
    %v1421 = vld [vmem:[%s8 + $0xe0] sm:$0xff]
    %v1422 = vld [vmem:[%s8 + $0xe8] sm:$0xff]
    %v1423 = vld [vmem:[%s8 + $0xf0] sm:$0xff]
    %v1424 = vld [vmem:[%s8 + $0xf8] sm:$0xff]
    %v1425 = vld [vmem:[%s8 + $0x100] sm:$0xff]
    %v1426 = vld [vmem:[%s8 + $0x108] sm:$0xff]
    %v1427 = vld [vmem:[%s8 + $0x110] sm:$0xff]
    %v1428 = vld [vmem:[%s8 + $0x118] sm:$0xff]
    %v1429 = vld [vmem:[%s8 + $0x120] sm:$0xff]
    %v1430 = vld [vmem:[%s8 + $0x128] sm:$0xff]
    %v1431 = vld [vmem:[%s8 + $0x130] sm:$0xff]
    %v1432 = vld [vmem:[%s8 + $0x138] sm:$0xff]
    %v1433 = vld [vmem:[%s8 + $0x140] sm:$0xff]
    %v1434 = vld [vmem:[%s8 + $0x148] sm:$0xff]
    %v1435 = vld [vmem:[%s8 + $0x150] sm:$0xff]
    %v1436 = vld [vmem:[%s8 + $0x158] sm:$0xff]
    %v1437 = vld [vmem:[%s8 + $0x160] sm:$0xff]
    %v1438 = vld [vmem:[%s8 + $0x168] sm:$0xff]
    %v1439 = vld [vmem:[%s8 + $0x170] sm:$0xff]
    %v1440 = vld [vmem:[%s8 + $0x178] sm:$0xff]
    %v1441 = vld [vmem:[%s8 + $0x180] sm:$0xff]
    %v1442 = vld [vmem:[%s8 + $0x188] sm:$0xff]
    %v1443 = vld [vmem:[%s8 + $0x190] sm:$0xff]
    %v1444 = vld [vmem:[%s8 + $0x198] sm:$0xff]
    %v1445 = vld [vmem:[%s8 + $0x1a0] sm:$0xff]
    %v1446 = vld [vmem:[%s8 + $0x1a8] sm:$0xff]
    %v1447 = vld [vmem:[%s8 + $0x1b0] sm:$0xff]
    %v1448 = vld [vmem:[%s8 + $0x1b8] sm:$0xff]
    %v1449 = vld [vmem:[%s8 + $0x1c0] sm:$0xff]
    %v1450 = vld [vmem:[%s8 + $0x1c8] sm:$0xff]
    %v1451 = vld [vmem:[%s8 + $0x1d0] sm:$0xff]
    %v1452 = vld [vmem:[%s8 + $0x1d8] sm:$0xff]
    %v1453 = vld [vmem:[%s8 + $0x1e0] sm:$0xff]
    %v1454 = vld [vmem:[%s8 + $0x1e8] sm:$0xff]
    %v1455 = vld [vmem:[%s8 + $0x1f0] sm:$0xff]
    %v1456 = vld [vmem:[%s8 + $0x1f8] sm:$0xff]
    %1457 = vmatprep.subr.mxu0 %v1394
    %1458 = vmatpush1.msra.mxu0 %v1393
    %1459 = vmatprep.subr.mxu0 %v1398
    %1460 = vmatpush1.msra.mxu0 %v1397
    %1461 = vmatprep.subr.mxu0 %v1402
    %1462 = vmatpush1.msra.mxu0 %v1401
    %1463 = vmatprep.subr.mxu0 %v1406
    %1464 = vmatpush1.msra.mxu0 %v1405
    %1465 = vmatprep.subr.mxu0 %v1410
    %1466 = vmatpush1.msra.mxu0 %v1409
    %1467 = vmatprep.subr.mxu0 %v1414
    %1468 = vmatpush1.msra.mxu0 %v1413
    %1469 = vmatprep.subr.mxu0 %v1418
    %1470 = vmatpush1.msra.mxu0 %v1417
    %1471 = vmatprep.subr.mxu0 %v1422
    %1472 = vmatpush1.msra.mxu0 %v1421
    %1473 = vmatprep.subr.mxu0 %v1426
    %1474 = vmatpush1.msra.mxu0 %v1425
    %1475 = vmatprep.subr.mxu0 %v1430
    %1476 = vmatpush1.msra.mxu0 %v1429
    %1477 = vmatprep.subr.mxu0 %v1434
    %1478 = vmatpush1.msra.mxu0 %v1433
    %1479 = vmatprep.subr.mxu0 %v1438
    %1480 = vmatpush1.msra.mxu0 %v1437
    %1481 = vmatprep.subr.mxu0 %v1442
    %1482 = vmatpush1.msra.mxu0 %v1441
    %1483 = vmatprep.subr.mxu0 %v1446
    %1484 = vmatpush1.msra.mxu0 %v1445
    %1485 = vmatprep.subr.mxu0 %v1450
    %1486 = vmatpush1.msra.mxu0 %v1449
    %1487 = vmatprep.subr.mxu0 %v1454
    %1488 = vmatpush1.msra.mxu0 %v1453
    %1489 = vmatprep.subr.mxu0 0.0
    %1490 = vmatpush1.msra.mxu0 0.0
    %1491 = vmatprep.subr.mxu0 0.0
    %1492 = vmatpush1.msra.mxu0 0.0
    %1493 = vmatprep.subr.mxu0 0.0
    %1494 = vmatpush1.msra.mxu0 0.0
    %1495 = vmatprep.subr.mxu0 0.0
    %1496 = vmatpush1.msra.mxu0 0.0
    %1497 = vmatprep.subr.mxu0 0.0
    %1498 = vmatpush1.msra.mxu0 0.0
    %1499 = vmatprep.subr.mxu0 0.0
    %1500 = vmatpush1.msra.mxu0 0.0
    %1501 = vmatprep.subr.mxu0 0.0
    %1502 = vmatpush1.msra.mxu0 0.0
    %1503 = vmatprep.subr.mxu0 0.0
    %1504 = vmatpush1.msra.mxu0 0.0
    %1505 = vmatprep.subr.mxu0 0.0
    %1506 = vmatpush1.msra.mxu0 0.0
    %1507 = vmatprep.subr.mxu0 0.0
    %1508 = vmatpush1.msra.mxu0 0.0
    %1509 = vmatprep.subr.mxu0 0.0
    %1510 = vmatpush1.msra.mxu0 0.0
    %1511 = vmatprep.subr.mxu0 0.0
    %1512 = vmatpush1.msra.mxu0 0.0
    %1513 = vmatprep.subr.mxu0 0.0
    %1514 = vmatpush1.msra.mxu0 0.0
    %1515 = vmatprep.subr.mxu0 0.0
    %1516 = vmatpush1.msra.mxu0 0.0
    %1517 = vmatprep.subr.mxu0 0.0
    %1518 = vmatpush1.msra.mxu0 0.0
    %1519 = vmatprep.subr.mxu0 0.0
    %1520 = vmatpush1.msra.mxu0 0.0
    %1521 = vmatprep.mubr.f32.mxu0 0.0
    %1522 = vmatmul.mubr.f32.gmra.mrb[0].mxu0 %v1385
    %v1523 = vpop.f32.mrb[0].mxu0
    %v1524 = vadd.f32 0.0, %v1523
    %v1525 = vpop.f32.mrb[0].mxu0
    %v1526 = vadd.f32 0.0, %v1525
    %1527 = vdwg.mxu0
    %1528 = vmatprep.subr.mxu0 %v1396
    %1529 = vmatpush1.msra.mxu0 %v1395
    %1530 = vmatprep.subr.mxu0 %v1400
    %1531 = vmatpush1.msra.mxu0 %v1399
    %1532 = vmatprep.subr.mxu0 %v1404
    %1533 = vmatpush1.msra.mxu0 %v1403
    %1534 = vmatprep.subr.mxu0 %v1408
    %1535 = vmatpush1.msra.mxu0 %v1407
    %1536 = vmatprep.subr.mxu0 %v1412
    %1537 = vmatpush1.msra.mxu0 %v1411
    %1538 = vmatprep.subr.mxu0 %v1416
    %1539 = vmatpush1.msra.mxu0 %v1415
    %1540 = vmatprep.subr.mxu0 %v1420
    %1541 = vmatpush1.msra.mxu0 %v1419
    %1542 = vmatprep.subr.mxu0 %v1424
    %1543 = vmatpush1.msra.mxu0 %v1423
    %1544 = vmatprep.subr.mxu0 %v1428
    %1545 = vmatpush1.msra.mxu0 %v1427
    %1546 = vmatprep.subr.mxu0 %v1432
    %1547 = vmatpush1.msra.mxu0 %v1431
    %1548 = vmatprep.subr.mxu0 %v1436
    %1549 = vmatpush1.msra.mxu0 %v1435
    %1550 = vmatprep.subr.mxu0 %v1440
    %1551 = vmatpush1.msra.mxu0 %v1439
    %1552 = vmatprep.subr.mxu0 %v1444
    %1553 = vmatpush1.msra.mxu0 %v1443
    %1554 = vmatprep.subr.mxu0 %v1448
    %1555 = vmatpush1.msra.mxu0 %v1447
    %1556 = vmatprep.subr.mxu0 %v1452
    %1557 = vmatpush1.msra.mxu0 %v1451
    %1558 = vmatprep.subr.mxu0 %v1456
    %1559 = vmatpush1.msra.mxu0 %v1455
    %1560 = vmatprep.subr.mxu0 0.0
    %1561 = vmatpush1.msra.mxu0 0.0
    %1562 = vmatprep.subr.mxu0 0.0
    %1563 = vmatpush1.msra.mxu0 0.0
    %1564 = vmatprep.subr.mxu0 0.0
    %1565 = vmatpush1.msra.mxu0 0.0
    %1566 = vmatprep.subr.mxu0 0.0
    %1567 = vmatpush1.msra.mxu0 0.0
    %1568 = vmatprep.subr.mxu0 0.0
    %1569 = vmatpush1.msra.mxu0 0.0
    %1570 = vmatprep.subr.mxu0 0.0
    %1571 = vmatpush1.msra.mxu0 0.0
    %1572 = vmatprep.subr.mxu0 0.0
    %1573 = vmatpush1.msra.mxu0 0.0
    %1574 = vmatprep.subr.mxu0 0.0
    %1575 = vmatpush1.msra.mxu0 0.0
    %1576 = vmatprep.subr.mxu0 0.0
    %1577 = vmatpush1.msra.mxu0 0.0
    %1578 = vmatprep.subr.mxu0 0.0
    %1579 = vmatpush1.msra.mxu0 0.0
    %1580 = vmatprep.subr.mxu0 0.0
    %1581 = vmatpush1.msra.mxu0 0.0
    %1582 = vmatprep.subr.mxu0 0.0
    %1583 = vmatpush1.msra.mxu0 0.0
    %1584 = vmatprep.subr.mxu0 0.0
    %1585 = vmatpush1.msra.mxu0 0.0
    %1586 = vmatprep.subr.mxu0 0.0
    %1587 = vmatpush1.msra.mxu0 0.0
    %1588 = vmatprep.subr.mxu0 0.0
    %1589 = vmatpush1.msra.mxu0 0.0
    %1590 = vmatprep.subr.mxu0 0.0
    %1591 = vmatpush1.msra.mxu0 0.0
    %1592 = vmatprep.mubr.f32.mxu0 0.0
    %1593 = vmatmul.mubr.f32.gmra.mrb[0].mxu0 %v1385
    %v1594 = vpop.f32.mrb[0].mxu0
    %v1595 = vadd.f32 0.0, %v1594
    %v1596 = vpop.f32.mrb[0].mxu0
    %v1597 = vadd.f32 0.0, %v1596
    %1598 = vdwg.mxu0
    %v1599 = vadd.f32 %v1389, %v1524
    %v1600 = vadd.f32 %v1390, %v1526
    %v1601 = vadd.f32 %v1391, %v1595
    %v1602 = vadd.f32 %v1392, %v1597
    %v1603 = vxor.u32 %v1599, 2147483648
    %v1604 = vmul.f32 %v1603, 1.442695
    %v1605 = vpow.pop %v1604
    %v1606 = vadd.f32 %v1605, 1.0
    %v1607 = vrcp.pop %v1606
    %v1608 = vmul.f32 1.0, %v1607
    %v1609 = vxor.u32 %v1600, 2147483648
    %v1610 = vmul.f32 %v1609, 1.442695
    %v1611 = vpow.pop %v1610
    %v1612 = vadd.f32 %v1611, 1.0
    %v1613 = vrcp.pop %v1612
    %v1614 = vmul.f32 1.0, %v1613
    %v1615 = vtanh.pop %v1601
    %v1616 = vxor.u32 %v1602, 2147483648
    %v1617 = vmul.f32 %v1616, 1.442695
    %v1618 = vpow.pop %v1617
    %v1619 = vadd.f32 %v1618, 1.0
    %v1620 = vrcp.pop %v1619
    %v1621 = vmul.f32 1.0, %v1620
    %v1622 = vmul.f32 %v1614, %v1383
    %v1623 = vmul.f32 %v1608, %v1615
    %v1624 = vadd.f32 %v1622, %v1623
    %v1625 = vtanh.pop %v1624
    %v1626 = vmul.f32 %v1621, %v1625
    %s1627 = scalar_lea.vmem [#allocation3], 32
    %1628 = vst [vmem:[%s1627] sm:$0xff] %v1626
    %s1629 = scalar_lea.vmem [#allocation2], 160
    %v1630 = vld [vmem:[%s1629] sm:$0xff]
    %v1631 = vld [vmem:[%s1629 + $0x8] sm:$0xff]
    %v1632 = vld [vmem:[%s1629 + $0x10] sm:$0xff]
    %v1633 = vld [vmem:[%s1629 + $0x18] sm:$0xff]
    %v1634 = vld [vmem:[%s8] sm:$0xff]
    %v1635 = vld [vmem:[%s8 + $0x8] sm:$0xff]
    %v1636 = vld [vmem:[%s8 + $0x10] sm:$0xff]
    %v1637 = vld [vmem:[%s8 + $0x18] sm:$0xff]
    %v1638 = vld [vmem:[%s8 + $0x20] sm:$0xff]
    %v1639 = vld [vmem:[%s8 + $0x28] sm:$0xff]
    %v1640 = vld [vmem:[%s8 + $0x30] sm:$0xff]
    %v1641 = vld [vmem:[%s8 + $0x38] sm:$0xff]
    %v1642 = vld [vmem:[%s8 + $0x40] sm:$0xff]
    %v1643 = vld [vmem:[%s8 + $0x48] sm:$0xff]
    %v1644 = vld [vmem:[%s8 + $0x50] sm:$0xff]
    %v1645 = vld [vmem:[%s8 + $0x58] sm:$0xff]
    %v1646 = vld [vmem:[%s8 + $0x60] sm:$0xff]
    %v1647 = vld [vmem:[%s8 + $0x68] sm:$0xff]
    %v1648 = vld [vmem:[%s8 + $0x70] sm:$0xff]
    %v1649 = vld [vmem:[%s8 + $0x78] sm:$0xff]
    %v1650 = vld [vmem:[%s8 + $0x80] sm:$0xff]
    %v1651 = vld [vmem:[%s8 + $0x88] sm:$0xff]
    %v1652 = vld [vmem:[%s8 + $0x90] sm:$0xff]
    %v1653 = vld [vmem:[%s8 + $0x98] sm:$0xff]
    %v1654 = vld [vmem:[%s8 + $0xa0] sm:$0xff]
    %v1655 = vld [vmem:[%s8 + $0xa8] sm:$0xff]
    %v1656 = vld [vmem:[%s8 + $0xb0] sm:$0xff]
    %v1657 = vld [vmem:[%s8 + $0xb8] sm:$0xff]
    %v1658 = vld [vmem:[%s8 + $0xc0] sm:$0xff]
    %v1659 = vld [vmem:[%s8 + $0xc8] sm:$0xff]
    %v1660 = vld [vmem:[%s8 + $0xd0] sm:$0xff]
    %v1661 = vld [vmem:[%s8 + $0xd8] sm:$0xff]
    %v1662 = vld [vmem:[%s8 + $0xe0] sm:$0xff]
    %v1663 = vld [vmem:[%s8 + $0xe8] sm:$0xff]
    %v1664 = vld [vmem:[%s8 + $0xf0] sm:$0xff]
    %v1665 = vld [vmem:[%s8 + $0xf8] sm:$0xff]
    %v1666 = vld [vmem:[%s8 + $0x100] sm:$0xff]
    %v1667 = vld [vmem:[%s8 + $0x108] sm:$0xff]
    %v1668 = vld [vmem:[%s8 + $0x110] sm:$0xff]
    %v1669 = vld [vmem:[%s8 + $0x118] sm:$0xff]
    %v1670 = vld [vmem:[%s8 + $0x120] sm:$0xff]
    %v1671 = vld [vmem:[%s8 + $0x128] sm:$0xff]
    %v1672 = vld [vmem:[%s8 + $0x130] sm:$0xff]
    %v1673 = vld [vmem:[%s8 + $0x138] sm:$0xff]
    %v1674 = vld [vmem:[%s8 + $0x140] sm:$0xff]
    %v1675 = vld [vmem:[%s8 + $0x148] sm:$0xff]
    %v1676 = vld [vmem:[%s8 + $0x150] sm:$0xff]
    %v1677 = vld [vmem:[%s8 + $0x158] sm:$0xff]
    %v1678 = vld [vmem:[%s8 + $0x160] sm:$0xff]
    %v1679 = vld [vmem:[%s8 + $0x168] sm:$0xff]
    %v1680 = vld [vmem:[%s8 + $0x170] sm:$0xff]
    %v1681 = vld [vmem:[%s8 + $0x178] sm:$0xff]
    %v1682 = vld [vmem:[%s8 + $0x180] sm:$0xff]
    %v1683 = vld [vmem:[%s8 + $0x188] sm:$0xff]
    %v1684 = vld [vmem:[%s8 + $0x190] sm:$0xff]
    %v1685 = vld [vmem:[%s8 + $0x198] sm:$0xff]
    %v1686 = vld [vmem:[%s8 + $0x1a0] sm:$0xff]
    %v1687 = vld [vmem:[%s8 + $0x1a8] sm:$0xff]
    %v1688 = vld [vmem:[%s8 + $0x1b0] sm:$0xff]
    %v1689 = vld [vmem:[%s8 + $0x1b8] sm:$0xff]
    %v1690 = vld [vmem:[%s8 + $0x1c0] sm:$0xff]
    %v1691 = vld [vmem:[%s8 + $0x1c8] sm:$0xff]
    %v1692 = vld [vmem:[%s8 + $0x1d0] sm:$0xff]
    %v1693 = vld [vmem:[%s8 + $0x1d8] sm:$0xff]
    %v1694 = vld [vmem:[%s8 + $0x1e0] sm:$0xff]
    %v1695 = vld [vmem:[%s8 + $0x1e8] sm:$0xff]
    %v1696 = vld [vmem:[%s8 + $0x1f0] sm:$0xff]
    %v1697 = vld [vmem:[%s8 + $0x1f8] sm:$0xff]
    %1698 = vmatprep.subr.mxu0 %v1635
    %1699 = vmatpush1.msra.mxu0 %v1634
    %1700 = vmatprep.subr.mxu0 %v1639
    %1701 = vmatpush1.msra.mxu0 %v1638
    %1702 = vmatprep.subr.mxu0 %v1643
    %1703 = vmatpush1.msra.mxu0 %v1642
    %1704 = vmatprep.subr.mxu0 %v1647
    %1705 = vmatpush1.msra.mxu0 %v1646
    %1706 = vmatprep.subr.mxu0 %v1651
    %1707 = vmatpush1.msra.mxu0 %v1650
    %1708 = vmatprep.subr.mxu0 %v1655
    %1709 = vmatpush1.msra.mxu0 %v1654
    %1710 = vmatprep.subr.mxu0 %v1659
    %1711 = vmatpush1.msra.mxu0 %v1658
    %1712 = vmatprep.subr.mxu0 %v1663
    %1713 = vmatpush1.msra.mxu0 %v1662
    %1714 = vmatprep.subr.mxu0 %v1667
    %1715 = vmatpush1.msra.mxu0 %v1666
    %1716 = vmatprep.subr.mxu0 %v1671
    %1717 = vmatpush1.msra.mxu0 %v1670
    %1718 = vmatprep.subr.mxu0 %v1675
    %1719 = vmatpush1.msra.mxu0 %v1674
    %1720 = vmatprep.subr.mxu0 %v1679
    %1721 = vmatpush1.msra.mxu0 %v1678
    %1722 = vmatprep.subr.mxu0 %v1683
    %1723 = vmatpush1.msra.mxu0 %v1682
    %1724 = vmatprep.subr.mxu0 %v1687
    %1725 = vmatpush1.msra.mxu0 %v1686
    %1726 = vmatprep.subr.mxu0 %v1691
    %1727 = vmatpush1.msra.mxu0 %v1690
    %1728 = vmatprep.subr.mxu0 %v1695
    %1729 = vmatpush1.msra.mxu0 %v1694
    %1730 = vmatprep.subr.mxu0 0.0
    %1731 = vmatpush1.msra.mxu0 0.0
    %1732 = vmatprep.subr.mxu0 0.0
    %1733 = vmatpush1.msra.mxu0 0.0
    %1734 = vmatprep.subr.mxu0 0.0
    %1735 = vmatpush1.msra.mxu0 0.0
    %1736 = vmatprep.subr.mxu0 0.0
    %1737 = vmatpush1.msra.mxu0 0.0
    %1738 = vmatprep.subr.mxu0 0.0
    %1739 = vmatpush1.msra.mxu0 0.0
    %1740 = vmatprep.subr.mxu0 0.0
    %1741 = vmatpush1.msra.mxu0 0.0
    %1742 = vmatprep.subr.mxu0 0.0
    %1743 = vmatpush1.msra.mxu0 0.0
    %1744 = vmatprep.subr.mxu0 0.0
    %1745 = vmatpush1.msra.mxu0 0.0
    %1746 = vmatprep.subr.mxu0 0.0
    %1747 = vmatpush1.msra.mxu0 0.0
    %1748 = vmatprep.subr.mxu0 0.0
    %1749 = vmatpush1.msra.mxu0 0.0
    %1750 = vmatprep.subr.mxu0 0.0
    %1751 = vmatpush1.msra.mxu0 0.0
    %1752 = vmatprep.subr.mxu0 0.0
    %1753 = vmatpush1.msra.mxu0 0.0
    %1754 = vmatprep.subr.mxu0 0.0
    %1755 = vmatpush1.msra.mxu0 0.0
    %1756 = vmatprep.subr.mxu0 0.0
    %1757 = vmatpush1.msra.mxu0 0.0
    %1758 = vmatprep.subr.mxu0 0.0
    %1759 = vmatpush1.msra.mxu0 0.0
    %1760 = vmatprep.subr.mxu0 0.0
    %1761 = vmatpush1.msra.mxu0 0.0
    %1762 = vmatprep.mubr.f32.mxu0 0.0
    %1763 = vmatmul.mubr.f32.gmra.mrb[0].mxu0 %v1626
    %v1764 = vpop.f32.mrb[0].mxu0
    %v1765 = vadd.f32 0.0, %v1764
    %v1766 = vpop.f32.mrb[0].mxu0
    %v1767 = vadd.f32 0.0, %v1766
    %1768 = vdwg.mxu0
    %1769 = vmatprep.subr.mxu0 %v1637
    %1770 = vmatpush1.msra.mxu0 %v1636
    %1771 = vmatprep.subr.mxu0 %v1641
    %1772 = vmatpush1.msra.mxu0 %v1640
    %1773 = vmatprep.subr.mxu0 %v1645
    %1774 = vmatpush1.msra.mxu0 %v1644
    %1775 = vmatprep.subr.mxu0 %v1649
    %1776 = vmatpush1.msra.mxu0 %v1648
    %1777 = vmatprep.subr.mxu0 %v1653
    %1778 = vmatpush1.msra.mxu0 %v1652
    %1779 = vmatprep.subr.mxu0 %v1657
    %1780 = vmatpush1.msra.mxu0 %v1656
    %1781 = vmatprep.subr.mxu0 %v1661
    %1782 = vmatpush1.msra.mxu0 %v1660
    %1783 = vmatprep.subr.mxu0 %v1665
    %1784 = vmatpush1.msra.mxu0 %v1664
    %1785 = vmatprep.subr.mxu0 %v1669
    %1786 = vmatpush1.msra.mxu0 %v1668
    %1787 = vmatprep.subr.mxu0 %v1673
    %1788 = vmatpush1.msra.mxu0 %v1672
    %1789 = vmatprep.subr.mxu0 %v1677
    %1790 = vmatpush1.msra.mxu0 %v1676
    %1791 = vmatprep.subr.mxu0 %v1681
    %1792 = vmatpush1.msra.mxu0 %v1680
    %1793 = vmatprep.subr.mxu0 %v1685
    %1794 = vmatpush1.msra.mxu0 %v1684
    %1795 = vmatprep.subr.mxu0 %v1689
    %1796 = vmatpush1.msra.mxu0 %v1688
    %1797 = vmatprep.subr.mxu0 %v1693
    %1798 = vmatpush1.msra.mxu0 %v1692
    %1799 = vmatprep.subr.mxu0 %v1697
    %1800 = vmatpush1.msra.mxu0 %v1696
    %1801 = vmatprep.subr.mxu0 0.0
    %1802 = vmatpush1.msra.mxu0 0.0
    %1803 = vmatprep.subr.mxu0 0.0
    %1804 = vmatpush1.msra.mxu0 0.0
    %1805 = vmatprep.subr.mxu0 0.0
    %1806 = vmatpush1.msra.mxu0 0.0
    %1807 = vmatprep.subr.mxu0 0.0
    %1808 = vmatpush1.msra.mxu0 0.0
    %1809 = vmatprep.subr.mxu0 0.0
    %1810 = vmatpush1.msra.mxu0 0.0
    %1811 = vmatprep.subr.mxu0 0.0
    %1812 = vmatpush1.msra.mxu0 0.0
    %1813 = vmatprep.subr.mxu0 0.0
    %1814 = vmatpush1.msra.mxu0 0.0
    %1815 = vmatprep.subr.mxu0 0.0
    %1816 = vmatpush1.msra.mxu0 0.0
    %1817 = vmatprep.subr.mxu0 0.0
    %1818 = vmatpush1.msra.mxu0 0.0
    %1819 = vmatprep.subr.mxu0 0.0
    %1820 = vmatpush1.msra.mxu0 0.0
    %1821 = vmatprep.subr.mxu0 0.0
    %1822 = vmatpush1.msra.mxu0 0.0
    %1823 = vmatprep.subr.mxu0 0.0
    %1824 = vmatpush1.msra.mxu0 0.0
    %1825 = vmatprep.subr.mxu0 0.0
    %1826 = vmatpush1.msra.mxu0 0.0
    %1827 = vmatprep.subr.mxu0 0.0
    %1828 = vmatpush1.msra.mxu0 0.0
    %1829 = vmatprep.subr.mxu0 0.0
    %1830 = vmatpush1.msra.mxu0 0.0
    %1831 = vmatprep.subr.mxu0 0.0
    %1832 = vmatpush1.msra.mxu0 0.0
    %1833 = vmatprep.mubr.f32.mxu0 0.0
    %1834 = vmatmul.mubr.f32.gmra.mrb[0].mxu0 %v1626
    %v1835 = vpop.f32.mrb[0].mxu0
    %v1836 = vadd.f32 0.0, %v1835
    %v1837 = vpop.f32.mrb[0].mxu0
    %v1838 = vadd.f32 0.0, %v1837
    %1839 = vdwg.mxu0
    %v1840 = vadd.f32 %v1630, %v1765
    %v1841 = vadd.f32 %v1631, %v1767
    %v1842 = vadd.f32 %v1632, %v1836
    %v1843 = vadd.f32 %v1633, %v1838
    %v1844 = vxor.u32 %v1840, 2147483648
    %v1845 = vmul.f32 %v1844, 1.442695
    %v1846 = vpow.pop %v1845
    %v1847 = vadd.f32 %v1846, 1.0
    %v1848 = vrcp.pop %v1847
    %v1849 = vmul.f32 1.0, %v1848
    %v1850 = vxor.u32 %v1841, 2147483648
    %v1851 = vmul.f32 %v1850, 1.442695
    %v1852 = vpow.pop %v1851
    %v1853 = vadd.f32 %v1852, 1.0
    %v1854 = vrcp.pop %v1853
    %v1855 = vmul.f32 1.0, %v1854
    %v1856 = vtanh.pop %v1842
    %v1857 = vxor.u32 %v1843, 2147483648
    %v1858 = vmul.f32 %v1857, 1.442695
    %v1859 = vpow.pop %v1858
    %v1860 = vadd.f32 %v1859, 1.0
    %v1861 = vrcp.pop %v1860
    %v1862 = vmul.f32 1.0, %v1861
    %v1863 = vmul.f32 %v1855, %v1624
    %v1864 = vmul.f32 %v1849, %v1856
    %v1865 = vadd.f32 %v1863, %v1864
    %v1866 = vtanh.pop %v1865
    %v1867 = vmul.f32 %v1862, %v1866
    %s1868 = scalar_lea.vmem [#allocation3], 40
    %1869 = vst [vmem:[%s1868] sm:$0xff] %v1867
    %s1870 = scalar_lea.vmem [#allocation2], 192
    %v1871 = vld [vmem:[%s1870] sm:$0xff]
    %v1872 = vld [vmem:[%s1870 + $0x8] sm:$0xff]
    %v1873 = vld [vmem:[%s1870 + $0x10] sm:$0xff]
    %v1874 = vld [vmem:[%s1870 + $0x18] sm:$0xff]
    %v1875 = vld [vmem:[%s8] sm:$0xff]
    %v1876 = vld [vmem:[%s8 + $0x8] sm:$0xff]
    %v1877 = vld [vmem:[%s8 + $0x10] sm:$0xff]
    %v1878 = vld [vmem:[%s8 + $0x18] sm:$0xff]
    %v1879 = vld [vmem:[%s8 + $0x20] sm:$0xff]
    %v1880 = vld [vmem:[%s8 + $0x28] sm:$0xff]
    %v1881 = vld [vmem:[%s8 + $0x30] sm:$0xff]
    %v1882 = vld [vmem:[%s8 + $0x38] sm:$0xff]
    %v1883 = vld [vmem:[%s8 + $0x40] sm:$0xff]
    %v1884 = vld [vmem:[%s8 + $0x48] sm:$0xff]
    %v1885 = vld [vmem:[%s8 + $0x50] sm:$0xff]
    %v1886 = vld [vmem:[%s8 + $0x58] sm:$0xff]
    %v1887 = vld [vmem:[%s8 + $0x60] sm:$0xff]
    %v1888 = vld [vmem:[%s8 + $0x68] sm:$0xff]
    %v1889 = vld [vmem:[%s8 + $0x70] sm:$0xff]
    %v1890 = vld [vmem:[%s8 + $0x78] sm:$0xff]
    %v1891 = vld [vmem:[%s8 + $0x80] sm:$0xff]
    %v1892 = vld [vmem:[%s8 + $0x88] sm:$0xff]
    %v1893 = vld [vmem:[%s8 + $0x90] sm:$0xff]
    %v1894 = vld [vmem:[%s8 + $0x98] sm:$0xff]
    %v1895 = vld [vmem:[%s8 + $0xa0] sm:$0xff]
    %v1896 = vld [vmem:[%s8 + $0xa8] sm:$0xff]
    %v1897 = vld [vmem:[%s8 + $0xb0] sm:$0xff]
    %v1898 = vld [vmem:[%s8 + $0xb8] sm:$0xff]
    %v1899 = vld [vmem:[%s8 + $0xc0] sm:$0xff]
    %v1900 = vld [vmem:[%s8 + $0xc8] sm:$0xff]
    %v1901 = vld [vmem:[%s8 + $0xd0] sm:$0xff]
    %v1902 = vld [vmem:[%s8 + $0xd8] sm:$0xff]
    %v1903 = vld [vmem:[%s8 + $0xe0] sm:$0xff]
    %v1904 = vld [vmem:[%s8 + $0xe8] sm:$0xff]
    %v1905 = vld [vmem:[%s8 + $0xf0] sm:$0xff]
    %v1906 = vld [vmem:[%s8 + $0xf8] sm:$0xff]
    %v1907 = vld [vmem:[%s8 + $0x100] sm:$0xff]
    %v1908 = vld [vmem:[%s8 + $0x108] sm:$0xff]
    %v1909 = vld [vmem:[%s8 + $0x110] sm:$0xff]
    %v1910 = vld [vmem:[%s8 + $0x118] sm:$0xff]
    %v1911 = vld [vmem:[%s8 + $0x120] sm:$0xff]
    %v1912 = vld [vmem:[%s8 + $0x128] sm:$0xff]
    %v1913 = vld [vmem:[%s8 + $0x130] sm:$0xff]
    %v1914 = vld [vmem:[%s8 + $0x138] sm:$0xff]
    %v1915 = vld [vmem:[%s8 + $0x140] sm:$0xff]
    %v1916 = vld [vmem:[%s8 + $0x148] sm:$0xff]
    %v1917 = vld [vmem:[%s8 + $0x150] sm:$0xff]
    %v1918 = vld [vmem:[%s8 + $0x158] sm:$0xff]
    %v1919 = vld [vmem:[%s8 + $0x160] sm:$0xff]
    %v1920 = vld [vmem:[%s8 + $0x168] sm:$0xff]
    %v1921 = vld [vmem:[%s8 + $0x170] sm:$0xff]
    %v1922 = vld [vmem:[%s8 + $0x178] sm:$0xff]
    %v1923 = vld [vmem:[%s8 + $0x180] sm:$0xff]
    %v1924 = vld [vmem:[%s8 + $0x188] sm:$0xff]
    %v1925 = vld [vmem:[%s8 + $0x190] sm:$0xff]
    %v1926 = vld [vmem:[%s8 + $0x198] sm:$0xff]
    %v1927 = vld [vmem:[%s8 + $0x1a0] sm:$0xff]
    %v1928 = vld [vmem:[%s8 + $0x1a8] sm:$0xff]
    %v1929 = vld [vmem:[%s8 + $0x1b0] sm:$0xff]
    %v1930 = vld [vmem:[%s8 + $0x1b8] sm:$0xff]
    %v1931 = vld [vmem:[%s8 + $0x1c0] sm:$0xff]
    %v1932 = vld [vmem:[%s8 + $0x1c8] sm:$0xff]
    %v1933 = vld [vmem:[%s8 + $0x1d0] sm:$0xff]
    %v1934 = vld [vmem:[%s8 + $0x1d8] sm:$0xff]
    %v1935 = vld [vmem:[%s8 + $0x1e0] sm:$0xff]
    %v1936 = vld [vmem:[%s8 + $0x1e8] sm:$0xff]
    %v1937 = vld [vmem:[%s8 + $0x1f0] sm:$0xff]
    %v1938 = vld [vmem:[%s8 + $0x1f8] sm:$0xff]
    %1939 = vmatprep.subr.mxu0 %v1876
    %1940 = vmatpush1.msra.mxu0 %v1875
    %1941 = vmatprep.subr.mxu0 %v1880
    %1942 = vmatpush1.msra.mxu0 %v1879
    %1943 = vmatprep.subr.mxu0 %v1884
    %1944 = vmatpush1.msra.mxu0 %v1883
    %1945 = vmatprep.subr.mxu0 %v1888
    %1946 = vmatpush1.msra.mxu0 %v1887
    %1947 = vmatprep.subr.mxu0 %v1892
    %1948 = vmatpush1.msra.mxu0 %v1891
    %1949 = vmatprep.subr.mxu0 %v1896
    %1950 = vmatpush1.msra.mxu0 %v1895
    %1951 = vmatprep.subr.mxu0 %v1900
    %1952 = vmatpush1.msra.mxu0 %v1899
    %1953 = vmatprep.subr.mxu0 %v1904
    %1954 = vmatpush1.msra.mxu0 %v1903
    %1955 = vmatprep.subr.mxu0 %v1908
    %1956 = vmatpush1.msra.mxu0 %v1907
    %1957 = vmatprep.subr.mxu0 %v1912
    %1958 = vmatpush1.msra.mxu0 %v1911
    %1959 = vmatprep.subr.mxu0 %v1916
    %1960 = vmatpush1.msra.mxu0 %v1915
    %1961 = vmatprep.subr.mxu0 %v1920
    %1962 = vmatpush1.msra.mxu0 %v1919
    %1963 = vmatprep.subr.mxu0 %v1924
    %1964 = vmatpush1.msra.mxu0 %v1923
    %1965 = vmatprep.subr.mxu0 %v1928
    %1966 = vmatpush1.msra.mxu0 %v1927
    %1967 = vmatprep.subr.mxu0 %v1932
    %1968 = vmatpush1.msra.mxu0 %v1931
    %1969 = vmatprep.subr.mxu0 %v1936
    %1970 = vmatpush1.msra.mxu0 %v1935
    %1971 = vmatprep.subr.mxu0 0.0
    %1972 = vmatpush1.msra.mxu0 0.0
    %1973 = vmatprep.subr.mxu0 0.0
    %1974 = vmatpush1.msra.mxu0 0.0
    %1975 = vmatprep.subr.mxu0 0.0
    %1976 = vmatpush1.msra.mxu0 0.0
    %1977 = vmatprep.subr.mxu0 0.0
    %1978 = vmatpush1.msra.mxu0 0.0
    %1979 = vmatprep.subr.mxu0 0.0
    %1980 = vmatpush1.msra.mxu0 0.0
    %1981 = vmatprep.subr.mxu0 0.0
    %1982 = vmatpush1.msra.mxu0 0.0
    %1983 = vmatprep.subr.mxu0 0.0
    %1984 = vmatpush1.msra.mxu0 0.0
    %1985 = vmatprep.subr.mxu0 0.0
    %1986 = vmatpush1.msra.mxu0 0.0
    %1987 = vmatprep.subr.mxu0 0.0
    %1988 = vmatpush1.msra.mxu0 0.0
    %1989 = vmatprep.subr.mxu0 0.0
    %1990 = vmatpush1.msra.mxu0 0.0
    %1991 = vmatprep.subr.mxu0 0.0
    %1992 = vmatpush1.msra.mxu0 0.0
    %1993 = vmatprep.subr.mxu0 0.0
    %1994 = vmatpush1.msra.mxu0 0.0
    %1995 = vmatprep.subr.mxu0 0.0
    %1996 = vmatpush1.msra.mxu0 0.0
    %1997 = vmatprep.subr.mxu0 0.0
    %1998 = vmatpush1.msra.mxu0 0.0
    %1999 = vmatprep.subr.mxu0 0.0
    %2000 = vmatpush1.msra.mxu0 0.0
    %2001 = vmatprep.subr.mxu0 0.0
    %2002 = vmatpush1.msra.mxu0 0.0
    %2003 = vmatprep.mubr.f32.mxu0 0.0
    %2004 = vmatmul.mubr.f32.gmra.mrb[0].mxu0 %v1867
    %v2005 = vpop.f32.mrb[0].mxu0
    %v2006 = vadd.f32 0.0, %v2005
    %v2007 = vpop.f32.mrb[0].mxu0
    %v2008 = vadd.f32 0.0, %v2007
    %2009 = vdwg.mxu0
    %2010 = vmatprep.subr.mxu0 %v1878
    %2011 = vmatpush1.msra.mxu0 %v1877
    %2012 = vmatprep.subr.mxu0 %v1882
    %2013 = vmatpush1.msra.mxu0 %v1881
    %2014 = vmatprep.subr.mxu0 %v1886
    %2015 = vmatpush1.msra.mxu0 %v1885
    %2016 = vmatprep.subr.mxu0 %v1890
    %2017 = vmatpush1.msra.mxu0 %v1889
    %2018 = vmatprep.subr.mxu0 %v1894
    %2019 = vmatpush1.msra.mxu0 %v1893
    %2020 = vmatprep.subr.mxu0 %v1898
    %2021 = vmatpush1.msra.mxu0 %v1897
    %2022 = vmatprep.subr.mxu0 %v1902
    %2023 = vmatpush1.msra.mxu0 %v1901
    %2024 = vmatprep.subr.mxu0 %v1906
    %2025 = vmatpush1.msra.mxu0 %v1905
    %2026 = vmatprep.subr.mxu0 %v1910
    %2027 = vmatpush1.msra.mxu0 %v1909
    %2028 = vmatprep.subr.mxu0 %v1914
    %2029 = vmatpush1.msra.mxu0 %v1913
    %2030 = vmatprep.subr.mxu0 %v1918
    %2031 = vmatpush1.msra.mxu0 %v1917
    %2032 = vmatprep.subr.mxu0 %v1922
    %2033 = vmatpush1.msra.mxu0 %v1921
    %2034 = vmatprep.subr.mxu0 %v1926
    %2035 = vmatpush1.msra.mxu0 %v1925
    %2036 = vmatprep.subr.mxu0 %v1930
    %2037 = vmatpush1.msra.mxu0 %v1929
    %2038 = vmatprep.subr.mxu0 %v1934
    %2039 = vmatpush1.msra.mxu0 %v1933
    %2040 = vmatprep.subr.mxu0 %v1938
    %2041 = vmatpush1.msra.mxu0 %v1937
    %2042 = vmatprep.subr.mxu0 0.0
    %2043 = vmatpush1.msra.mxu0 0.0
    %2044 = vmatprep.subr.mxu0 0.0
    %2045 = vmatpush1.msra.mxu0 0.0
    %2046 = vmatprep.subr.mxu0 0.0
    %2047 = vmatpush1.msra.mxu0 0.0
    %2048 = vmatprep.subr.mxu0 0.0
    %2049 = vmatpush1.msra.mxu0 0.0
    %2050 = vmatprep.subr.mxu0 0.0
    %2051 = vmatpush1.msra.mxu0 0.0
    %2052 = vmatprep.subr.mxu0 0.0
    %2053 = vmatpush1.msra.mxu0 0.0
    %2054 = vmatprep.subr.mxu0 0.0
    %2055 = vmatpush1.msra.mxu0 0.0
    %2056 = vmatprep.subr.mxu0 0.0
    %2057 = vmatpush1.msra.mxu0 0.0
    %2058 = vmatprep.subr.mxu0 0.0
    %2059 = vmatpush1.msra.mxu0 0.0
    %2060 = vmatprep.subr.mxu0 0.0
    %2061 = vmatpush1.msra.mxu0 0.0
    %2062 = vmatprep.subr.mxu0 0.0
    %2063 = vmatpush1.msra.mxu0 0.0
    %2064 = vmatprep.subr.mxu0 0.0
    %2065 = vmatpush1.msra.mxu0 0.0
    %2066 = vmatprep.subr.mxu0 0.0
    %2067 = vmatpush1.msra.mxu0 0.0
    %2068 = vmatprep.subr.mxu0 0.0
    %2069 = vmatpush1.msra.mxu0 0.0
    %2070 = vmatprep.subr.mxu0 0.0
    %2071 = vmatpush1.msra.mxu0 0.0
    %2072 = vmatprep.subr.mxu0 0.0
    %2073 = vmatpush1.msra.mxu0 0.0
    %2074 = vmatprep.mubr.f32.mxu0 0.0
    %2075 = vmatmul.mubr.f32.gmra.mrb[0].mxu0 %v1867
    %v2076 = vpop.f32.mrb[0].mxu0
    %v2077 = vadd.f32 0.0, %v2076
    %v2078 = vpop.f32.mrb[0].mxu0
    %v2079 = vadd.f32 0.0, %v2078
    %2080 = vdwg.mxu0
    %v2081 = vadd.f32 %v1871, %v2006
    %v2082 = vadd.f32 %v1872, %v2008
    %v2083 = vadd.f32 %v1873, %v2077
    %v2084 = vadd.f32 %v1874, %v2079
    %v2085 = vxor.u32 %v2081, 2147483648
    %v2086 = vmul.f32 %v2085, 1.442695
    %v2087 = vpow.pop %v2086
    %v2088 = vadd.f32 %v2087, 1.0
    %v2089 = vrcp.pop %v2088
    %v2090 = vmul.f32 1.0, %v2089
    %v2091 = vxor.u32 %v2082, 2147483648
    %v2092 = vmul.f32 %v2091, 1.442695
    %v2093 = vpow.pop %v2092
    %v2094 = vadd.f32 %v2093, 1.0
    %v2095 = vrcp.pop %v2094
    %v2096 = vmul.f32 1.0, %v2095
    %v2097 = vtanh.pop %v2083
    %v2098 = vxor.u32 %v2084, 2147483648
    %v2099 = vmul.f32 %v2098, 1.442695
    %v2100 = vpow.pop %v2099
    %v2101 = vadd.f32 %v2100, 1.0
    %v2102 = vrcp.pop %v2101
    %v2103 = vmul.f32 1.0, %v2102
    %v2104 = vmul.f32 %v2096, %v1865
    %v2105 = vmul.f32 %v2090, %v2097
    %v2106 = vadd.f32 %v2104, %v2105
    %v2107 = vtanh.pop %v2106
    %v2108 = vmul.f32 %v2103, %v2107
    %s2109 = scalar_lea.vmem [#allocation3], 48
    %2110 = vst [vmem:[%s2109] sm:$0xff] %v2108
    %s2111 = scalar_lea.vmem [#allocation2], 224
    %v2112 = vld [vmem:[%s2111] sm:$0xff]
    %v2113 = vld [vmem:[%s2111 + $0x8] sm:$0xff]
    %v2114 = vld [vmem:[%s2111 + $0x10] sm:$0xff]
    %v2115 = vld [vmem:[%s2111 + $0x18] sm:$0xff]
    %v2116 = vld [vmem:[%s8] sm:$0xff]
    %v2117 = vld [vmem:[%s8 + $0x8] sm:$0xff]
    %v2118 = vld [vmem:[%s8 + $0x10] sm:$0xff]
    %v2119 = vld [vmem:[%s8 + $0x18] sm:$0xff]
    %v2120 = vld [vmem:[%s8 + $0x20] sm:$0xff]
    %v2121 = vld [vmem:[%s8 + $0x28] sm:$0xff]
    %v2122 = vld [vmem:[%s8 + $0x30] sm:$0xff]
    %v2123 = vld [vmem:[%s8 + $0x38] sm:$0xff]
    %v2124 = vld [vmem:[%s8 + $0x40] sm:$0xff]
    %v2125 = vld [vmem:[%s8 + $0x48] sm:$0xff]
    %v2126 = vld [vmem:[%s8 + $0x50] sm:$0xff]
    %v2127 = vld [vmem:[%s8 + $0x58] sm:$0xff]
    %v2128 = vld [vmem:[%s8 + $0x60] sm:$0xff]
    %v2129 = vld [vmem:[%s8 + $0x68] sm:$0xff]
    %v2130 = vld [vmem:[%s8 + $0x70] sm:$0xff]
    %v2131 = vld [vmem:[%s8 + $0x78] sm:$0xff]
    %v2132 = vld [vmem:[%s8 + $0x80] sm:$0xff]
    %v2133 = vld [vmem:[%s8 + $0x88] sm:$0xff]
    %v2134 = vld [vmem:[%s8 + $0x90] sm:$0xff]
    %v2135 = vld [vmem:[%s8 + $0x98] sm:$0xff]
    %v2136 = vld [vmem:[%s8 + $0xa0] sm:$0xff]
    %v2137 = vld [vmem:[%s8 + $0xa8] sm:$0xff]
    %v2138 = vld [vmem:[%s8 + $0xb0] sm:$0xff]
    %v2139 = vld [vmem:[%s8 + $0xb8] sm:$0xff]
    %v2140 = vld [vmem:[%s8 + $0xc0] sm:$0xff]
    %v2141 = vld [vmem:[%s8 + $0xc8] sm:$0xff]
    %v2142 = vld [vmem:[%s8 + $0xd0] sm:$0xff]
    %v2143 = vld [vmem:[%s8 + $0xd8] sm:$0xff]
    %v2144 = vld [vmem:[%s8 + $0xe0] sm:$0xff]
    %v2145 = vld [vmem:[%s8 + $0xe8] sm:$0xff]
    %v2146 = vld [vmem:[%s8 + $0xf0] sm:$0xff]
    %v2147 = vld [vmem:[%s8 + $0xf8] sm:$0xff]
    %v2148 = vld [vmem:[%s8 + $0x100] sm:$0xff]
    %v2149 = vld [vmem:[%s8 + $0x108] sm:$0xff]
    %v2150 = vld [vmem:[%s8 + $0x110] sm:$0xff]
    %v2151 = vld [vmem:[%s8 + $0x118] sm:$0xff]
    %v2152 = vld [vmem:[%s8 + $0x120] sm:$0xff]
    %v2153 = vld [vmem:[%s8 + $0x128] sm:$0xff]
    %v2154 = vld [vmem:[%s8 + $0x130] sm:$0xff]
    %v2155 = vld [vmem:[%s8 + $0x138] sm:$0xff]
    %v2156 = vld [vmem:[%s8 + $0x140] sm:$0xff]
    %v2157 = vld [vmem:[%s8 + $0x148] sm:$0xff]
    %v2158 = vld [vmem:[%s8 + $0x150] sm:$0xff]
    %v2159 = vld [vmem:[%s8 + $0x158] sm:$0xff]
    %v2160 = vld [vmem:[%s8 + $0x160] sm:$0xff]
    %v2161 = vld [vmem:[%s8 + $0x168] sm:$0xff]
    %v2162 = vld [vmem:[%s8 + $0x170] sm:$0xff]
    %v2163 = vld [vmem:[%s8 + $0x178] sm:$0xff]
    %v2164 = vld [vmem:[%s8 + $0x180] sm:$0xff]
    %v2165 = vld [vmem:[%s8 + $0x188] sm:$0xff]
    %v2166 = vld [vmem:[%s8 + $0x190] sm:$0xff]
    %v2167 = vld [vmem:[%s8 + $0x198] sm:$0xff]
    %v2168 = vld [vmem:[%s8 + $0x1a0] sm:$0xff]
    %v2169 = vld [vmem:[%s8 + $0x1a8] sm:$0xff]
    %v2170 = vld [vmem:[%s8 + $0x1b0] sm:$0xff]
    %v2171 = vld [vmem:[%s8 + $0x1b8] sm:$0xff]
    %v2172 = vld [vmem:[%s8 + $0x1c0] sm:$0xff]
    %v2173 = vld [vmem:[%s8 + $0x1c8] sm:$0xff]
    %v2174 = vld [vmem:[%s8 + $0x1d0] sm:$0xff]
    %v2175 = vld [vmem:[%s8 + $0x1d8] sm:$0xff]
    %v2176 = vld [vmem:[%s8 + $0x1e0] sm:$0xff]
    %v2177 = vld [vmem:[%s8 + $0x1e8] sm:$0xff]
    %v2178 = vld [vmem:[%s8 + $0x1f0] sm:$0xff]
    %v2179 = vld [vmem:[%s8 + $0x1f8] sm:$0xff]
    %2180 = vmatprep.subr.mxu0 %v2117
    %2181 = vmatpush1.msra.mxu0 %v2116
    %2182 = vmatprep.subr.mxu0 %v2121
    %2183 = vmatpush1.msra.mxu0 %v2120
    %2184 = vmatprep.subr.mxu0 %v2125
    %2185 = vmatpush1.msra.mxu0 %v2124
    %2186 = vmatprep.subr.mxu0 %v2129
    %2187 = vmatpush1.msra.mxu0 %v2128
    %2188 = vmatprep.subr.mxu0 %v2133
    %2189 = vmatpush1.msra.mxu0 %v2132
    %2190 = vmatprep.subr.mxu0 %v2137
    %2191 = vmatpush1.msra.mxu0 %v2136
    %2192 = vmatprep.subr.mxu0 %v2141
    %2193 = vmatpush1.msra.mxu0 %v2140
    %2194 = vmatprep.subr.mxu0 %v2145
    %2195 = vmatpush1.msra.mxu0 %v2144
    %2196 = vmatprep.subr.mxu0 %v2149
    %2197 = vmatpush1.msra.mxu0 %v2148
    %2198 = vmatprep.subr.mxu0 %v2153
    %2199 = vmatpush1.msra.mxu0 %v2152
    %2200 = vmatprep.subr.mxu0 %v2157
    %2201 = vmatpush1.msra.mxu0 %v2156
    %2202 = vmatprep.subr.mxu0 %v2161
    %2203 = vmatpush1.msra.mxu0 %v2160
    %2204 = vmatprep.subr.mxu0 %v2165
    %2205 = vmatpush1.msra.mxu0 %v2164
    %2206 = vmatprep.subr.mxu0 %v2169
    %2207 = vmatpush1.msra.mxu0 %v2168
    %2208 = vmatprep.subr.mxu0 %v2173
    %2209 = vmatpush1.msra.mxu0 %v2172
    %2210 = vmatprep.subr.mxu0 %v2177
    %2211 = vmatpush1.msra.mxu0 %v2176
    %2212 = vmatprep.subr.mxu0 0.0
    %2213 = vmatpush1.msra.mxu0 0.0
    %2214 = vmatprep.subr.mxu0 0.0
    %2215 = vmatpush1.msra.mxu0 0.0
    %2216 = vmatprep.subr.mxu0 0.0
    %2217 = vmatpush1.msra.mxu0 0.0
    %2218 = vmatprep.subr.mxu0 0.0
    %2219 = vmatpush1.msra.mxu0 0.0
    %2220 = vmatprep.subr.mxu0 0.0
    %2221 = vmatpush1.msra.mxu0 0.0
    %2222 = vmatprep.subr.mxu0 0.0
    %2223 = vmatpush1.msra.mxu0 0.0
    %2224 = vmatprep.subr.mxu0 0.0
    %2225 = vmatpush1.msra.mxu0 0.0
    %2226 = vmatprep.subr.mxu0 0.0
    %2227 = vmatpush1.msra.mxu0 0.0
    %2228 = vmatprep.subr.mxu0 0.0
    %2229 = vmatpush1.msra.mxu0 0.0
    %2230 = vmatprep.subr.mxu0 0.0
    %2231 = vmatpush1.msra.mxu0 0.0
    %2232 = vmatprep.subr.mxu0 0.0
    %2233 = vmatpush1.msra.mxu0 0.0
    %2234 = vmatprep.subr.mxu0 0.0
    %2235 = vmatpush1.msra.mxu0 0.0
    %2236 = vmatprep.subr.mxu0 0.0
    %2237 = vmatpush1.msra.mxu0 0.0
    %2238 = vmatprep.subr.mxu0 0.0
    %2239 = vmatpush1.msra.mxu0 0.0
    %2240 = vmatprep.subr.mxu0 0.0
    %2241 = vmatpush1.msra.mxu0 0.0
    %2242 = vmatprep.subr.mxu0 0.0
    %2243 = vmatpush1.msra.mxu0 0.0
    %2244 = vmatprep.mubr.f32.mxu0 0.0
    %2245 = vmatmul.mubr.f32.gmra.mrb[0].mxu0 %v2108
    %v2246 = vpop.f32.mrb[0].mxu0
    %v2247 = vadd.f32 0.0, %v2246
    %v2248 = vpop.f32.mrb[0].mxu0
    %v2249 = vadd.f32 0.0, %v2248
    %2250 = vdwg.mxu0
    %2251 = vmatprep.subr.mxu0 %v2119
    %2252 = vmatpush1.msra.mxu0 %v2118
    %2253 = vmatprep.subr.mxu0 %v2123
    %2254 = vmatpush1.msra.mxu0 %v2122
    %2255 = vmatprep.subr.mxu0 %v2127
    %2256 = vmatpush1.msra.mxu0 %v2126
    %2257 = vmatprep.subr.mxu0 %v2131
    %2258 = vmatpush1.msra.mxu0 %v2130
    %2259 = vmatprep.subr.mxu0 %v2135
    %2260 = vmatpush1.msra.mxu0 %v2134
    %2261 = vmatprep.subr.mxu0 %v2139
    %2262 = vmatpush1.msra.mxu0 %v2138
    %2263 = vmatprep.subr.mxu0 %v2143
    %2264 = vmatpush1.msra.mxu0 %v2142
    %2265 = vmatprep.subr.mxu0 %v2147
    %2266 = vmatpush1.msra.mxu0 %v2146
    %2267 = vmatprep.subr.mxu0 %v2151
    %2268 = vmatpush1.msra.mxu0 %v2150
    %2269 = vmatprep.subr.mxu0 %v2155
    %2270 = vmatpush1.msra.mxu0 %v2154
    %2271 = vmatprep.subr.mxu0 %v2159
    %2272 = vmatpush1.msra.mxu0 %v2158
    %2273 = vmatprep.subr.mxu0 %v2163
    %2274 = vmatpush1.msra.mxu0 %v2162
    %2275 = vmatprep.subr.mxu0 %v2167
    %2276 = vmatpush1.msra.mxu0 %v2166
    %2277 = vmatprep.subr.mxu0 %v2171
    %2278 = vmatpush1.msra.mxu0 %v2170
    %2279 = vmatprep.subr.mxu0 %v2175
    %2280 = vmatpush1.msra.mxu0 %v2174
    %2281 = vmatprep.subr.mxu0 %v2179
    %2282 = vmatpush1.msra.mxu0 %v2178
    %2283 = vmatprep.subr.mxu0 0.0
    %2284 = vmatpush1.msra.mxu0 0.0
    %2285 = vmatprep.subr.mxu0 0.0
    %2286 = vmatpush1.msra.mxu0 0.0
    %2287 = vmatprep.subr.mxu0 0.0
    %2288 = vmatpush1.msra.mxu0 0.0
    %2289 = vmatprep.subr.mxu0 0.0
    %2290 = vmatpush1.msra.mxu0 0.0
    %2291 = vmatprep.subr.mxu0 0.0
    %2292 = vmatpush1.msra.mxu0 0.0
    %2293 = vmatprep.subr.mxu0 0.0
    %2294 = vmatpush1.msra.mxu0 0.0
    %2295 = vmatprep.subr.mxu0 0.0
    %2296 = vmatpush1.msra.mxu0 0.0
    %2297 = vmatprep.subr.mxu0 0.0
    %2298 = vmatpush1.msra.mxu0 0.0
    %2299 = vmatprep.subr.mxu0 0.0
    %2300 = vmatpush1.msra.mxu0 0.0
    %2301 = vmatprep.subr.mxu0 0.0
    %2302 = vmatpush1.msra.mxu0 0.0
    %2303 = vmatprep.subr.mxu0 0.0
    %2304 = vmatpush1.msra.mxu0 0.0
    %2305 = vmatprep.subr.mxu0 0.0
    %2306 = vmatpush1.msra.mxu0 0.0
    %2307 = vmatprep.subr.mxu0 0.0
    %2308 = vmatpush1.msra.mxu0 0.0
    %2309 = vmatprep.subr.mxu0 0.0
    %2310 = vmatpush1.msra.mxu0 0.0
    %2311 = vmatprep.subr.mxu0 0.0
    %2312 = vmatpush1.msra.mxu0 0.0
    %2313 = vmatprep.subr.mxu0 0.0
    %2314 = vmatpush1.msra.mxu0 0.0
    %2315 = vmatprep.mubr.f32.mxu0 0.0
    %2316 = vmatmul.mubr.f32.gmra.mrb[0].mxu0 %v2108
    %v2317 = vpop.f32.mrb[0].mxu0
    %v2318 = vadd.f32 0.0, %v2317
    %v2319 = vpop.f32.mrb[0].mxu0
    %v2320 = vadd.f32 0.0, %v2319
    %2321 = vdwg.mxu0
    %v2322 = vadd.f32 %v2112, %v2247
    %v2323 = vadd.f32 %v2113, %v2249
    %v2324 = vadd.f32 %v2114, %v2318
    %v2325 = vadd.f32 %v2115, %v2320
    %v2326 = vxor.u32 %v2322, 2147483648
    %v2327 = vmul.f32 %v2326, 1.442695
    %v2328 = vpow.pop %v2327
    %v2329 = vadd.f32 %v2328, 1.0
    %v2330 = vrcp.pop %v2329
    %v2331 = vmul.f32 1.0, %v2330
    %v2332 = vxor.u32 %v2323, 2147483648
    %v2333 = vmul.f32 %v2332, 1.442695
    %v2334 = vpow.pop %v2333
    %v2335 = vadd.f32 %v2334, 1.0
    %v2336 = vrcp.pop %v2335
    %v2337 = vmul.f32 1.0, %v2336
    %v2338 = vtanh.pop %v2324
    %v2339 = vxor.u32 %v2325, 2147483648
    %v2340 = vmul.f32 %v2339, 1.442695
    %v2341 = vpow.pop %v2340
    %v2342 = vadd.f32 %v2341, 1.0
    %v2343 = vrcp.pop %v2342
    %v2344 = vmul.f32 1.0, %v2343
    %v2345 = vmul.f32 %v2337, %v2106
    %v2346 = vmul.f32 %v2331, %v2338
    %v2347 = vadd.f32 %v2345, %v2346
    %v2348 = vtanh.pop %v2347
    %v2349 = vmul.f32 %v2344, %v2348
    %s2350 = scalar_lea.vmem [#allocation3], 56
    %2351 = vst [vmem:[%s2350] sm:$0xff] %v2349
    %v2352 = vld [vmem:[%s5] sm:$0xff]
    %vm2353 = vcmp.gt.s32.totalorder %v2352, 0
    %vm2354 = vcmp.gt.s32.totalorder %v2352, 1
    %vm2355 = vcmp.gt.s32.totalorder %v2352, 2
    %vm2356 = vcmp.gt.s32.totalorder %v2352, 3
    %vm2357 = vcmp.gt.s32.totalorder %v2352, 4
    %vm2358 = vcmp.gt.s32.totalorder %v2352, 5
    %vm2359 = vcmp.gt.s32.totalorder %v2352, 6
    %vm2360 = vcmp.gt.s32.totalorder %v2352, 7
    %v2361 = vld [vmem:[#allocation3] sm:$0xff]
    %v2362 = vld [vmem:[#allocation3 + $0x8] sm:$0xff]
    %v2363 = vld [vmem:[#allocation3 + $0x10] sm:$0xff]
    %v2364 = vld [vmem:[#allocation3 + $0x18] sm:$0xff]
    %v2365 = vld [vmem:[#allocation3 + $0x20] sm:$0xff]
    %v2366 = vld [vmem:[#allocation3 + $0x28] sm:$0xff]
    %v2367 = vld [vmem:[#allocation3 + $0x30] sm:$0xff]
    %v2368 = vld [vmem:[#allocation3 + $0x38] sm:$0xff]
    %v2369 = vsel %vm2353, 1, 0
    %v2370 = vsel %vm2354, 1, 0
    %v2371 = vsel %vm2355, 1, 0
    %v2372 = vsel %vm2356, 1, 0
    %v2373 = vsel %vm2357, 1, 0
    %v2374 = vsel %vm2358, 1, 0
    %v2375 = vsel %vm2359, 1, 0
    %v2376 = vsel %vm2360, 1, 0
    %2377 = vset.pattern.permute.xlu0 0
    %2378 = vperm.xlu0 %2377, %v2369
    %v2379 = vpop.permute.xlu0 %2378
    %2380 = vset.pattern.permute.xlu0 0
    %2381 = vperm.xlu0 %2380, %v2370
    %v2382 = vpop.permute.xlu0 %2381
    %2383 = vset.pattern.permute.xlu0 0
    %2384 = vperm.xlu0 %2383, %v2371
    %v2385 = vpop.permute.xlu0 %2384
    %2386 = vset.pattern.permute.xlu0 0
    %2387 = vperm.xlu0 %2386, %v2372
    %v2388 = vpop.permute.xlu0 %2387
    %2389 = vset.pattern.permute.xlu0 0
    %2390 = vperm.xlu0 %2389, %v2373
    %v2391 = vpop.permute.xlu0 %2390
    %2392 = vset.pattern.permute.xlu0 0
    %2393 = vperm.xlu0 %2392, %v2374
    %v2394 = vpop.permute.xlu0 %2393
    %2395 = vset.pattern.permute.xlu0 0
    %2396 = vperm.xlu0 %2395, %v2375
    %v2397 = vpop.permute.xlu0 %2396
    %2398 = vset.pattern.permute.xlu0 0
    %2399 = vperm.xlu0 %2398, %v2376
    %v2400 = vpop.permute.xlu0 %2399
    %vm2401 = vcmp.eq.s32.totalorder %v2379, 1
    %vm2402 = vcmp.eq.s32.totalorder %v2382, 1
    %vm2403 = vcmp.eq.s32.totalorder %v2385, 1
    %vm2404 = vcmp.eq.s32.totalorder %v2388, 1
    %vm2405 = vcmp.eq.s32.totalorder %v2391, 1
    %vm2406 = vcmp.eq.s32.totalorder %v2394, 1
    %vm2407 = vcmp.eq.s32.totalorder %v2397, 1
    %vm2408 = vcmp.eq.s32.totalorder %v2400, 1
    %v2409 = vsel %vm2401, %v2361, 0.0
    %v2410 = vsel %vm2402, %v2362, 0.0
    %v2411 = vsel %vm2403, %v2363, 0.0
    %v2412 = vsel %vm2404, %v2364, 0.0
    %v2413 = vsel %vm2405, %v2365, 0.0
    %v2414 = vsel %vm2406, %v2366, 0.0
    %v2415 = vsel %vm2407, %v2367, 0.0
    %v2416 = vsel %vm2408, %v2368, 0.0
    %v2417 = vld [vmem:[%s3] sm:$0xff]
    %v2418 = vld [vmem:[%s3 + $0x8] sm:$0xff]
    %v2419 = vld [vmem:[%s3 + $0x10] sm:$0xff]
    %v2420 = vld [vmem:[%s3 + $0x18] sm:$0xff]
    %v2421 = vld [vmem:[%s3 + $0x20] sm:$0xff]
    %v2422 = vld [vmem:[%s3 + $0x28] sm:$0xff]
    %v2423 = vld [vmem:[%s3 + $0x30] sm:$0xff]
    %v2424 = vld [vmem:[%s3 + $0x38] sm:$0xff]
    %v2425 = vld [vmem:[%s4] sm:$0xff]
    %v2426 = vld [vmem:[%s4 + $0x8] sm:$0xff]
    %v2427 = vld [vmem:[%s4 + $0x10] sm:$0xff]
    %v2428 = vld [vmem:[%s4 + $0x18] sm:$0xff]
    %v2429 = vld [vmem:[%s4 + $0x20] sm:$0xff]
    %v2430 = vld [vmem:[%s4 + $0x28] sm:$0xff]
    %v2431 = vld [vmem:[%s4 + $0x30] sm:$0xff]
    %v2432 = vld [vmem:[%s4 + $0x38] sm:$0xff]
    %v2441 = vcombine.high %v2409, %v2409
    %v2443 = vunpack.c.l.s4 1966171168
    %v2444 = vunpack.c.0.s8 %v2443
    %v2445 = vlaneseq
    %v2446 = vshrl.u32 %v2445, 7
    %v2447 = vsub.s32 %v2444, %v2446
    %v2448 = vrot.slane %v2409, %v2447
    %v2450 = vunpack.c.l.s4 1966171168
    %v2451 = vunpack.c.0.s8 %v2450
    %v2452 = vlaneseq
    %v2453 = vshrl.u32 %v2452, 7
    %v2454 = vsub.s32 %v2451, %v2453
    %v2455 = vrot.slane %v2441, %v2454
    %v2456 = vcombine.high %v2448, %v2448
    %v2457 = vcombine.high %v2455, %v2455
    %v2459 = vunpack.c.l.s4 1966171168
    %v2460 = vunpack.c.0.s8 %v2459
    %v2461 = vlaneseq
    %v2462 = vshrl.u32 %v2461, 7
    %v2463 = vsub.s32 %v2460, %v2462
    %v2464 = vrot.slane %v2448, %v2463
    %v2466 = vunpack.c.l.s4 1966171168
    %v2467 = vunpack.c.0.s8 %v2466
    %v2468 = vlaneseq
    %v2469 = vshrl.u32 %v2468, 7
    %v2470 = vsub.s32 %v2467, %v2469
    %v2471 = vrot.slane %v2455, %v2470
    %v2473 = vunpack.c.l.s4 1966171168
    %v2474 = vunpack.c.0.s8 %v2473
    %v2475 = vlaneseq
    %v2476 = vshrl.u32 %v2475, 7
    %v2477 = vsub.s32 %v2474, %v2476
    %v2478 = vrot.slane %v2456, %v2477
    %v2480 = vunpack.c.l.s4 1966171168
    %v2481 = vunpack.c.0.s8 %v2480
    %v2482 = vlaneseq
    %v2483 = vshrl.u32 %v2482, 7
    %v2484 = vsub.s32 %v2481, %v2483
    %v2485 = vrot.slane %v2457, %v2484
    %v2486 = vcombine.high %v2464, %v2464
    %v2487 = vcombine.high %v2471, %v2471
    %v2488 = vcombine.high %v2478, %v2478
    %v2489 = vcombine.high %v2485, %v2485
    %v2490 = vcombine.high %v2410, %v2410
    %v2492 = vunpack.c.l.s4 1966171168
    %v2493 = vunpack.c.0.s8 %v2492
    %v2494 = vlaneseq
    %v2495 = vshrl.u32 %v2494, 7
    %v2496 = vsub.s32 %v2493, %v2495
    %v2497 = vrot.slane %v2410, %v2496
    %v2499 = vunpack.c.l.s4 1966171168
    %v2500 = vunpack.c.0.s8 %v2499
    %v2501 = vlaneseq
    %v2502 = vshrl.u32 %v2501, 7
    %v2503 = vsub.s32 %v2500, %v2502
    %v2504 = vrot.slane %v2490, %v2503
    %v2505 = vcombine.high %v2497, %v2497
    %v2506 = vcombine.high %v2504, %v2504
    %v2508 = vunpack.c.l.s4 1966171168
    %v2509 = vunpack.c.0.s8 %v2508
    %v2510 = vlaneseq
    %v2511 = vshrl.u32 %v2510, 7
    %v2512 = vsub.s32 %v2509, %v2511
    %v2513 = vrot.slane %v2497, %v2512
    %v2515 = vunpack.c.l.s4 1966171168
    %v2516 = vunpack.c.0.s8 %v2515
    %v2517 = vlaneseq
    %v2518 = vshrl.u32 %v2517, 7
    %v2519 = vsub.s32 %v2516, %v2518
    %v2520 = vrot.slane %v2504, %v2519
    %v2522 = vunpack.c.l.s4 1966171168
    %v2523 = vunpack.c.0.s8 %v2522
    %v2524 = vlaneseq
    %v2525 = vshrl.u32 %v2524, 7
    %v2526 = vsub.s32 %v2523, %v2525
    %v2527 = vrot.slane %v2505, %v2526
    %v2529 = vunpack.c.l.s4 1966171168
    %v2530 = vunpack.c.0.s8 %v2529
    %v2531 = vlaneseq
    %v2532 = vshrl.u32 %v2531, 7
    %v2533 = vsub.s32 %v2530, %v2532
    %v2534 = vrot.slane %v2506, %v2533
    %v2535 = vcombine.high %v2513, %v2513
    %v2536 = vcombine.high %v2520, %v2520
    %v2537 = vcombine.high %v2527, %v2527
    %v2538 = vcombine.high %v2534, %v2534
    %v2539 = vcombine.high %v2411, %v2411
    %v2541 = vunpack.c.l.s4 1966171168
    %v2542 = vunpack.c.0.s8 %v2541
    %v2543 = vlaneseq
    %v2544 = vshrl.u32 %v2543, 7
    %v2545 = vsub.s32 %v2542, %v2544
    %v2546 = vrot.slane %v2411, %v2545
    %v2548 = vunpack.c.l.s4 1966171168
    %v2549 = vunpack.c.0.s8 %v2548
    %v2550 = vlaneseq
    %v2551 = vshrl.u32 %v2550, 7
    %v2552 = vsub.s32 %v2549, %v2551
    %v2553 = vrot.slane %v2539, %v2552
    %v2554 = vcombine.high %v2546, %v2546
    %v2555 = vcombine.high %v2553, %v2553
    %v2557 = vunpack.c.l.s4 1966171168
    %v2558 = vunpack.c.0.s8 %v2557
    %v2559 = vlaneseq
    %v2560 = vshrl.u32 %v2559, 7
    %v2561 = vsub.s32 %v2558, %v2560
    %v2562 = vrot.slane %v2546, %v2561
    %v2564 = vunpack.c.l.s4 1966171168
    %v2565 = vunpack.c.0.s8 %v2564
    %v2566 = vlaneseq
    %v2567 = vshrl.u32 %v2566, 7
    %v2568 = vsub.s32 %v2565, %v2567
    %v2569 = vrot.slane %v2553, %v2568
    %v2571 = vunpack.c.l.s4 1966171168
    %v2572 = vunpack.c.0.s8 %v2571
    %v2573 = vlaneseq
    %v2574 = vshrl.u32 %v2573, 7
    %v2575 = vsub.s32 %v2572, %v2574
    %v2576 = vrot.slane %v2554, %v2575
    %v2578 = vunpack.c.l.s4 1966171168
    %v2579 = vunpack.c.0.s8 %v2578
    %v2580 = vlaneseq
    %v2581 = vshrl.u32 %v2580, 7
    %v2582 = vsub.s32 %v2579, %v2581
    %v2583 = vrot.slane %v2555, %v2582
    %v2584 = vcombine.high %v2562, %v2562
    %v2585 = vcombine.high %v2569, %v2569
    %v2586 = vcombine.high %v2576, %v2576
    %v2587 = vcombine.high %v2583, %v2583
    %v2588 = vcombine.high %v2412, %v2412
    %v2590 = vunpack.c.l.s4 1966171168
    %v2591 = vunpack.c.0.s8 %v2590
    %v2592 = vlaneseq
    %v2593 = vshrl.u32 %v2592, 7
    %v2594 = vsub.s32 %v2591, %v2593
    %v2595 = vrot.slane %v2412, %v2594
    %v2597 = vunpack.c.l.s4 1966171168
    %v2598 = vunpack.c.0.s8 %v2597
    %v2599 = vlaneseq
    %v2600 = vshrl.u32 %v2599, 7
    %v2601 = vsub.s32 %v2598, %v2600
    %v2602 = vrot.slane %v2588, %v2601
    %v2603 = vcombine.high %v2595, %v2595
    %v2604 = vcombine.high %v2602, %v2602
    %v2606 = vunpack.c.l.s4 1966171168
    %v2607 = vunpack.c.0.s8 %v2606
    %v2608 = vlaneseq
    %v2609 = vshrl.u32 %v2608, 7
    %v2610 = vsub.s32 %v2607, %v2609
    %v2611 = vrot.slane %v2595, %v2610
    %v2613 = vunpack.c.l.s4 1966171168
    %v2614 = vunpack.c.0.s8 %v2613
    %v2615 = vlaneseq
    %v2616 = vshrl.u32 %v2615, 7
    %v2617 = vsub.s32 %v2614, %v2616
    %v2618 = vrot.slane %v2602, %v2617
    %v2620 = vunpack.c.l.s4 1966171168
    %v2621 = vunpack.c.0.s8 %v2620
    %v2622 = vlaneseq
    %v2623 = vshrl.u32 %v2622, 7
    %v2624 = vsub.s32 %v2621, %v2623
    %v2625 = vrot.slane %v2603, %v2624
    %v2627 = vunpack.c.l.s4 1966171168
    %v2628 = vunpack.c.0.s8 %v2627
    %v2629 = vlaneseq
    %v2630 = vshrl.u32 %v2629, 7
    %v2631 = vsub.s32 %v2628, %v2630
    %v2632 = vrot.slane %v2604, %v2631
    %v2633 = vcombine.high %v2611, %v2611
    %v2634 = vcombine.high %v2618, %v2618
    %v2635 = vcombine.high %v2625, %v2625
    %v2636 = vcombine.high %v2632, %v2632
    %v2637 = vcombine.high %v2413, %v2413
    %v2639 = vunpack.c.l.s4 1966171168
    %v2640 = vunpack.c.0.s8 %v2639
    %v2641 = vlaneseq
    %v2642 = vshrl.u32 %v2641, 7
    %v2643 = vsub.s32 %v2640, %v2642
    %v2644 = vrot.slane %v2413, %v2643
    %v2646 = vunpack.c.l.s4 1966171168
    %v2647 = vunpack.c.0.s8 %v2646
    %v2648 = vlaneseq
    %v2649 = vshrl.u32 %v2648, 7
    %v2650 = vsub.s32 %v2647, %v2649
    %v2651 = vrot.slane %v2637, %v2650
    %v2652 = vcombine.high %v2644, %v2644
    %v2653 = vcombine.high %v2651, %v2651
    %v2655 = vunpack.c.l.s4 1966171168
    %v2656 = vunpack.c.0.s8 %v2655
    %v2657 = vlaneseq
    %v2658 = vshrl.u32 %v2657, 7
    %v2659 = vsub.s32 %v2656, %v2658
    %v2660 = vrot.slane %v2644, %v2659
    %v2662 = vunpack.c.l.s4 1966171168
    %v2663 = vunpack.c.0.s8 %v2662
    %v2664 = vlaneseq
    %v2665 = vshrl.u32 %v2664, 7
    %v2666 = vsub.s32 %v2663, %v2665
    %v2667 = vrot.slane %v2651, %v2666
    %v2669 = vunpack.c.l.s4 1966171168
    %v2670 = vunpack.c.0.s8 %v2669
    %v2671 = vlaneseq
    %v2672 = vshrl.u32 %v2671, 7
    %v2673 = vsub.s32 %v2670, %v2672
    %v2674 = vrot.slane %v2652, %v2673
    %v2676 = vunpack.c.l.s4 1966171168
    %v2677 = vunpack.c.0.s8 %v2676
    %v2678 = vlaneseq
    %v2679 = vshrl.u32 %v2678, 7
    %v2680 = vsub.s32 %v2677, %v2679
    %v2681 = vrot.slane %v2653, %v2680
    %v2682 = vcombine.high %v2660, %v2660
    %v2683 = vcombine.high %v2667, %v2667
    %v2684 = vcombine.high %v2674, %v2674
    %v2685 = vcombine.high %v2681, %v2681
    %v2686 = vcombine.high %v2414, %v2414
    %v2688 = vunpack.c.l.s4 1966171168
    %v2689 = vunpack.c.0.s8 %v2688
    %v2690 = vlaneseq
    %v2691 = vshrl.u32 %v2690, 7
    %v2692 = vsub.s32 %v2689, %v2691
    %v2693 = vrot.slane %v2414, %v2692
    %v2695 = vunpack.c.l.s4 1966171168
    %v2696 = vunpack.c.0.s8 %v2695
    %v2697 = vlaneseq
    %v2698 = vshrl.u32 %v2697, 7
    %v2699 = vsub.s32 %v2696, %v2698
    %v2700 = vrot.slane %v2686, %v2699
    %v2701 = vcombine.high %v2693, %v2693
    %v2702 = vcombine.high %v2700, %v2700
    %v2704 = vunpack.c.l.s4 1966171168
    %v2705 = vunpack.c.0.s8 %v2704
    %v2706 = vlaneseq
    %v2707 = vshrl.u32 %v2706, 7
    %v2708 = vsub.s32 %v2705, %v2707
    %v2709 = vrot.slane %v2693, %v2708
    %v2711 = vunpack.c.l.s4 1966171168
    %v2712 = vunpack.c.0.s8 %v2711
    %v2713 = vlaneseq
    %v2714 = vshrl.u32 %v2713, 7
    %v2715 = vsub.s32 %v2712, %v2714
    %v2716 = vrot.slane %v2700, %v2715
    %v2718 = vunpack.c.l.s4 1966171168
    %v2719 = vunpack.c.0.s8 %v2718
    %v2720 = vlaneseq
    %v2721 = vshrl.u32 %v2720, 7
    %v2722 = vsub.s32 %v2719, %v2721
    %v2723 = vrot.slane %v2701, %v2722
    %v2725 = vunpack.c.l.s4 1966171168
    %v2726 = vunpack.c.0.s8 %v2725
    %v2727 = vlaneseq
    %v2728 = vshrl.u32 %v2727, 7
    %v2729 = vsub.s32 %v2726, %v2728
    %v2730 = vrot.slane %v2702, %v2729
    %v2731 = vcombine.high %v2709, %v2709
    %v2732 = vcombine.high %v2716, %v2716
    %v2733 = vcombine.high %v2723, %v2723
    %v2734 = vcombine.high %v2730, %v2730
    %v2735 = vcombine.high %v2415, %v2415
    %v2737 = vunpack.c.l.s4 1966171168
    %v2738 = vunpack.c.0.s8 %v2737
    %v2739 = vlaneseq
    %v2740 = vshrl.u32 %v2739, 7
    %v2741 = vsub.s32 %v2738, %v2740
    %v2742 = vrot.slane %v2415, %v2741
    %v2744 = vunpack.c.l.s4 1966171168
    %v2745 = vunpack.c.0.s8 %v2744
    %v2746 = vlaneseq
    %v2747 = vshrl.u32 %v2746, 7
    %v2748 = vsub.s32 %v2745, %v2747
    %v2749 = vrot.slane %v2735, %v2748
    %v2750 = vcombine.high %v2742, %v2742
    %v2751 = vcombine.high %v2749, %v2749
    %v2753 = vunpack.c.l.s4 1966171168
    %v2754 = vunpack.c.0.s8 %v2753
    %v2755 = vlaneseq
    %v2756 = vshrl.u32 %v2755, 7
    %v2757 = vsub.s32 %v2754, %v2756
    %v2758 = vrot.slane %v2742, %v2757
    %v2760 = vunpack.c.l.s4 1966171168
    %v2761 = vunpack.c.0.s8 %v2760
    %v2762 = vlaneseq
    %v2763 = vshrl.u32 %v2762, 7
    %v2764 = vsub.s32 %v2761, %v2763
    %v2765 = vrot.slane %v2749, %v2764
    %v2767 = vunpack.c.l.s4 1966171168
    %v2768 = vunpack.c.0.s8 %v2767
    %v2769 = vlaneseq
    %v2770 = vshrl.u32 %v2769, 7
    %v2771 = vsub.s32 %v2768, %v2770
    %v2772 = vrot.slane %v2750, %v2771
    %v2774 = vunpack.c.l.s4 1966171168
    %v2775 = vunpack.c.0.s8 %v2774
    %v2776 = vlaneseq
    %v2777 = vshrl.u32 %v2776, 7
    %v2778 = vsub.s32 %v2775, %v2777
    %v2779 = vrot.slane %v2751, %v2778
    %v2780 = vcombine.high %v2758, %v2758
    %v2781 = vcombine.high %v2765, %v2765
    %v2782 = vcombine.high %v2772, %v2772
    %v2783 = vcombine.high %v2779, %v2779
    %v2784 = vcombine.high %v2416, %v2416
    %v2786 = vunpack.c.l.s4 1966171168
    %v2787 = vunpack.c.0.s8 %v2786
    %v2788 = vlaneseq
    %v2789 = vshrl.u32 %v2788, 7
    %v2790 = vsub.s32 %v2787, %v2789
    %v2791 = vrot.slane %v2416, %v2790
    %v2793 = vunpack.c.l.s4 1966171168
    %v2794 = vunpack.c.0.s8 %v2793
    %v2795 = vlaneseq
    %v2796 = vshrl.u32 %v2795, 7
    %v2797 = vsub.s32 %v2794, %v2796
    %v2798 = vrot.slane %v2784, %v2797
    %v2799 = vcombine.high %v2791, %v2791
    %v2800 = vcombine.high %v2798, %v2798
    %v2802 = vunpack.c.l.s4 1966171168
    %v2803 = vunpack.c.0.s8 %v2802
    %v2804 = vlaneseq
    %v2805 = vshrl.u32 %v2804, 7
    %v2806 = vsub.s32 %v2803, %v2805
    %v2807 = vrot.slane %v2791, %v2806
    %v2809 = vunpack.c.l.s4 1966171168
    %v2810 = vunpack.c.0.s8 %v2809
    %v2811 = vlaneseq
    %v2812 = vshrl.u32 %v2811, 7
    %v2813 = vsub.s32 %v2810, %v2812
    %v2814 = vrot.slane %v2798, %v2813
    %v2816 = vunpack.c.l.s4 1966171168
    %v2817 = vunpack.c.0.s8 %v2816
    %v2818 = vlaneseq
    %v2819 = vshrl.u32 %v2818, 7
    %v2820 = vsub.s32 %v2817, %v2819
    %v2821 = vrot.slane %v2799, %v2820
    %v2823 = vunpack.c.l.s4 1966171168
    %v2824 = vunpack.c.0.s8 %v2823
    %v2825 = vlaneseq
    %v2826 = vshrl.u32 %v2825, 7
    %v2827 = vsub.s32 %v2824, %v2826
    %v2828 = vrot.slane %v2800, %v2827
    %v2829 = vcombine.high %v2807, %v2807
    %v2830 = vcombine.high %v2814, %v2814
    %v2831 = vcombine.high %v2821, %v2821
    %v2832 = vcombine.high %v2828, %v2828
    %v2833 = vlaneseq
    %v2834 = vshrl.u32 %v2833, 7
    %v2835 = vsub.s32 0, %v2834
    %v2836 = vrot.slane %v2464, %v2835
    %v2837 = vlaneseq
    %v2838 = vshrl.u32 %v2837, 7
    %v2839 = vsub.s32 0, %v2838
    %v2840 = vrot.slane %v2478, %v2839
    %v2841 = vlaneseq
    %v2842 = vshrl.u32 %v2841, 7
    %v2843 = vsub.s32 0, %v2842
    %v2844 = vrot.slane %v2486, %v2843
    %v2845 = vlaneseq
    %v2846 = vshrl.u32 %v2845, 7
    %v2847 = vsub.s32 0, %v2846
    %v2848 = vrot.slane %v2488, %v2847
    %v2849 = vlaneseq
    %v2850 = vshrl.u32 %v2849, 7
    %v2851 = vsub.s32 0, %v2850
    %v2852 = vrot.slane %v2471, %v2851
    %v2853 = vlaneseq
    %v2854 = vshrl.u32 %v2853, 7
    %v2855 = vsub.s32 0, %v2854
    %v2856 = vrot.slane %v2485, %v2855
    %v2857 = vlaneseq
    %v2858 = vshrl.u32 %v2857, 7
    %v2859 = vsub.s32 0, %v2858
    %v2860 = vrot.slane %v2487, %v2859
    %v2861 = vlaneseq
    %v2862 = vshrl.u32 %v2861, 7
    %v2863 = vsub.s32 0, %v2862
    %v2864 = vrot.slane %v2489, %v2863
    %v2865 = vlaneseq
    %v2866 = vshrl.u32 %v2865, 7
    %v2867 = vsub.s32 0, %v2866
    %v2868 = vrot.slane %v2513, %v2867
    %v2869 = vlaneseq
    %v2870 = vshrl.u32 %v2869, 7
    %v2871 = vsub.s32 0, %v2870
    %v2872 = vrot.slane %v2527, %v2871
    %v2873 = vlaneseq
    %v2874 = vshrl.u32 %v2873, 7
    %v2875 = vsub.s32 0, %v2874
    %v2876 = vrot.slane %v2535, %v2875
    %v2877 = vlaneseq
    %v2878 = vshrl.u32 %v2877, 7
    %v2879 = vsub.s32 0, %v2878
    %v2880 = vrot.slane %v2537, %v2879
    %v2881 = vlaneseq
    %v2882 = vshrl.u32 %v2881, 7
    %v2883 = vsub.s32 0, %v2882
    %v2884 = vrot.slane %v2520, %v2883
    %v2885 = vlaneseq
    %v2886 = vshrl.u32 %v2885, 7
    %v2887 = vsub.s32 0, %v2886
    %v2888 = vrot.slane %v2534, %v2887
    %v2889 = vlaneseq
    %v2890 = vshrl.u32 %v2889, 7
    %v2891 = vsub.s32 0, %v2890
    %v2892 = vrot.slane %v2536, %v2891
    %v2893 = vlaneseq
    %v2894 = vshrl.u32 %v2893, 7
    %v2895 = vsub.s32 0, %v2894
    %v2896 = vrot.slane %v2538, %v2895
    %v2897 = vlaneseq
    %v2898 = vshrl.u32 %v2897, 7
    %v2899 = vsub.s32 0, %v2898
    %v2900 = vrot.slane %v2562, %v2899
    %v2901 = vlaneseq
    %v2902 = vshrl.u32 %v2901, 7
    %v2903 = vsub.s32 0, %v2902
    %v2904 = vrot.slane %v2576, %v2903
    %v2905 = vlaneseq
    %v2906 = vshrl.u32 %v2905, 7
    %v2907 = vsub.s32 0, %v2906
    %v2908 = vrot.slane %v2584, %v2907
    %v2909 = vlaneseq
    %v2910 = vshrl.u32 %v2909, 7
    %v2911 = vsub.s32 0, %v2910
    %v2912 = vrot.slane %v2586, %v2911
    %v2913 = vlaneseq
    %v2914 = vshrl.u32 %v2913, 7
    %v2915 = vsub.s32 0, %v2914
    %v2916 = vrot.slane %v2569, %v2915
    %v2917 = vlaneseq
    %v2918 = vshrl.u32 %v2917, 7
    %v2919 = vsub.s32 0, %v2918
    %v2920 = vrot.slane %v2583, %v2919
    %v2921 = vlaneseq
    %v2922 = vshrl.u32 %v2921, 7
    %v2923 = vsub.s32 0, %v2922
    %v2924 = vrot.slane %v2585, %v2923
    %v2925 = vlaneseq
    %v2926 = vshrl.u32 %v2925, 7
    %v2927 = vsub.s32 0, %v2926
    %v2928 = vrot.slane %v2587, %v2927
    %v2929 = vlaneseq
    %v2930 = vshrl.u32 %v2929, 7
    %v2931 = vsub.s32 0, %v2930
    %v2932 = vrot.slane %v2611, %v2931
    %v2933 = vlaneseq
    %v2934 = vshrl.u32 %v2933, 7
    %v2935 = vsub.s32 0, %v2934
    %v2936 = vrot.slane %v2625, %v2935
    %v2937 = vlaneseq
    %v2938 = vshrl.u32 %v2937, 7
    %v2939 = vsub.s32 0, %v2938
    %v2940 = vrot.slane %v2633, %v2939
    %v2941 = vlaneseq
    %v2942 = vshrl.u32 %v2941, 7
    %v2943 = vsub.s32 0, %v2942
    %v2944 = vrot.slane %v2635, %v2943
    %v2945 = vlaneseq
    %v2946 = vshrl.u32 %v2945, 7
    %v2947 = vsub.s32 0, %v2946
    %v2948 = vrot.slane %v2618, %v2947
    %v2949 = vlaneseq
    %v2950 = vshrl.u32 %v2949, 7
    %v2951 = vsub.s32 0, %v2950
    %v2952 = vrot.slane %v2632, %v2951
    %v2953 = vlaneseq
    %v2954 = vshrl.u32 %v2953, 7
    %v2955 = vsub.s32 0, %v2954
    %v2956 = vrot.slane %v2634, %v2955
    %v2957 = vlaneseq
    %v2958 = vshrl.u32 %v2957, 7
    %v2959 = vsub.s32 0, %v2958
    %v2960 = vrot.slane %v2636, %v2959
    %v2961 = vlaneseq
    %v2962 = vshrl.u32 %v2961, 7
    %v2963 = vsub.s32 0, %v2962
    %v2964 = vrot.slane %v2660, %v2963
    %v2965 = vlaneseq
    %v2966 = vshrl.u32 %v2965, 7
    %v2967 = vsub.s32 0, %v2966
    %v2968 = vrot.slane %v2674, %v2967
    %v2969 = vlaneseq
    %v2970 = vshrl.u32 %v2969, 7
    %v2971 = vsub.s32 0, %v2970
    %v2972 = vrot.slane %v2682, %v2971
    %v2973 = vlaneseq
    %v2974 = vshrl.u32 %v2973, 7
    %v2975 = vsub.s32 0, %v2974
    %v2976 = vrot.slane %v2684, %v2975
    %v2977 = vlaneseq
    %v2978 = vshrl.u32 %v2977, 7
    %v2979 = vsub.s32 0, %v2978
    %v2980 = vrot.slane %v2667, %v2979
    %v2981 = vlaneseq
    %v2982 = vshrl.u32 %v2981, 7
    %v2983 = vsub.s32 0, %v2982
    %v2984 = vrot.slane %v2681, %v2983
    %v2985 = vlaneseq
    %v2986 = vshrl.u32 %v2985, 7
    %v2987 = vsub.s32 0, %v2986
    %v2988 = vrot.slane %v2683, %v2987
    %v2989 = vlaneseq
    %v2990 = vshrl.u32 %v2989, 7
    %v2991 = vsub.s32 0, %v2990
    %v2992 = vrot.slane %v2685, %v2991
    %v2993 = vlaneseq
    %v2994 = vshrl.u32 %v2993, 7
    %v2995 = vsub.s32 0, %v2994
    %v2996 = vrot.slane %v2709, %v2995
    %v2997 = vlaneseq
    %v2998 = vshrl.u32 %v2997, 7
    %v2999 = vsub.s32 0, %v2998
    %v3000 = vrot.slane %v2723, %v2999
    %v3001 = vlaneseq
    %v3002 = vshrl.u32 %v3001, 7
    %v3003 = vsub.s32 0, %v3002
    %v3004 = vrot.slane %v2731, %v3003
    %v3005 = vlaneseq
    %v3006 = vshrl.u32 %v3005, 7
    %v3007 = vsub.s32 0, %v3006
    %v3008 = vrot.slane %v2733, %v3007
    %v3009 = vlaneseq
    %v3010 = vshrl.u32 %v3009, 7
    %v3011 = vsub.s32 0, %v3010
    %v3012 = vrot.slane %v2716, %v3011
    %v3013 = vlaneseq
    %v3014 = vshrl.u32 %v3013, 7
    %v3015 = vsub.s32 0, %v3014
    %v3016 = vrot.slane %v2730, %v3015
    %v3017 = vlaneseq
    %v3018 = vshrl.u32 %v3017, 7
    %v3019 = vsub.s32 0, %v3018
    %v3020 = vrot.slane %v2732, %v3019
    %v3021 = vlaneseq
    %v3022 = vshrl.u32 %v3021, 7
    %v3023 = vsub.s32 0, %v3022
    %v3024 = vrot.slane %v2734, %v3023
    %v3025 = vlaneseq
    %v3026 = vshrl.u32 %v3025, 7
    %v3027 = vsub.s32 0, %v3026
    %v3028 = vrot.slane %v2758, %v3027
    %v3029 = vlaneseq
    %v3030 = vshrl.u32 %v3029, 7
    %v3031 = vsub.s32 0, %v3030
    %v3032 = vrot.slane %v2772, %v3031
    %v3033 = vlaneseq
    %v3034 = vshrl.u32 %v3033, 7
    %v3035 = vsub.s32 0, %v3034
    %v3036 = vrot.slane %v2780, %v3035
    %v3037 = vlaneseq
    %v3038 = vshrl.u32 %v3037, 7
    %v3039 = vsub.s32 0, %v3038
    %v3040 = vrot.slane %v2782, %v3039
    %v3041 = vlaneseq
    %v3042 = vshrl.u32 %v3041, 7
    %v3043 = vsub.s32 0, %v3042
    %v3044 = vrot.slane %v2765, %v3043
    %v3045 = vlaneseq
    %v3046 = vshrl.u32 %v3045, 7
    %v3047 = vsub.s32 0, %v3046
    %v3048 = vrot.slane %v2779, %v3047
    %v3049 = vlaneseq
    %v3050 = vshrl.u32 %v3049, 7
    %v3051 = vsub.s32 0, %v3050
    %v3052 = vrot.slane %v2781, %v3051
    %v3053 = vlaneseq
    %v3054 = vshrl.u32 %v3053, 7
    %v3055 = vsub.s32 0, %v3054
    %v3056 = vrot.slane %v2783, %v3055
    %v3057 = vlaneseq
    %v3058 = vshrl.u32 %v3057, 7
    %v3059 = vsub.s32 0, %v3058
    %v3060 = vrot.slane %v2807, %v3059
    %v3061 = vlaneseq
    %v3062 = vshrl.u32 %v3061, 7
    %v3063 = vsub.s32 0, %v3062
    %v3064 = vrot.slane %v2821, %v3063
    %v3065 = vlaneseq
    %v3066 = vshrl.u32 %v3065, 7
    %v3067 = vsub.s32 0, %v3066
    %v3068 = vrot.slane %v2829, %v3067
    %v3069 = vlaneseq
    %v3070 = vshrl.u32 %v3069, 7
    %v3071 = vsub.s32 0, %v3070
    %v3072 = vrot.slane %v2831, %v3071
    %v3073 = vlaneseq
    %v3074 = vshrl.u32 %v3073, 7
    %v3075 = vsub.s32 0, %v3074
    %v3076 = vrot.slane %v2814, %v3075
    %v3077 = vlaneseq
    %v3078 = vshrl.u32 %v3077, 7
    %v3079 = vsub.s32 0, %v3078
    %v3080 = vrot.slane %v2828, %v3079
    %v3081 = vlaneseq
    %v3082 = vshrl.u32 %v3081, 7
    %v3083 = vsub.s32 0, %v3082
    %v3084 = vrot.slane %v2830, %v3083
    %v3085 = vlaneseq
    %v3086 = vshrl.u32 %v3085, 7
    %v3087 = vsub.s32 0, %v3086
    %v3088 = vrot.slane %v2832, %v3087
    %v3153 = vmul.f32 %v2836, %v2417
    %v3154 = vmul.f32 %v2840, %v2418
    %v3155 = vmul.f32 %v2844, %v2419
    %v3156 = vmul.f32 %v2848, %v2420
    %v3157 = vmul.f32 %v2852, %v2421
    %v3158 = vmul.f32 %v2856, %v2422
    %v3159 = vmul.f32 %v2860, %v2423
    %v3160 = vmul.f32 %v2864, %v2424
    %v3161 = vmul.f32 %v2868, %v2417
    %v3162 = vmul.f32 %v2872, %v2418
    %v3163 = vmul.f32 %v2876, %v2419
    %v3164 = vmul.f32 %v2880, %v2420
    %v3165 = vmul.f32 %v2884, %v2421
    %v3166 = vmul.f32 %v2888, %v2422
    %v3167 = vmul.f32 %v2892, %v2423
    %v3168 = vmul.f32 %v2896, %v2424
    %v3169 = vmul.f32 %v2900, %v2417
    %v3170 = vmul.f32 %v2904, %v2418
    %v3171 = vmul.f32 %v2908, %v2419
    %v3172 = vmul.f32 %v2912, %v2420
    %v3173 = vmul.f32 %v2916, %v2421
    %v3174 = vmul.f32 %v2920, %v2422
    %v3175 = vmul.f32 %v2924, %v2423
    %v3176 = vmul.f32 %v2928, %v2424
    %v3177 = vmul.f32 %v2932, %v2417
    %v3178 = vmul.f32 %v2936, %v2418
    %v3179 = vmul.f32 %v2940, %v2419
    %v3180 = vmul.f32 %v2944, %v2420
    %v3181 = vmul.f32 %v2948, %v2421
    %v3182 = vmul.f32 %v2952, %v2422
    %v3183 = vmul.f32 %v2956, %v2423
    %v3184 = vmul.f32 %v2960, %v2424
    %v3185 = vmul.f32 %v2964, %v2417
    %v3186 = vmul.f32 %v2968, %v2418
    %v3187 = vmul.f32 %v2972, %v2419
    %v3188 = vmul.f32 %v2976, %v2420
    %v3189 = vmul.f32 %v2980, %v2421
    %v3190 = vmul.f32 %v2984, %v2422
    %v3191 = vmul.f32 %v2988, %v2423
    %v3192 = vmul.f32 %v2992, %v2424
    %v3193 = vmul.f32 %v2996, %v2417
    %v3194 = vmul.f32 %v3000, %v2418
    %v3195 = vmul.f32 %v3004, %v2419
    %v3196 = vmul.f32 %v3008, %v2420
    %v3197 = vmul.f32 %v3012, %v2421
    %v3198 = vmul.f32 %v3016, %v2422
    %v3199 = vmul.f32 %v3020, %v2423
    %v3200 = vmul.f32 %v3024, %v2424
    %v3201 = vmul.f32 %v3028, %v2417
    %v3202 = vmul.f32 %v3032, %v2418
    %v3203 = vmul.f32 %v3036, %v2419
    %v3204 = vmul.f32 %v3040, %v2420
    %v3205 = vmul.f32 %v3044, %v2421
    %v3206 = vmul.f32 %v3048, %v2422
    %v3207 = vmul.f32 %v3052, %v2423
    %v3208 = vmul.f32 %v3056, %v2424
    %v3209 = vmul.f32 %v3060, %v2417
    %v3210 = vmul.f32 %v3064, %v2418
    %v3211 = vmul.f32 %v3068, %v2419
    %v3212 = vmul.f32 %v3072, %v2420
    %v3213 = vmul.f32 %v3076, %v2421
    %v3214 = vmul.f32 %v3080, %v2422
    %v3215 = vmul.f32 %v3084, %v2423
    %v3216 = vmul.f32 %v3088, %v2424
    %3217 = vadd.xlane.f32.xlu0 %v3153
    %v3218 = vpop.xlane.xlu0 %3217
    %3219 = vadd.xlane.f32.xlu0 %v3154
    %v3220 = vpop.xlane.xlu0 %3219
    %3221 = vadd.xlane.f32.xlu0 %v3155
    %v3222 = vpop.xlane.xlu0 %3221
    %3223 = vadd.xlane.f32.xlu0 %v3156
    %v3224 = vpop.xlane.xlu0 %3223
    %3225 = vadd.xlane.f32.xlu0 %v3157
    %v3226 = vpop.xlane.xlu0 %3225
    %3227 = vadd.xlane.f32.xlu0 %v3158
    %v3228 = vpop.xlane.xlu0 %3227
    %3229 = vadd.xlane.f32.xlu0 %v3159
    %v3230 = vpop.xlane.xlu0 %3229
    %3231 = vadd.xlane.f32.xlu0 %v3160
    %v3232 = vpop.xlane.xlu0 %3231
    %3233 = vadd.xlane.f32.xlu0 %v3161
    %v3234 = vpop.xlane.xlu0 %3233
    %3235 = vadd.xlane.f32.xlu0 %v3162
    %v3236 = vpop.xlane.xlu0 %3235
    %3237 = vadd.xlane.f32.xlu0 %v3163
    %v3238 = vpop.xlane.xlu0 %3237
    %3239 = vadd.xlane.f32.xlu0 %v3164
    %v3240 = vpop.xlane.xlu0 %3239
    %3241 = vadd.xlane.f32.xlu0 %v3165
    %v3242 = vpop.xlane.xlu0 %3241
    %3243 = vadd.xlane.f32.xlu0 %v3166
    %v3244 = vpop.xlane.xlu0 %3243
    %3245 = vadd.xlane.f32.xlu0 %v3167
    %v3246 = vpop.xlane.xlu0 %3245
    %3247 = vadd.xlane.f32.xlu0 %v3168
    %v3248 = vpop.xlane.xlu0 %3247
    %3249 = vadd.xlane.f32.xlu0 %v3169
    %v3250 = vpop.xlane.xlu0 %3249
    %3251 = vadd.xlane.f32.xlu0 %v3170
    %v3252 = vpop.xlane.xlu0 %3251
    %3253 = vadd.xlane.f32.xlu0 %v3171
    %v3254 = vpop.xlane.xlu0 %3253
    %3255 = vadd.xlane.f32.xlu0 %v3172
    %v3256 = vpop.xlane.xlu0 %3255
    %3257 = vadd.xlane.f32.xlu0 %v3173
    %v3258 = vpop.xlane.xlu0 %3257
    %3259 = vadd.xlane.f32.xlu0 %v3174
    %v3260 = vpop.xlane.xlu0 %3259
    %3261 = vadd.xlane.f32.xlu0 %v3175
    %v3262 = vpop.xlane.xlu0 %3261
    %3263 = vadd.xlane.f32.xlu0 %v3176
    %v3264 = vpop.xlane.xlu0 %3263
    %3265 = vadd.xlane.f32.xlu0 %v3177
    %v3266 = vpop.xlane.xlu0 %3265
    %3267 = vadd.xlane.f32.xlu0 %v3178
    %v3268 = vpop.xlane.xlu0 %3267
    %3269 = vadd.xlane.f32.xlu0 %v3179
    %v3270 = vpop.xlane.xlu0 %3269
    %3271 = vadd.xlane.f32.xlu0 %v3180
    %v3272 = vpop.xlane.xlu0 %3271
    %3273 = vadd.xlane.f32.xlu0 %v3181
    %v3274 = vpop.xlane.xlu0 %3273
    %3275 = vadd.xlane.f32.xlu0 %v3182
    %v3276 = vpop.xlane.xlu0 %3275
    %3277 = vadd.xlane.f32.xlu0 %v3183
    %v3278 = vpop.xlane.xlu0 %3277
    %3279 = vadd.xlane.f32.xlu0 %v3184
    %v3280 = vpop.xlane.xlu0 %3279
    %3281 = vadd.xlane.f32.xlu0 %v3185
    %v3282 = vpop.xlane.xlu0 %3281
    %3283 = vadd.xlane.f32.xlu0 %v3186
    %v3284 = vpop.xlane.xlu0 %3283
    %3285 = vadd.xlane.f32.xlu0 %v3187
    %v3286 = vpop.xlane.xlu0 %3285
    %3287 = vadd.xlane.f32.xlu0 %v3188
    %v3288 = vpop.xlane.xlu0 %3287
    %3289 = vadd.xlane.f32.xlu0 %v3189
    %v3290 = vpop.xlane.xlu0 %3289
    %3291 = vadd.xlane.f32.xlu0 %v3190
    %v3292 = vpop.xlane.xlu0 %3291
    %3293 = vadd.xlane.f32.xlu0 %v3191
    %v3294 = vpop.xlane.xlu0 %3293
    %3295 = vadd.xlane.f32.xlu0 %v3192
    %v3296 = vpop.xlane.xlu0 %3295
    %3297 = vadd.xlane.f32.xlu0 %v3193
    %v3298 = vpop.xlane.xlu0 %3297
    %3299 = vadd.xlane.f32.xlu0 %v3194
    %v3300 = vpop.xlane.xlu0 %3299
    %3301 = vadd.xlane.f32.xlu0 %v3195
    %v3302 = vpop.xlane.xlu0 %3301
    %3303 = vadd.xlane.f32.xlu0 %v3196
    %v3304 = vpop.xlane.xlu0 %3303
    %3305 = vadd.xlane.f32.xlu0 %v3197
    %v3306 = vpop.xlane.xlu0 %3305
    %3307 = vadd.xlane.f32.xlu0 %v3198
    %v3308 = vpop.xlane.xlu0 %3307
    %3309 = vadd.xlane.f32.xlu0 %v3199
    %v3310 = vpop.xlane.xlu0 %3309
    %3311 = vadd.xlane.f32.xlu0 %v3200
    %v3312 = vpop.xlane.xlu0 %3311
    %3313 = vadd.xlane.f32.xlu0 %v3201
    %v3314 = vpop.xlane.xlu0 %3313
    %3315 = vadd.xlane.f32.xlu0 %v3202
    %v3316 = vpop.xlane.xlu0 %3315
    %3317 = vadd.xlane.f32.xlu0 %v3203
    %v3318 = vpop.xlane.xlu0 %3317
    %3319 = vadd.xlane.f32.xlu0 %v3204
    %v3320 = vpop.xlane.xlu0 %3319
    %3321 = vadd.xlane.f32.xlu0 %v3205
    %v3322 = vpop.xlane.xlu0 %3321
    %3323 = vadd.xlane.f32.xlu0 %v3206
    %v3324 = vpop.xlane.xlu0 %3323
    %3325 = vadd.xlane.f32.xlu0 %v3207
    %v3326 = vpop.xlane.xlu0 %3325
    %3327 = vadd.xlane.f32.xlu0 %v3208
    %v3328 = vpop.xlane.xlu0 %3327
    %3329 = vadd.xlane.f32.xlu0 %v3209
    %v3330 = vpop.xlane.xlu0 %3329
    %3331 = vadd.xlane.f32.xlu0 %v3210
    %v3332 = vpop.xlane.xlu0 %3331
    %3333 = vadd.xlane.f32.xlu0 %v3211
    %v3334 = vpop.xlane.xlu0 %3333
    %3335 = vadd.xlane.f32.xlu0 %v3212
    %v3336 = vpop.xlane.xlu0 %3335
    %3337 = vadd.xlane.f32.xlu0 %v3213
    %v3338 = vpop.xlane.xlu0 %3337
    %3339 = vadd.xlane.f32.xlu0 %v3214
    %v3340 = vpop.xlane.xlu0 %3339
    %3341 = vadd.xlane.f32.xlu0 %v3215
    %v3342 = vpop.xlane.xlu0 %3341
    %3343 = vadd.xlane.f32.xlu0 %v3216
    %v3344 = vpop.xlane.xlu0 %3343
    %v3345 = vlaneseq
    %v3346 = vand.u32 %v3345, 127
    %v3347 = vld [vmem:[%s6] sm:$0xff]
    %3348 = vset.pattern.permute.xlu0 0
    %3349 = vperm.xlu0 %3348, %v3347
    %v3350 = vpop.permute.xlu0 %3349
    %vm3351 = vcmp.lt.s32.totalorder %v3346, %v3350
    %v3352 = vsel %vm3351, 1, 0
    %vm3353 = vcmp.eq.s32.totalorder %v3352, 1
    %v3418 = vlaneseq
    %v3419 = vshrl.u32 %v3418, 7
    %v3420 = vsub.s32 %v3346, %v3419
    %v3421 = vrot.slane %v3218, %v3420
    %v3422 = vlaneseq
    %v3423 = vshrl.u32 %v3422, 7
    %v3424 = vsub.s32 %v3346, %v3423
    %v3425 = vrot.slane %v3220, %v3424
    %v3426 = vlaneseq
    %v3427 = vshrl.u32 %v3426, 7
    %v3428 = vsub.s32 %v3346, %v3427
    %v3429 = vrot.slane %v3222, %v3428
    %v3430 = vlaneseq
    %v3431 = vshrl.u32 %v3430, 7
    %v3432 = vsub.s32 %v3346, %v3431
    %v3433 = vrot.slane %v3224, %v3432
    %v3434 = vlaneseq
    %v3435 = vshrl.u32 %v3434, 7
    %v3436 = vsub.s32 %v3346, %v3435
    %v3437 = vrot.slane %v3226, %v3436
    %v3438 = vlaneseq
    %v3439 = vshrl.u32 %v3438, 7
    %v3440 = vsub.s32 %v3346, %v3439
    %v3441 = vrot.slane %v3228, %v3440
    %v3442 = vlaneseq
    %v3443 = vshrl.u32 %v3442, 7
    %v3444 = vsub.s32 %v3346, %v3443
    %v3445 = vrot.slane %v3230, %v3444
    %v3446 = vlaneseq
    %v3447 = vshrl.u32 %v3446, 7
    %v3448 = vsub.s32 %v3346, %v3447
    %v3449 = vrot.slane %v3232, %v3448
    %v3450 = vlaneseq
    %v3451 = vshrl.u32 %v3450, 7
    %v3452 = vsub.s32 %v3346, %v3451
    %v3453 = vrot.slane %v3234, %v3452
    %v3454 = vlaneseq
    %v3455 = vshrl.u32 %v3454, 7
    %v3456 = vsub.s32 %v3346, %v3455
    %v3457 = vrot.slane %v3236, %v3456
    %v3458 = vlaneseq
    %v3459 = vshrl.u32 %v3458, 7
    %v3460 = vsub.s32 %v3346, %v3459
    %v3461 = vrot.slane %v3238, %v3460
    %v3462 = vlaneseq
    %v3463 = vshrl.u32 %v3462, 7
    %v3464 = vsub.s32 %v3346, %v3463
    %v3465 = vrot.slane %v3240, %v3464
    %v3466 = vlaneseq
    %v3467 = vshrl.u32 %v3466, 7
    %v3468 = vsub.s32 %v3346, %v3467
    %v3469 = vrot.slane %v3242, %v3468
    %v3470 = vlaneseq
    %v3471 = vshrl.u32 %v3470, 7
    %v3472 = vsub.s32 %v3346, %v3471
    %v3473 = vrot.slane %v3244, %v3472
    %v3474 = vlaneseq
    %v3475 = vshrl.u32 %v3474, 7
    %v3476 = vsub.s32 %v3346, %v3475
    %v3477 = vrot.slane %v3246, %v3476
    %v3478 = vlaneseq
    %v3479 = vshrl.u32 %v3478, 7
    %v3480 = vsub.s32 %v3346, %v3479
    %v3481 = vrot.slane %v3248, %v3480
    %v3482 = vlaneseq
    %v3483 = vshrl.u32 %v3482, 7
    %v3484 = vsub.s32 %v3346, %v3483
    %v3485 = vrot.slane %v3250, %v3484
    %v3486 = vlaneseq
    %v3487 = vshrl.u32 %v3486, 7
    %v3488 = vsub.s32 %v3346, %v3487
    %v3489 = vrot.slane %v3252, %v3488
    %v3490 = vlaneseq
    %v3491 = vshrl.u32 %v3490, 7
    %v3492 = vsub.s32 %v3346, %v3491
    %v3493 = vrot.slane %v3254, %v3492
    %v3494 = vlaneseq
    %v3495 = vshrl.u32 %v3494, 7
    %v3496 = vsub.s32 %v3346, %v3495
    %v3497 = vrot.slane %v3256, %v3496
    %v3498 = vlaneseq
    %v3499 = vshrl.u32 %v3498, 7
    %v3500 = vsub.s32 %v3346, %v3499
    %v3501 = vrot.slane %v3258, %v3500
    %v3502 = vlaneseq
    %v3503 = vshrl.u32 %v3502, 7
    %v3504 = vsub.s32 %v3346, %v3503
    %v3505 = vrot.slane %v3260, %v3504
    %v3506 = vlaneseq
    %v3507 = vshrl.u32 %v3506, 7
    %v3508 = vsub.s32 %v3346, %v3507
    %v3509 = vrot.slane %v3262, %v3508
    %v3510 = vlaneseq
    %v3511 = vshrl.u32 %v3510, 7
    %v3512 = vsub.s32 %v3346, %v3511
    %v3513 = vrot.slane %v3264, %v3512
    %v3514 = vlaneseq
    %v3515 = vshrl.u32 %v3514, 7
    %v3516 = vsub.s32 %v3346, %v3515
    %v3517 = vrot.slane %v3266, %v3516
    %v3518 = vlaneseq
    %v3519 = vshrl.u32 %v3518, 7
    %v3520 = vsub.s32 %v3346, %v3519
    %v3521 = vrot.slane %v3268, %v3520
    %v3522 = vlaneseq
    %v3523 = vshrl.u32 %v3522, 7
    %v3524 = vsub.s32 %v3346, %v3523
    %v3525 = vrot.slane %v3270, %v3524
    %v3526 = vlaneseq
    %v3527 = vshrl.u32 %v3526, 7
    %v3528 = vsub.s32 %v3346, %v3527
    %v3529 = vrot.slane %v3272, %v3528
    %v3530 = vlaneseq
    %v3531 = vshrl.u32 %v3530, 7
    %v3532 = vsub.s32 %v3346, %v3531
    %v3533 = vrot.slane %v3274, %v3532
    %v3534 = vlaneseq
    %v3535 = vshrl.u32 %v3534, 7
    %v3536 = vsub.s32 %v3346, %v3535
    %v3537 = vrot.slane %v3276, %v3536
    %v3538 = vlaneseq
    %v3539 = vshrl.u32 %v3538, 7
    %v3540 = vsub.s32 %v3346, %v3539
    %v3541 = vrot.slane %v3278, %v3540
    %v3542 = vlaneseq
    %v3543 = vshrl.u32 %v3542, 7
    %v3544 = vsub.s32 %v3346, %v3543
    %v3545 = vrot.slane %v3280, %v3544
    %v3546 = vlaneseq
    %v3547 = vshrl.u32 %v3546, 7
    %v3548 = vsub.s32 %v3346, %v3547
    %v3549 = vrot.slane %v3282, %v3548
    %v3550 = vlaneseq
    %v3551 = vshrl.u32 %v3550, 7
    %v3552 = vsub.s32 %v3346, %v3551
    %v3553 = vrot.slane %v3284, %v3552
    %v3554 = vlaneseq
    %v3555 = vshrl.u32 %v3554, 7
    %v3556 = vsub.s32 %v3346, %v3555
    %v3557 = vrot.slane %v3286, %v3556
    %v3558 = vlaneseq
    %v3559 = vshrl.u32 %v3558, 7
    %v3560 = vsub.s32 %v3346, %v3559
    %v3561 = vrot.slane %v3288, %v3560
    %v3562 = vlaneseq
    %v3563 = vshrl.u32 %v3562, 7
    %v3564 = vsub.s32 %v3346, %v3563
    %v3565 = vrot.slane %v3290, %v3564
    %v3566 = vlaneseq
    %v3567 = vshrl.u32 %v3566, 7
    %v3568 = vsub.s32 %v3346, %v3567
    %v3569 = vrot.slane %v3292, %v3568
    %v3570 = vlaneseq
    %v3571 = vshrl.u32 %v3570, 7
    %v3572 = vsub.s32 %v3346, %v3571
    %v3573 = vrot.slane %v3294, %v3572
    %v3574 = vlaneseq
    %v3575 = vshrl.u32 %v3574, 7
    %v3576 = vsub.s32 %v3346, %v3575
    %v3577 = vrot.slane %v3296, %v3576
    %v3578 = vlaneseq
    %v3579 = vshrl.u32 %v3578, 7
    %v3580 = vsub.s32 %v3346, %v3579
    %v3581 = vrot.slane %v3298, %v3580
    %v3582 = vlaneseq
    %v3583 = vshrl.u32 %v3582, 7
    %v3584 = vsub.s32 %v3346, %v3583
    %v3585 = vrot.slane %v3300, %v3584
    %v3586 = vlaneseq
    %v3587 = vshrl.u32 %v3586, 7
    %v3588 = vsub.s32 %v3346, %v3587
    %v3589 = vrot.slane %v3302, %v3588
    %v3590 = vlaneseq
    %v3591 = vshrl.u32 %v3590, 7
    %v3592 = vsub.s32 %v3346, %v3591
    %v3593 = vrot.slane %v3304, %v3592
    %v3594 = vlaneseq
    %v3595 = vshrl.u32 %v3594, 7
    %v3596 = vsub.s32 %v3346, %v3595
    %v3597 = vrot.slane %v3306, %v3596
    %v3598 = vlaneseq
    %v3599 = vshrl.u32 %v3598, 7
    %v3600 = vsub.s32 %v3346, %v3599
    %v3601 = vrot.slane %v3308, %v3600
    %v3602 = vlaneseq
    %v3603 = vshrl.u32 %v3602, 7
    %v3604 = vsub.s32 %v3346, %v3603
    %v3605 = vrot.slane %v3310, %v3604
    %v3606 = vlaneseq
    %v3607 = vshrl.u32 %v3606, 7
    %v3608 = vsub.s32 %v3346, %v3607
    %v3609 = vrot.slane %v3312, %v3608
    %v3610 = vlaneseq
    %v3611 = vshrl.u32 %v3610, 7
    %v3612 = vsub.s32 %v3346, %v3611
    %v3613 = vrot.slane %v3314, %v3612
    %v3614 = vlaneseq
    %v3615 = vshrl.u32 %v3614, 7
    %v3616 = vsub.s32 %v3346, %v3615
    %v3617 = vrot.slane %v3316, %v3616
    %v3618 = vlaneseq
    %v3619 = vshrl.u32 %v3618, 7
    %v3620 = vsub.s32 %v3346, %v3619
    %v3621 = vrot.slane %v3318, %v3620
    %v3622 = vlaneseq
    %v3623 = vshrl.u32 %v3622, 7
    %v3624 = vsub.s32 %v3346, %v3623
    %v3625 = vrot.slane %v3320, %v3624
    %v3626 = vlaneseq
    %v3627 = vshrl.u32 %v3626, 7
    %v3628 = vsub.s32 %v3346, %v3627
    %v3629 = vrot.slane %v3322, %v3628
    %v3630 = vlaneseq
    %v3631 = vshrl.u32 %v3630, 7
    %v3632 = vsub.s32 %v3346, %v3631
    %v3633 = vrot.slane %v3324, %v3632
    %v3634 = vlaneseq
    %v3635 = vshrl.u32 %v3634, 7
    %v3636 = vsub.s32 %v3346, %v3635
    %v3637 = vrot.slane %v3326, %v3636
    %v3638 = vlaneseq
    %v3639 = vshrl.u32 %v3638, 7
    %v3640 = vsub.s32 %v3346, %v3639
    %v3641 = vrot.slane %v3328, %v3640
    %v3642 = vlaneseq
    %v3643 = vshrl.u32 %v3642, 7
    %v3644 = vsub.s32 %v3346, %v3643
    %v3645 = vrot.slane %v3330, %v3644
    %v3646 = vlaneseq
    %v3647 = vshrl.u32 %v3646, 7
    %v3648 = vsub.s32 %v3346, %v3647
    %v3649 = vrot.slane %v3332, %v3648
    %v3650 = vlaneseq
    %v3651 = vshrl.u32 %v3650, 7
    %v3652 = vsub.s32 %v3346, %v3651
    %v3653 = vrot.slane %v3334, %v3652
    %v3654 = vlaneseq
    %v3655 = vshrl.u32 %v3654, 7
    %v3656 = vsub.s32 %v3346, %v3655
    %v3657 = vrot.slane %v3336, %v3656
    %v3658 = vlaneseq
    %v3659 = vshrl.u32 %v3658, 7
    %v3660 = vsub.s32 %v3346, %v3659
    %v3661 = vrot.slane %v3338, %v3660
    %v3662 = vlaneseq
    %v3663 = vshrl.u32 %v3662, 7
    %v3664 = vsub.s32 %v3346, %v3663
    %v3665 = vrot.slane %v3340, %v3664
    %v3666 = vlaneseq
    %v3667 = vshrl.u32 %v3666, 7
    %v3668 = vsub.s32 %v3346, %v3667
    %v3669 = vrot.slane %v3342, %v3668
    %v3670 = vlaneseq
    %v3671 = vshrl.u32 %v3670, 7
    %v3672 = vsub.s32 %v3346, %v3671
    %v3673 = vrot.slane %v3344, %v3672
    %vm3674 = vcmask 1041409
    %v3675 = vsel %vm3674, %v3425, %v3421
    %vm3676 = vcmask 1042434
    %v3677 = vsel %vm3676, %v3429, %v3675
    %vm3678 = vcmask 1043459
    %v3679 = vsel %vm3678, %v3433, %v3677
    %vm3680 = vcmask 1044484
    %v3681 = vsel %vm3680, %v3437, %v3679
    %vm3682 = vcmask 1045509
    %v3683 = vsel %vm3682, %v3441, %v3681
    %vm3684 = vcmask 1046534
    %v3685 = vsel %vm3684, %v3445, %v3683
    %vm3686 = vcmask 1047559
    %v3687 = vsel %vm3686, %v3449, %v3685
    %v3688 = vsel %vm3674, %v3457, %v3453
    %v3689 = vsel %vm3676, %v3461, %v3688
    %v3690 = vsel %vm3678, %v3465, %v3689
    %v3691 = vsel %vm3680, %v3469, %v3690
    %v3692 = vsel %vm3682, %v3473, %v3691
    %v3693 = vsel %vm3684, %v3477, %v3692
    %v3694 = vsel %vm3686, %v3481, %v3693
    %v3695 = vsel %vm3674, %v3489, %v3485
    %v3696 = vsel %vm3676, %v3493, %v3695
    %v3697 = vsel %vm3678, %v3497, %v3696
    %v3698 = vsel %vm3680, %v3501, %v3697
    %v3699 = vsel %vm3682, %v3505, %v3698
    %v3700 = vsel %vm3684, %v3509, %v3699
    %v3701 = vsel %vm3686, %v3513, %v3700
    %v3702 = vsel %vm3674, %v3521, %v3517
    %v3703 = vsel %vm3676, %v3525, %v3702
    %v3704 = vsel %vm3678, %v3529, %v3703
    %v3705 = vsel %vm3680, %v3533, %v3704
    %v3706 = vsel %vm3682, %v3537, %v3705
    %v3707 = vsel %vm3684, %v3541, %v3706
    %v3708 = vsel %vm3686, %v3545, %v3707
    %v3709 = vsel %vm3674, %v3553, %v3549
    %v3710 = vsel %vm3676, %v3557, %v3709
    %v3711 = vsel %vm3678, %v3561, %v3710
    %v3712 = vsel %vm3680, %v3565, %v3711
    %v3713 = vsel %vm3682, %v3569, %v3712
    %v3714 = vsel %vm3684, %v3573, %v3713
    %v3715 = vsel %vm3686, %v3577, %v3714
    %v3716 = vsel %vm3674, %v3585, %v3581
    %v3717 = vsel %vm3676, %v3589, %v3716
    %v3718 = vsel %vm3678, %v3593, %v3717
    %v3719 = vsel %vm3680, %v3597, %v3718
    %v3720 = vsel %vm3682, %v3601, %v3719
    %v3721 = vsel %vm3684, %v3605, %v3720
    %v3722 = vsel %vm3686, %v3609, %v3721
    %v3723 = vsel %vm3674, %v3617, %v3613
    %v3724 = vsel %vm3676, %v3621, %v3723
    %v3725 = vsel %vm3678, %v3625, %v3724
    %v3726 = vsel %vm3680, %v3629, %v3725
    %v3727 = vsel %vm3682, %v3633, %v3726
    %v3728 = vsel %vm3684, %v3637, %v3727
    %v3729 = vsel %vm3686, %v3641, %v3728
    %v3730 = vsel %vm3674, %v3649, %v3645
    %v3731 = vsel %vm3676, %v3653, %v3730
    %v3732 = vsel %vm3678, %v3657, %v3731
    %v3733 = vsel %vm3680, %v3661, %v3732
    %v3734 = vsel %vm3682, %v3665, %v3733
    %v3735 = vsel %vm3684, %v3669, %v3734
    %v3736 = vsel %vm3686, %v3673, %v3735
    %v3745 = vsel %vm3353, %v3687, -1e+09
    %v3746 = vsel %vm3353, %v3694, -1e+09
    %v3747 = vsel %vm3353, %v3701, -1e+09
    %v3748 = vsel %vm3353, %v3708, -1e+09
    %v3749 = vsel %vm3353, %v3715, -1e+09
    %v3750 = vsel %vm3353, %v3722, -1e+09
    %v3751 = vsel %vm3353, %v3729, -1e+09
    %v3752 = vsel %vm3353, %v3736, -1e+09
    %vm3753 = vcmask 64512
    %v3754 = vsel %vm3753, %v3745, -inf
    %3755 = vmax.xlane.f32.xlu0 %v3754
    %v3756 = vpop.xlane.xlu0 %3755
    %v3757 = vsel %vm3753, %v3746, -inf
    %3758 = vmax.xlane.f32.xlu0 %v3757
    %v3759 = vpop.xlane.xlu0 %3758
    %v3760 = vsel %vm3753, %v3747, -inf
    %3761 = vmax.xlane.f32.xlu0 %v3760
    %v3762 = vpop.xlane.xlu0 %3761
    %v3763 = vsel %vm3753, %v3748, -inf
    %3764 = vmax.xlane.f32.xlu0 %v3763
    %v3765 = vpop.xlane.xlu0 %3764
    %v3766 = vsel %vm3753, %v3749, -inf
    %3767 = vmax.xlane.f32.xlu0 %v3766
    %v3768 = vpop.xlane.xlu0 %3767
    %v3769 = vsel %vm3753, %v3750, -inf
    %3770 = vmax.xlane.f32.xlu0 %v3769
    %v3771 = vpop.xlane.xlu0 %3770
    %v3772 = vsel %vm3753, %v3751, -inf
    %3773 = vmax.xlane.f32.xlu0 %v3772
    %v3774 = vpop.xlane.xlu0 %3773
    %v3775 = vsel %vm3753, %v3752, -inf
    %3776 = vmax.xlane.f32.xlu0 %v3775
    %v3777 = vpop.xlane.xlu0 %3776
    %v3778 = vsub.f32 %v3745, %v3756
    %v3779 = vsub.f32 %v3746, %v3759
    %v3780 = vsub.f32 %v3747, %v3762
    %v3781 = vsub.f32 %v3748, %v3765
    %v3782 = vsub.f32 %v3749, %v3768
    %v3783 = vsub.f32 %v3750, %v3771
    %v3784 = vsub.f32 %v3751, %v3774
    %v3785 = vsub.f32 %v3752, %v3777
    %v3786 = vmul.f32 %v3778, 1.442695
    %v3787 = vpow.pop %v3786
    %v3788 = vmul.f32 %v3779, 1.442695
    %v3789 = vpow.pop %v3788
    %v3790 = vmul.f32 %v3780, 1.442695
    %v3791 = vpow.pop %v3790
    %v3792 = vmul.f32 %v3781, 1.442695
    %v3793 = vpow.pop %v3792
    %v3794 = vmul.f32 %v3782, 1.442695
    %v3795 = vpow.pop %v3794
    %v3796 = vmul.f32 %v3783, 1.442695
    %v3797 = vpow.pop %v3796
    %v3798 = vmul.f32 %v3784, 1.442695
    %v3799 = vpow.pop %v3798
    %v3800 = vmul.f32 %v3785, 1.442695
    %v3801 = vpow.pop %v3800
    %v3802 = vsel %vm3753, %v3787, 0.0
    %3803 = vadd.xlane.f32.xlu0 %v3802
    %v3804 = vpop.xlane.xlu0 %3803
    %v3805 = vsel %vm3753, %v3789, 0.0
    %3806 = vadd.xlane.f32.xlu0 %v3805
    %v3807 = vpop.xlane.xlu0 %3806
    %v3808 = vsel %vm3753, %v3791, 0.0
    %3809 = vadd.xlane.f32.xlu0 %v3808
    %v3810 = vpop.xlane.xlu0 %3809
    %v3811 = vsel %vm3753, %v3793, 0.0
    %3812 = vadd.xlane.f32.xlu0 %v3811
    %v3813 = vpop.xlane.xlu0 %3812
    %v3814 = vsel %vm3753, %v3795, 0.0
    %3815 = vadd.xlane.f32.xlu0 %v3814
    %v3816 = vpop.xlane.xlu0 %3815
    %v3817 = vsel %vm3753, %v3797, 0.0
    %3818 = vadd.xlane.f32.xlu0 %v3817
    %v3819 = vpop.xlane.xlu0 %3818
    %v3820 = vsel %vm3753, %v3799, 0.0
    %3821 = vadd.xlane.f32.xlu0 %v3820
    %v3822 = vpop.xlane.xlu0 %3821
    %v3823 = vsel %vm3753, %v3801, 0.0
    %3824 = vadd.xlane.f32.xlu0 %v3823
    %v3825 = vpop.xlane.xlu0 %3824
    %v3826 = vrcp.pop %v3804
    %v3827 = vrcp.pop %v3807
    %v3828 = vrcp.pop %v3810
    %v3829 = vrcp.pop %v3813
    %v3830 = vrcp.pop %v3816
    %v3831 = vrcp.pop %v3819
    %v3832 = vrcp.pop %v3822
    %v3833 = vrcp.pop %v3825
    %v3834 = vmul.f32 %v3787, %v3826
    %v3835 = vmul.f32 %v3789, %v3827
    %v3836 = vmul.f32 %v3791, %v3828
    %v3837 = vmul.f32 %v3793, %v3829
    %v3838 = vmul.f32 %v3795, %v3830
    %v3839 = vmul.f32 %v3797, %v3831
    %v3840 = vmul.f32 %v3799, %v3832
    %v3841 = vmul.f32 %v3801, %v3833
    %v3842 = vlaneseq
    %v3843 = vshrl.u32 %v3842, 7
    %v3844 = vsub.s32 0, %v3843
    %v3845 = vrot.slane %v3834, %v3844
    %3847 = vbcast.lane.b32.xlu0 %v3845, 256
    %v3848 = vpop.permute.xlu0 %3847
    %v3849 = vlaneseq
    %v3850 = vshrl.u32 %v3849, 7
    %v3851 = vsub.s32 1, %v3850
    %v3852 = vrot.slane %v3834, %v3851
    %3854 = vbcast.lane.b32.xlu0 %v3852, 256
    %v3855 = vpop.permute.xlu0 %3854
    %v3856 = vlaneseq
    %v3857 = vshrl.u32 %v3856, 7
    %v3858 = vsub.s32 2, %v3857
    %v3859 = vrot.slane %v3834, %v3858
    %3861 = vbcast.lane.b32.xlu0 %v3859, 256
    %v3862 = vpop.permute.xlu0 %3861
    %v3863 = vlaneseq
    %v3864 = vshrl.u32 %v3863, 7
    %v3865 = vsub.s32 3, %v3864
    %v3866 = vrot.slane %v3834, %v3865
    %3868 = vbcast.lane.b32.xlu0 %v3866, 256
    %v3869 = vpop.permute.xlu0 %3868
    %v3870 = vlaneseq
    %v3871 = vshrl.u32 %v3870, 7
    %v3872 = vsub.s32 4, %v3871
    %v3873 = vrot.slane %v3834, %v3872
    %3875 = vbcast.lane.b32.xlu0 %v3873, 256
    %v3876 = vpop.permute.xlu0 %3875
    %v3877 = vlaneseq
    %v3878 = vshrl.u32 %v3877, 7
    %v3879 = vsub.s32 5, %v3878
    %v3880 = vrot.slane %v3834, %v3879
    %3882 = vbcast.lane.b32.xlu0 %v3880, 256
    %v3883 = vpop.permute.xlu0 %3882
    %v3884 = vlaneseq
    %v3885 = vshrl.u32 %v3884, 7
    %v3886 = vsub.s32 6, %v3885
    %v3887 = vrot.slane %v3834, %v3886
    %3889 = vbcast.lane.b32.xlu0 %v3887, 256
    %v3890 = vpop.permute.xlu0 %3889
    %v3891 = vlaneseq
    %v3892 = vshrl.u32 %v3891, 7
    %v3893 = vsub.s32 7, %v3892
    %v3894 = vrot.slane %v3834, %v3893
    %3896 = vbcast.lane.b32.xlu0 %v3894, 256
    %v3897 = vpop.permute.xlu0 %3896
    %v3898 = vlaneseq
    %v3899 = vshrl.u32 %v3898, 7
    %v3900 = vsub.s32 0, %v3899
    %v3901 = vrot.slane %v3835, %v3900
    %3903 = vbcast.lane.b32.xlu0 %v3901, 256
    %v3904 = vpop.permute.xlu0 %3903
    %v3905 = vlaneseq
    %v3906 = vshrl.u32 %v3905, 7
    %v3907 = vsub.s32 1, %v3906
    %v3908 = vrot.slane %v3835, %v3907
    %3910 = vbcast.lane.b32.xlu0 %v3908, 256
    %v3911 = vpop.permute.xlu0 %3910
    %v3912 = vlaneseq
    %v3913 = vshrl.u32 %v3912, 7
    %v3914 = vsub.s32 2, %v3913
    %v3915 = vrot.slane %v3835, %v3914
    %3917 = vbcast.lane.b32.xlu0 %v3915, 256
    %v3918 = vpop.permute.xlu0 %3917
    %v3919 = vlaneseq
    %v3920 = vshrl.u32 %v3919, 7
    %v3921 = vsub.s32 3, %v3920
    %v3922 = vrot.slane %v3835, %v3921
    %3924 = vbcast.lane.b32.xlu0 %v3922, 256
    %v3925 = vpop.permute.xlu0 %3924
    %v3926 = vlaneseq
    %v3927 = vshrl.u32 %v3926, 7
    %v3928 = vsub.s32 4, %v3927
    %v3929 = vrot.slane %v3835, %v3928
    %3931 = vbcast.lane.b32.xlu0 %v3929, 256
    %v3932 = vpop.permute.xlu0 %3931
    %v3933 = vlaneseq
    %v3934 = vshrl.u32 %v3933, 7
    %v3935 = vsub.s32 5, %v3934
    %v3936 = vrot.slane %v3835, %v3935
    %3938 = vbcast.lane.b32.xlu0 %v3936, 256
    %v3939 = vpop.permute.xlu0 %3938
    %v3940 = vlaneseq
    %v3941 = vshrl.u32 %v3940, 7
    %v3942 = vsub.s32 6, %v3941
    %v3943 = vrot.slane %v3835, %v3942
    %3945 = vbcast.lane.b32.xlu0 %v3943, 256
    %v3946 = vpop.permute.xlu0 %3945
    %v3947 = vlaneseq
    %v3948 = vshrl.u32 %v3947, 7
    %v3949 = vsub.s32 7, %v3948
    %v3950 = vrot.slane %v3835, %v3949
    %3952 = vbcast.lane.b32.xlu0 %v3950, 256
    %v3953 = vpop.permute.xlu0 %3952
    %v3954 = vlaneseq
    %v3955 = vshrl.u32 %v3954, 7
    %v3956 = vsub.s32 0, %v3955
    %v3957 = vrot.slane %v3836, %v3956
    %3959 = vbcast.lane.b32.xlu0 %v3957, 256
    %v3960 = vpop.permute.xlu0 %3959
    %v3961 = vlaneseq
    %v3962 = vshrl.u32 %v3961, 7
    %v3963 = vsub.s32 1, %v3962
    %v3964 = vrot.slane %v3836, %v3963
    %3966 = vbcast.lane.b32.xlu0 %v3964, 256
    %v3967 = vpop.permute.xlu0 %3966
    %v3968 = vlaneseq
    %v3969 = vshrl.u32 %v3968, 7
    %v3970 = vsub.s32 2, %v3969
    %v3971 = vrot.slane %v3836, %v3970
    %3973 = vbcast.lane.b32.xlu0 %v3971, 256
    %v3974 = vpop.permute.xlu0 %3973
    %v3975 = vlaneseq
    %v3976 = vshrl.u32 %v3975, 7
    %v3977 = vsub.s32 3, %v3976
    %v3978 = vrot.slane %v3836, %v3977
    %3980 = vbcast.lane.b32.xlu0 %v3978, 256
    %v3981 = vpop.permute.xlu0 %3980
    %v3982 = vlaneseq
    %v3983 = vshrl.u32 %v3982, 7
    %v3984 = vsub.s32 4, %v3983
    %v3985 = vrot.slane %v3836, %v3984
    %3987 = vbcast.lane.b32.xlu0 %v3985, 256
    %v3988 = vpop.permute.xlu0 %3987
    %v3989 = vlaneseq
    %v3990 = vshrl.u32 %v3989, 7
    %v3991 = vsub.s32 5, %v3990
    %v3992 = vrot.slane %v3836, %v3991
    %3994 = vbcast.lane.b32.xlu0 %v3992, 256
    %v3995 = vpop.permute.xlu0 %3994
    %v3996 = vlaneseq
    %v3997 = vshrl.u32 %v3996, 7
    %v3998 = vsub.s32 6, %v3997
    %v3999 = vrot.slane %v3836, %v3998
    %4001 = vbcast.lane.b32.xlu0 %v3999, 256
    %v4002 = vpop.permute.xlu0 %4001
    %v4003 = vlaneseq
    %v4004 = vshrl.u32 %v4003, 7
    %v4005 = vsub.s32 7, %v4004
    %v4006 = vrot.slane %v3836, %v4005
    %4008 = vbcast.lane.b32.xlu0 %v4006, 256
    %v4009 = vpop.permute.xlu0 %4008
    %v4010 = vlaneseq
    %v4011 = vshrl.u32 %v4010, 7
    %v4012 = vsub.s32 0, %v4011
    %v4013 = vrot.slane %v3837, %v4012
    %4015 = vbcast.lane.b32.xlu0 %v4013, 256
    %v4016 = vpop.permute.xlu0 %4015
    %v4017 = vlaneseq
    %v4018 = vshrl.u32 %v4017, 7
    %v4019 = vsub.s32 1, %v4018
    %v4020 = vrot.slane %v3837, %v4019
    %4022 = vbcast.lane.b32.xlu0 %v4020, 256
    %v4023 = vpop.permute.xlu0 %4022
    %v4024 = vlaneseq
    %v4025 = vshrl.u32 %v4024, 7
    %v4026 = vsub.s32 2, %v4025
    %v4027 = vrot.slane %v3837, %v4026
    %4029 = vbcast.lane.b32.xlu0 %v4027, 256
    %v4030 = vpop.permute.xlu0 %4029
    %v4031 = vlaneseq
    %v4032 = vshrl.u32 %v4031, 7
    %v4033 = vsub.s32 3, %v4032
    %v4034 = vrot.slane %v3837, %v4033
    %4036 = vbcast.lane.b32.xlu0 %v4034, 256
    %v4037 = vpop.permute.xlu0 %4036
    %v4038 = vlaneseq
    %v4039 = vshrl.u32 %v4038, 7
    %v4040 = vsub.s32 4, %v4039
    %v4041 = vrot.slane %v3837, %v4040
    %4043 = vbcast.lane.b32.xlu0 %v4041, 256
    %v4044 = vpop.permute.xlu0 %4043
    %v4045 = vlaneseq
    %v4046 = vshrl.u32 %v4045, 7
    %v4047 = vsub.s32 5, %v4046
    %v4048 = vrot.slane %v3837, %v4047
    %4050 = vbcast.lane.b32.xlu0 %v4048, 256
    %v4051 = vpop.permute.xlu0 %4050
    %v4052 = vlaneseq
    %v4053 = vshrl.u32 %v4052, 7
    %v4054 = vsub.s32 6, %v4053
    %v4055 = vrot.slane %v3837, %v4054
    %4057 = vbcast.lane.b32.xlu0 %v4055, 256
    %v4058 = vpop.permute.xlu0 %4057
    %v4059 = vlaneseq
    %v4060 = vshrl.u32 %v4059, 7
    %v4061 = vsub.s32 7, %v4060
    %v4062 = vrot.slane %v3837, %v4061
    %4064 = vbcast.lane.b32.xlu0 %v4062, 256
    %v4065 = vpop.permute.xlu0 %4064
    %v4066 = vlaneseq
    %v4067 = vshrl.u32 %v4066, 7
    %v4068 = vsub.s32 0, %v4067
    %v4069 = vrot.slane %v3838, %v4068
    %4071 = vbcast.lane.b32.xlu0 %v4069, 256
    %v4072 = vpop.permute.xlu0 %4071
    %v4073 = vlaneseq
    %v4074 = vshrl.u32 %v4073, 7
    %v4075 = vsub.s32 1, %v4074
    %v4076 = vrot.slane %v3838, %v4075
    %4078 = vbcast.lane.b32.xlu0 %v4076, 256
    %v4079 = vpop.permute.xlu0 %4078
    %v4080 = vlaneseq
    %v4081 = vshrl.u32 %v4080, 7
    %v4082 = vsub.s32 2, %v4081
    %v4083 = vrot.slane %v3838, %v4082
    %4085 = vbcast.lane.b32.xlu0 %v4083, 256
    %v4086 = vpop.permute.xlu0 %4085
    %v4087 = vlaneseq
    %v4088 = vshrl.u32 %v4087, 7
    %v4089 = vsub.s32 3, %v4088
    %v4090 = vrot.slane %v3838, %v4089
    %4092 = vbcast.lane.b32.xlu0 %v4090, 256
    %v4093 = vpop.permute.xlu0 %4092
    %v4094 = vlaneseq
    %v4095 = vshrl.u32 %v4094, 7
    %v4096 = vsub.s32 4, %v4095
    %v4097 = vrot.slane %v3838, %v4096
    %4099 = vbcast.lane.b32.xlu0 %v4097, 256
    %v4100 = vpop.permute.xlu0 %4099
    %v4101 = vlaneseq
    %v4102 = vshrl.u32 %v4101, 7
    %v4103 = vsub.s32 5, %v4102
    %v4104 = vrot.slane %v3838, %v4103
    %4106 = vbcast.lane.b32.xlu0 %v4104, 256
    %v4107 = vpop.permute.xlu0 %4106
    %v4108 = vlaneseq
    %v4109 = vshrl.u32 %v4108, 7
    %v4110 = vsub.s32 6, %v4109
    %v4111 = vrot.slane %v3838, %v4110
    %4113 = vbcast.lane.b32.xlu0 %v4111, 256
    %v4114 = vpop.permute.xlu0 %4113
    %v4115 = vlaneseq
    %v4116 = vshrl.u32 %v4115, 7
    %v4117 = vsub.s32 7, %v4116
    %v4118 = vrot.slane %v3838, %v4117
    %4120 = vbcast.lane.b32.xlu0 %v4118, 256
    %v4121 = vpop.permute.xlu0 %4120
    %v4122 = vlaneseq
    %v4123 = vshrl.u32 %v4122, 7
    %v4124 = vsub.s32 0, %v4123
    %v4125 = vrot.slane %v3839, %v4124
    %4127 = vbcast.lane.b32.xlu0 %v4125, 256
    %v4128 = vpop.permute.xlu0 %4127
    %v4129 = vlaneseq
    %v4130 = vshrl.u32 %v4129, 7
    %v4131 = vsub.s32 1, %v4130
    %v4132 = vrot.slane %v3839, %v4131
    %4134 = vbcast.lane.b32.xlu0 %v4132, 256
    %v4135 = vpop.permute.xlu0 %4134
    %v4136 = vlaneseq
    %v4137 = vshrl.u32 %v4136, 7
    %v4138 = vsub.s32 2, %v4137
    %v4139 = vrot.slane %v3839, %v4138
    %4141 = vbcast.lane.b32.xlu0 %v4139, 256
    %v4142 = vpop.permute.xlu0 %4141
    %v4143 = vlaneseq
    %v4144 = vshrl.u32 %v4143, 7
    %v4145 = vsub.s32 3, %v4144
    %v4146 = vrot.slane %v3839, %v4145
    %4148 = vbcast.lane.b32.xlu0 %v4146, 256
    %v4149 = vpop.permute.xlu0 %4148
    %v4150 = vlaneseq
    %v4151 = vshrl.u32 %v4150, 7
    %v4152 = vsub.s32 4, %v4151
    %v4153 = vrot.slane %v3839, %v4152
    %4155 = vbcast.lane.b32.xlu0 %v4153, 256
    %v4156 = vpop.permute.xlu0 %4155
    %v4157 = vlaneseq
    %v4158 = vshrl.u32 %v4157, 7
    %v4159 = vsub.s32 5, %v4158
    %v4160 = vrot.slane %v3839, %v4159
    %4162 = vbcast.lane.b32.xlu0 %v4160, 256
    %v4163 = vpop.permute.xlu0 %4162
    %v4164 = vlaneseq
    %v4165 = vshrl.u32 %v4164, 7
    %v4166 = vsub.s32 6, %v4165
    %v4167 = vrot.slane %v3839, %v4166
    %4169 = vbcast.lane.b32.xlu0 %v4167, 256
    %v4170 = vpop.permute.xlu0 %4169
    %v4171 = vlaneseq
    %v4172 = vshrl.u32 %v4171, 7
    %v4173 = vsub.s32 7, %v4172
    %v4174 = vrot.slane %v3839, %v4173
    %4176 = vbcast.lane.b32.xlu0 %v4174, 256
    %v4177 = vpop.permute.xlu0 %4176
    %v4178 = vlaneseq
    %v4179 = vshrl.u32 %v4178, 7
    %v4180 = vsub.s32 0, %v4179
    %v4181 = vrot.slane %v3840, %v4180
    %4183 = vbcast.lane.b32.xlu0 %v4181, 256
    %v4184 = vpop.permute.xlu0 %4183
    %v4185 = vlaneseq
    %v4186 = vshrl.u32 %v4185, 7
    %v4187 = vsub.s32 1, %v4186
    %v4188 = vrot.slane %v3840, %v4187
    %4190 = vbcast.lane.b32.xlu0 %v4188, 256
    %v4191 = vpop.permute.xlu0 %4190
    %v4192 = vlaneseq
    %v4193 = vshrl.u32 %v4192, 7
    %v4194 = vsub.s32 2, %v4193
    %v4195 = vrot.slane %v3840, %v4194
    %4197 = vbcast.lane.b32.xlu0 %v4195, 256
    %v4198 = vpop.permute.xlu0 %4197
    %v4199 = vlaneseq
    %v4200 = vshrl.u32 %v4199, 7
    %v4201 = vsub.s32 3, %v4200
    %v4202 = vrot.slane %v3840, %v4201
    %4204 = vbcast.lane.b32.xlu0 %v4202, 256
    %v4205 = vpop.permute.xlu0 %4204
    %v4206 = vlaneseq
    %v4207 = vshrl.u32 %v4206, 7
    %v4208 = vsub.s32 4, %v4207
    %v4209 = vrot.slane %v3840, %v4208
    %4211 = vbcast.lane.b32.xlu0 %v4209, 256
    %v4212 = vpop.permute.xlu0 %4211
    %v4213 = vlaneseq
    %v4214 = vshrl.u32 %v4213, 7
    %v4215 = vsub.s32 5, %v4214
    %v4216 = vrot.slane %v3840, %v4215
    %4218 = vbcast.lane.b32.xlu0 %v4216, 256
    %v4219 = vpop.permute.xlu0 %4218
    %v4220 = vlaneseq
    %v4221 = vshrl.u32 %v4220, 7
    %v4222 = vsub.s32 6, %v4221
    %v4223 = vrot.slane %v3840, %v4222
    %4225 = vbcast.lane.b32.xlu0 %v4223, 256
    %v4226 = vpop.permute.xlu0 %4225
    %v4227 = vlaneseq
    %v4228 = vshrl.u32 %v4227, 7
    %v4229 = vsub.s32 7, %v4228
    %v4230 = vrot.slane %v3840, %v4229
    %4232 = vbcast.lane.b32.xlu0 %v4230, 256
    %v4233 = vpop.permute.xlu0 %4232
    %v4234 = vlaneseq
    %v4235 = vshrl.u32 %v4234, 7
    %v4236 = vsub.s32 0, %v4235
    %v4237 = vrot.slane %v3841, %v4236
    %4239 = vbcast.lane.b32.xlu0 %v4237, 256
    %v4240 = vpop.permute.xlu0 %4239
    %v4241 = vlaneseq
    %v4242 = vshrl.u32 %v4241, 7
    %v4243 = vsub.s32 1, %v4242
    %v4244 = vrot.slane %v3841, %v4243
    %4246 = vbcast.lane.b32.xlu0 %v4244, 256
    %v4247 = vpop.permute.xlu0 %4246
    %v4248 = vlaneseq
    %v4249 = vshrl.u32 %v4248, 7
    %v4250 = vsub.s32 2, %v4249
    %v4251 = vrot.slane %v3841, %v4250
    %4253 = vbcast.lane.b32.xlu0 %v4251, 256
    %v4254 = vpop.permute.xlu0 %4253
    %v4255 = vlaneseq
    %v4256 = vshrl.u32 %v4255, 7
    %v4257 = vsub.s32 3, %v4256
    %v4258 = vrot.slane %v3841, %v4257
    %4260 = vbcast.lane.b32.xlu0 %v4258, 256
    %v4261 = vpop.permute.xlu0 %4260
    %v4262 = vlaneseq
    %v4263 = vshrl.u32 %v4262, 7
    %v4264 = vsub.s32 4, %v4263
    %v4265 = vrot.slane %v3841, %v4264
    %4267 = vbcast.lane.b32.xlu0 %v4265, 256
    %v4268 = vpop.permute.xlu0 %4267
    %v4269 = vlaneseq
    %v4270 = vshrl.u32 %v4269, 7
    %v4271 = vsub.s32 5, %v4270
    %v4272 = vrot.slane %v3841, %v4271
    %4274 = vbcast.lane.b32.xlu0 %v4272, 256
    %v4275 = vpop.permute.xlu0 %4274
    %v4276 = vlaneseq
    %v4277 = vshrl.u32 %v4276, 7
    %v4278 = vsub.s32 6, %v4277
    %v4279 = vrot.slane %v3841, %v4278
    %4281 = vbcast.lane.b32.xlu0 %v4279, 256
    %v4282 = vpop.permute.xlu0 %4281
    %v4283 = vlaneseq
    %v4284 = vshrl.u32 %v4283, 7
    %v4285 = vsub.s32 7, %v4284
    %v4286 = vrot.slane %v3841, %v4285
    %4288 = vbcast.lane.b32.xlu0 %v4286, 256
    %v4289 = vpop.permute.xlu0 %4288
    %v4290 = vmul.f32 %v3848, %v2425
    %v4291 = vmul.f32 %v3855, %v2426
    %v4292 = vmul.f32 %v3862, %v2427
    %v4293 = vmul.f32 %v3869, %v2428
    %v4294 = vmul.f32 %v3876, %v2429
    %v4295 = vmul.f32 %v3883, %v2430
    %v4296 = vmul.f32 %v3890, %v2431
    %v4297 = vmul.f32 %v3897, %v2432
    %v4298 = vmul.f32 %v3904, %v2425
    %v4299 = vmul.f32 %v3911, %v2426
    %v4300 = vmul.f32 %v3918, %v2427
    %v4301 = vmul.f32 %v3925, %v2428
    %v4302 = vmul.f32 %v3932, %v2429
    %v4303 = vmul.f32 %v3939, %v2430
    %v4304 = vmul.f32 %v3946, %v2431
    %v4305 = vmul.f32 %v3953, %v2432
    %v4306 = vmul.f32 %v3960, %v2425
    %v4307 = vmul.f32 %v3967, %v2426
    %v4308 = vmul.f32 %v3974, %v2427
    %v4309 = vmul.f32 %v3981, %v2428
    %v4310 = vmul.f32 %v3988, %v2429
    %v4311 = vmul.f32 %v3995, %v2430
    %v4312 = vmul.f32 %v4002, %v2431
    %v4313 = vmul.f32 %v4009, %v2432
    %v4314 = vmul.f32 %v4016, %v2425
    %v4315 = vmul.f32 %v4023, %v2426
    %v4316 = vmul.f32 %v4030, %v2427
    %v4317 = vmul.f32 %v4037, %v2428
    %v4318 = vmul.f32 %v4044, %v2429
    %v4319 = vmul.f32 %v4051, %v2430
    %v4320 = vmul.f32 %v4058, %v2431
    %v4321 = vmul.f32 %v4065, %v2432
    %v4322 = vmul.f32 %v4072, %v2425
    %v4323 = vmul.f32 %v4079, %v2426
    %v4324 = vmul.f32 %v4086, %v2427
    %v4325 = vmul.f32 %v4093, %v2428
    %v4326 = vmul.f32 %v4100, %v2429
    %v4327 = vmul.f32 %v4107, %v2430
    %v4328 = vmul.f32 %v4114, %v2431
    %v4329 = vmul.f32 %v4121, %v2432
    %v4330 = vmul.f32 %v4128, %v2425
    %v4331 = vmul.f32 %v4135, %v2426
    %v4332 = vmul.f32 %v4142, %v2427
    %v4333 = vmul.f32 %v4149, %v2428
    %v4334 = vmul.f32 %v4156, %v2429
    %v4335 = vmul.f32 %v4163, %v2430
    %v4336 = vmul.f32 %v4170, %v2431
    %v4337 = vmul.f32 %v4177, %v2432
    %v4338 = vmul.f32 %v4184, %v2425
    %v4339 = vmul.f32 %v4191, %v2426
    %v4340 = vmul.f32 %v4198, %v2427
    %v4341 = vmul.f32 %v4205, %v2428
    %v4342 = vmul.f32 %v4212, %v2429
    %v4343 = vmul.f32 %v4219, %v2430
    %v4344 = vmul.f32 %v4226, %v2431
    %v4345 = vmul.f32 %v4233, %v2432
    %v4346 = vmul.f32 %v4240, %v2425
    %v4347 = vmul.f32 %v4247, %v2426
    %v4348 = vmul.f32 %v4254, %v2427
    %v4349 = vmul.f32 %v4261, %v2428
    %v4350 = vmul.f32 %v4268, %v2429
    %v4351 = vmul.f32 %v4275, %v2430
    %v4352 = vmul.f32 %v4282, %v2431
    %v4353 = vmul.f32 %v4289, %v2432
    %v4354 = vrot.slane %v4290, 4
    %v4355 = vadd.f32 %v4290, %v4354
    %v4356 = vrot.slane %v4355, 2
    %v4357 = vadd.f32 %v4355, %v4356
    %v4358 = vrot.slane %v4357, 1
    %v4359 = vadd.f32 %v4357, %v4358
    %v4360 = vrot.slane %v4291, 4
    %v4361 = vadd.f32 %v4291, %v4360
    %v4362 = vrot.slane %v4361, 2
    %v4363 = vadd.f32 %v4361, %v4362
    %v4364 = vrot.slane %v4363, 1
    %v4365 = vadd.f32 %v4363, %v4364
    %v4366 = vrot.slane %v4292, 4
    %v4367 = vadd.f32 %v4292, %v4366
    %v4368 = vrot.slane %v4367, 2
    %v4369 = vadd.f32 %v4367, %v4368
    %v4370 = vrot.slane %v4369, 1
    %v4371 = vadd.f32 %v4369, %v4370
    %v4372 = vrot.slane %v4293, 4
    %v4373 = vadd.f32 %v4293, %v4372
    %v4374 = vrot.slane %v4373, 2
    %v4375 = vadd.f32 %v4373, %v4374
    %v4376 = vrot.slane %v4375, 1
    %v4377 = vadd.f32 %v4375, %v4376
    %v4378 = vrot.slane %v4294, 4
    %v4379 = vadd.f32 %v4294, %v4378
    %v4380 = vrot.slane %v4379, 2
    %v4381 = vadd.f32 %v4379, %v4380
    %v4382 = vrot.slane %v4381, 1
    %v4383 = vadd.f32 %v4381, %v4382
    %v4384 = vrot.slane %v4295, 4
    %v4385 = vadd.f32 %v4295, %v4384
    %v4386 = vrot.slane %v4385, 2
    %v4387 = vadd.f32 %v4385, %v4386
    %v4388 = vrot.slane %v4387, 1
    %v4389 = vadd.f32 %v4387, %v4388
    %v4390 = vrot.slane %v4296, 4
    %v4391 = vadd.f32 %v4296, %v4390
    %v4392 = vrot.slane %v4391, 2
    %v4393 = vadd.f32 %v4391, %v4392
    %v4394 = vrot.slane %v4393, 1
    %v4395 = vadd.f32 %v4393, %v4394
    %v4396 = vrot.slane %v4297, 4
    %v4397 = vadd.f32 %v4297, %v4396
    %v4398 = vrot.slane %v4397, 2
    %v4399 = vadd.f32 %v4397, %v4398
    %v4400 = vrot.slane %v4399, 1
    %v4401 = vadd.f32 %v4399, %v4400
    %v4402 = vrot.slane %v4298, 4
    %v4403 = vadd.f32 %v4298, %v4402
    %v4404 = vrot.slane %v4403, 2
    %v4405 = vadd.f32 %v4403, %v4404
    %v4406 = vrot.slane %v4405, 1
    %v4407 = vadd.f32 %v4405, %v4406
    %v4408 = vrot.slane %v4299, 4
    %v4409 = vadd.f32 %v4299, %v4408
    %v4410 = vrot.slane %v4409, 2
    %v4411 = vadd.f32 %v4409, %v4410
    %v4412 = vrot.slane %v4411, 1
    %v4413 = vadd.f32 %v4411, %v4412
    %v4414 = vrot.slane %v4300, 4
    %v4415 = vadd.f32 %v4300, %v4414
    %v4416 = vrot.slane %v4415, 2
    %v4417 = vadd.f32 %v4415, %v4416
    %v4418 = vrot.slane %v4417, 1
    %v4419 = vadd.f32 %v4417, %v4418
    %v4420 = vrot.slane %v4301, 4
    %v4421 = vadd.f32 %v4301, %v4420
    %v4422 = vrot.slane %v4421, 2
    %v4423 = vadd.f32 %v4421, %v4422
    %v4424 = vrot.slane %v4423, 1
    %v4425 = vadd.f32 %v4423, %v4424
    %v4426 = vrot.slane %v4302, 4
    %v4427 = vadd.f32 %v4302, %v4426
    %v4428 = vrot.slane %v4427, 2
    %v4429 = vadd.f32 %v4427, %v4428
    %v4430 = vrot.slane %v4429, 1
    %v4431 = vadd.f32 %v4429, %v4430
    %v4432 = vrot.slane %v4303, 4
    %v4433 = vadd.f32 %v4303, %v4432
    %v4434 = vrot.slane %v4433, 2
    %v4435 = vadd.f32 %v4433, %v4434
    %v4436 = vrot.slane %v4435, 1
    %v4437 = vadd.f32 %v4435, %v4436
    %v4438 = vrot.slane %v4304, 4
    %v4439 = vadd.f32 %v4304, %v4438
    %v4440 = vrot.slane %v4439, 2
    %v4441 = vadd.f32 %v4439, %v4440
    %v4442 = vrot.slane %v4441, 1
    %v4443 = vadd.f32 %v4441, %v4442
    %v4444 = vrot.slane %v4305, 4
    %v4445 = vadd.f32 %v4305, %v4444
    %v4446 = vrot.slane %v4445, 2
    %v4447 = vadd.f32 %v4445, %v4446
    %v4448 = vrot.slane %v4447, 1
    %v4449 = vadd.f32 %v4447, %v4448
    %v4450 = vrot.slane %v4306, 4
    %v4451 = vadd.f32 %v4306, %v4450
    %v4452 = vrot.slane %v4451, 2
    %v4453 = vadd.f32 %v4451, %v4452
    %v4454 = vrot.slane %v4453, 1
    %v4455 = vadd.f32 %v4453, %v4454
    %v4456 = vrot.slane %v4307, 4
    %v4457 = vadd.f32 %v4307, %v4456
    %v4458 = vrot.slane %v4457, 2
    %v4459 = vadd.f32 %v4457, %v4458
    %v4460 = vrot.slane %v4459, 1
    %v4461 = vadd.f32 %v4459, %v4460
    %v4462 = vrot.slane %v4308, 4
    %v4463 = vadd.f32 %v4308, %v4462
    %v4464 = vrot.slane %v4463, 2
    %v4465 = vadd.f32 %v4463, %v4464
    %v4466 = vrot.slane %v4465, 1
    %v4467 = vadd.f32 %v4465, %v4466
    %v4468 = vrot.slane %v4309, 4
    %v4469 = vadd.f32 %v4309, %v4468
    %v4470 = vrot.slane %v4469, 2
    %v4471 = vadd.f32 %v4469, %v4470
    %v4472 = vrot.slane %v4471, 1
    %v4473 = vadd.f32 %v4471, %v4472
    %v4474 = vrot.slane %v4310, 4
    %v4475 = vadd.f32 %v4310, %v4474
    %v4476 = vrot.slane %v4475, 2
    %v4477 = vadd.f32 %v4475, %v4476
    %v4478 = vrot.slane %v4477, 1
    %v4479 = vadd.f32 %v4477, %v4478
    %v4480 = vrot.slane %v4311, 4
    %v4481 = vadd.f32 %v4311, %v4480
    %v4482 = vrot.slane %v4481, 2
    %v4483 = vadd.f32 %v4481, %v4482
    %v4484 = vrot.slane %v4483, 1
    %v4485 = vadd.f32 %v4483, %v4484
    %v4486 = vrot.slane %v4312, 4
    %v4487 = vadd.f32 %v4312, %v4486
    %v4488 = vrot.slane %v4487, 2
    %v4489 = vadd.f32 %v4487, %v4488
    %v4490 = vrot.slane %v4489, 1
    %v4491 = vadd.f32 %v4489, %v4490
    %v4492 = vrot.slane %v4313, 4
    %v4493 = vadd.f32 %v4313, %v4492
    %v4494 = vrot.slane %v4493, 2
    %v4495 = vadd.f32 %v4493, %v4494
    %v4496 = vrot.slane %v4495, 1
    %v4497 = vadd.f32 %v4495, %v4496
    %v4498 = vrot.slane %v4314, 4
    %v4499 = vadd.f32 %v4314, %v4498
    %v4500 = vrot.slane %v4499, 2
    %v4501 = vadd.f32 %v4499, %v4500
    %v4502 = vrot.slane %v4501, 1
    %v4503 = vadd.f32 %v4501, %v4502
    %v4504 = vrot.slane %v4315, 4
    %v4505 = vadd.f32 %v4315, %v4504
    %v4506 = vrot.slane %v4505, 2
    %v4507 = vadd.f32 %v4505, %v4506
    %v4508 = vrot.slane %v4507, 1
    %v4509 = vadd.f32 %v4507, %v4508
    %v4510 = vrot.slane %v4316, 4
    %v4511 = vadd.f32 %v4316, %v4510
    %v4512 = vrot.slane %v4511, 2
    %v4513 = vadd.f32 %v4511, %v4512
    %v4514 = vrot.slane %v4513, 1
    %v4515 = vadd.f32 %v4513, %v4514
    %v4516 = vrot.slane %v4317, 4
    %v4517 = vadd.f32 %v4317, %v4516
    %v4518 = vrot.slane %v4517, 2
    %v4519 = vadd.f32 %v4517, %v4518
    %v4520 = vrot.slane %v4519, 1
    %v4521 = vadd.f32 %v4519, %v4520
    %v4522 = vrot.slane %v4318, 4
    %v4523 = vadd.f32 %v4318, %v4522
    %v4524 = vrot.slane %v4523, 2
    %v4525 = vadd.f32 %v4523, %v4524
    %v4526 = vrot.slane %v4525, 1
    %v4527 = vadd.f32 %v4525, %v4526
    %v4528 = vrot.slane %v4319, 4
    %v4529 = vadd.f32 %v4319, %v4528
    %v4530 = vrot.slane %v4529, 2
    %v4531 = vadd.f32 %v4529, %v4530
    %v4532 = vrot.slane %v4531, 1
    %v4533 = vadd.f32 %v4531, %v4532
    %v4534 = vrot.slane %v4320, 4
    %v4535 = vadd.f32 %v4320, %v4534
    %v4536 = vrot.slane %v4535, 2
    %v4537 = vadd.f32 %v4535, %v4536
    %v4538 = vrot.slane %v4537, 1
    %v4539 = vadd.f32 %v4537, %v4538
    %v4540 = vrot.slane %v4321, 4
    %v4541 = vadd.f32 %v4321, %v4540
    %v4542 = vrot.slane %v4541, 2
    %v4543 = vadd.f32 %v4541, %v4542
    %v4544 = vrot.slane %v4543, 1
    %v4545 = vadd.f32 %v4543, %v4544
    %v4546 = vrot.slane %v4322, 4
    %v4547 = vadd.f32 %v4322, %v4546
    %v4548 = vrot.slane %v4547, 2
    %v4549 = vadd.f32 %v4547, %v4548
    %v4550 = vrot.slane %v4549, 1
    %v4551 = vadd.f32 %v4549, %v4550
    %v4552 = vrot.slane %v4323, 4
    %v4553 = vadd.f32 %v4323, %v4552
    %v4554 = vrot.slane %v4553, 2
    %v4555 = vadd.f32 %v4553, %v4554
    %v4556 = vrot.slane %v4555, 1
    %v4557 = vadd.f32 %v4555, %v4556
    %v4558 = vrot.slane %v4324, 4
    %v4559 = vadd.f32 %v4324, %v4558
    %v4560 = vrot.slane %v4559, 2
    %v4561 = vadd.f32 %v4559, %v4560
    %v4562 = vrot.slane %v4561, 1
    %v4563 = vadd.f32 %v4561, %v4562
    %v4564 = vrot.slane %v4325, 4
    %v4565 = vadd.f32 %v4325, %v4564
    %v4566 = vrot.slane %v4565, 2
    %v4567 = vadd.f32 %v4565, %v4566
    %v4568 = vrot.slane %v4567, 1
    %v4569 = vadd.f32 %v4567, %v4568
    %v4570 = vrot.slane %v4326, 4
    %v4571 = vadd.f32 %v4326, %v4570
    %v4572 = vrot.slane %v4571, 2
    %v4573 = vadd.f32 %v4571, %v4572
    %v4574 = vrot.slane %v4573, 1
    %v4575 = vadd.f32 %v4573, %v4574
    %v4576 = vrot.slane %v4327, 4
    %v4577 = vadd.f32 %v4327, %v4576
    %v4578 = vrot.slane %v4577, 2
    %v4579 = vadd.f32 %v4577, %v4578
    %v4580 = vrot.slane %v4579, 1
    %v4581 = vadd.f32 %v4579, %v4580
    %v4582 = vrot.slane %v4328, 4
    %v4583 = vadd.f32 %v4328, %v4582
    %v4584 = vrot.slane %v4583, 2
    %v4585 = vadd.f32 %v4583, %v4584
    %v4586 = vrot.slane %v4585, 1
    %v4587 = vadd.f32 %v4585, %v4586
    %v4588 = vrot.slane %v4329, 4
    %v4589 = vadd.f32 %v4329, %v4588
    %v4590 = vrot.slane %v4589, 2
    %v4591 = vadd.f32 %v4589, %v4590
    %v4592 = vrot.slane %v4591, 1
    %v4593 = vadd.f32 %v4591, %v4592
    %v4594 = vrot.slane %v4330, 4
    %v4595 = vadd.f32 %v4330, %v4594
    %v4596 = vrot.slane %v4595, 2
    %v4597 = vadd.f32 %v4595, %v4596
    %v4598 = vrot.slane %v4597, 1
    %v4599 = vadd.f32 %v4597, %v4598
    %v4600 = vrot.slane %v4331, 4
    %v4601 = vadd.f32 %v4331, %v4600
    %v4602 = vrot.slane %v4601, 2
    %v4603 = vadd.f32 %v4601, %v4602
    %v4604 = vrot.slane %v4603, 1
    %v4605 = vadd.f32 %v4603, %v4604
    %v4606 = vrot.slane %v4332, 4
    %v4607 = vadd.f32 %v4332, %v4606
    %v4608 = vrot.slane %v4607, 2
    %v4609 = vadd.f32 %v4607, %v4608
    %v4610 = vrot.slane %v4609, 1
    %v4611 = vadd.f32 %v4609, %v4610
    %v4612 = vrot.slane %v4333, 4
    %v4613 = vadd.f32 %v4333, %v4612
    %v4614 = vrot.slane %v4613, 2
    %v4615 = vadd.f32 %v4613, %v4614
    %v4616 = vrot.slane %v4615, 1
    %v4617 = vadd.f32 %v4615, %v4616
    %v4618 = vrot.slane %v4334, 4
    %v4619 = vadd.f32 %v4334, %v4618
    %v4620 = vrot.slane %v4619, 2
    %v4621 = vadd.f32 %v4619, %v4620
    %v4622 = vrot.slane %v4621, 1
    %v4623 = vadd.f32 %v4621, %v4622
    %v4624 = vrot.slane %v4335, 4
    %v4625 = vadd.f32 %v4335, %v4624
    %v4626 = vrot.slane %v4625, 2
    %v4627 = vadd.f32 %v4625, %v4626
    %v4628 = vrot.slane %v4627, 1
    %v4629 = vadd.f32 %v4627, %v4628
    %v4630 = vrot.slane %v4336, 4
    %v4631 = vadd.f32 %v4336, %v4630
    %v4632 = vrot.slane %v4631, 2
    %v4633 = vadd.f32 %v4631, %v4632
    %v4634 = vrot.slane %v4633, 1
    %v4635 = vadd.f32 %v4633, %v4634
    %v4636 = vrot.slane %v4337, 4
    %v4637 = vadd.f32 %v4337, %v4636
    %v4638 = vrot.slane %v4637, 2
    %v4639 = vadd.f32 %v4637, %v4638
    %v4640 = vrot.slane %v4639, 1
    %v4641 = vadd.f32 %v4639, %v4640
    %v4642 = vrot.slane %v4338, 4
    %v4643 = vadd.f32 %v4338, %v4642
    %v4644 = vrot.slane %v4643, 2
    %v4645 = vadd.f32 %v4643, %v4644
    %v4646 = vrot.slane %v4645, 1
    %v4647 = vadd.f32 %v4645, %v4646
    %v4648 = vrot.slane %v4339, 4
    %v4649 = vadd.f32 %v4339, %v4648
    %v4650 = vrot.slane %v4649, 2
    %v4651 = vadd.f32 %v4649, %v4650
    %v4652 = vrot.slane %v4651, 1
    %v4653 = vadd.f32 %v4651, %v4652
    %v4654 = vrot.slane %v4340, 4
    %v4655 = vadd.f32 %v4340, %v4654
    %v4656 = vrot.slane %v4655, 2
    %v4657 = vadd.f32 %v4655, %v4656
    %v4658 = vrot.slane %v4657, 1
    %v4659 = vadd.f32 %v4657, %v4658
    %v4660 = vrot.slane %v4341, 4
    %v4661 = vadd.f32 %v4341, %v4660
    %v4662 = vrot.slane %v4661, 2
    %v4663 = vadd.f32 %v4661, %v4662
    %v4664 = vrot.slane %v4663, 1
    %v4665 = vadd.f32 %v4663, %v4664
    %v4666 = vrot.slane %v4342, 4
    %v4667 = vadd.f32 %v4342, %v4666
    %v4668 = vrot.slane %v4667, 2
    %v4669 = vadd.f32 %v4667, %v4668
    %v4670 = vrot.slane %v4669, 1
    %v4671 = vadd.f32 %v4669, %v4670
    %v4672 = vrot.slane %v4343, 4
    %v4673 = vadd.f32 %v4343, %v4672
    %v4674 = vrot.slane %v4673, 2
    %v4675 = vadd.f32 %v4673, %v4674
    %v4676 = vrot.slane %v4675, 1
    %v4677 = vadd.f32 %v4675, %v4676
    %v4678 = vrot.slane %v4344, 4
    %v4679 = vadd.f32 %v4344, %v4678
    %v4680 = vrot.slane %v4679, 2
    %v4681 = vadd.f32 %v4679, %v4680
    %v4682 = vrot.slane %v4681, 1
    %v4683 = vadd.f32 %v4681, %v4682
    %v4684 = vrot.slane %v4345, 4
    %v4685 = vadd.f32 %v4345, %v4684
    %v4686 = vrot.slane %v4685, 2
    %v4687 = vadd.f32 %v4685, %v4686
    %v4688 = vrot.slane %v4687, 1
    %v4689 = vadd.f32 %v4687, %v4688
    %v4690 = vrot.slane %v4346, 4
    %v4691 = vadd.f32 %v4346, %v4690
    %v4692 = vrot.slane %v4691, 2
    %v4693 = vadd.f32 %v4691, %v4692
    %v4694 = vrot.slane %v4693, 1
    %v4695 = vadd.f32 %v4693, %v4694
    %v4696 = vrot.slane %v4347, 4
    %v4697 = vadd.f32 %v4347, %v4696
    %v4698 = vrot.slane %v4697, 2
    %v4699 = vadd.f32 %v4697, %v4698
    %v4700 = vrot.slane %v4699, 1
    %v4701 = vadd.f32 %v4699, %v4700
    %v4702 = vrot.slane %v4348, 4
    %v4703 = vadd.f32 %v4348, %v4702
    %v4704 = vrot.slane %v4703, 2
    %v4705 = vadd.f32 %v4703, %v4704
    %v4706 = vrot.slane %v4705, 1
    %v4707 = vadd.f32 %v4705, %v4706
    %v4708 = vrot.slane %v4349, 4
    %v4709 = vadd.f32 %v4349, %v4708
    %v4710 = vrot.slane %v4709, 2
    %v4711 = vadd.f32 %v4709, %v4710
    %v4712 = vrot.slane %v4711, 1
    %v4713 = vadd.f32 %v4711, %v4712
    %v4714 = vrot.slane %v4350, 4
    %v4715 = vadd.f32 %v4350, %v4714
    %v4716 = vrot.slane %v4715, 2
    %v4717 = vadd.f32 %v4715, %v4716
    %v4718 = vrot.slane %v4717, 1
    %v4719 = vadd.f32 %v4717, %v4718
    %v4720 = vrot.slane %v4351, 4
    %v4721 = vadd.f32 %v4351, %v4720
    %v4722 = vrot.slane %v4721, 2
    %v4723 = vadd.f32 %v4721, %v4722
    %v4724 = vrot.slane %v4723, 1
    %v4725 = vadd.f32 %v4723, %v4724
    %v4726 = vrot.slane %v4352, 4
    %v4727 = vadd.f32 %v4352, %v4726
    %v4728 = vrot.slane %v4727, 2
    %v4729 = vadd.f32 %v4727, %v4728
    %v4730 = vrot.slane %v4729, 1
    %v4731 = vadd.f32 %v4729, %v4730
    %v4732 = vrot.slane %v4353, 4
    %v4733 = vadd.f32 %v4353, %v4732
    %v4734 = vrot.slane %v4733, 2
    %v4735 = vadd.f32 %v4733, %v4734
    %v4736 = vrot.slane %v4735, 1
    %v4737 = vadd.f32 %v4735, %v4736
    %v4802 = vsel %vm3674, %v4365, %v4359
    %v4803 = vsel %vm3676, %v4371, %v4802
    %v4804 = vsel %vm3678, %v4377, %v4803
    %v4805 = vsel %vm3680, %v4383, %v4804
    %v4806 = vsel %vm3682, %v4389, %v4805
    %v4807 = vsel %vm3684, %v4395, %v4806
    %v4808 = vsel %vm3686, %v4401, %v4807
    %v4809 = vsel %vm3674, %v4413, %v4407
    %v4810 = vsel %vm3676, %v4419, %v4809
    %v4811 = vsel %vm3678, %v4425, %v4810
    %v4812 = vsel %vm3680, %v4431, %v4811
    %v4813 = vsel %vm3682, %v4437, %v4812
    %v4814 = vsel %vm3684, %v4443, %v4813
    %v4815 = vsel %vm3686, %v4449, %v4814
    %v4816 = vsel %vm3674, %v4461, %v4455
    %v4817 = vsel %vm3676, %v4467, %v4816
    %v4818 = vsel %vm3678, %v4473, %v4817
    %v4819 = vsel %vm3680, %v4479, %v4818
    %v4820 = vsel %vm3682, %v4485, %v4819
    %v4821 = vsel %vm3684, %v4491, %v4820
    %v4822 = vsel %vm3686, %v4497, %v4821
    %v4823 = vsel %vm3674, %v4509, %v4503
    %v4824 = vsel %vm3676, %v4515, %v4823
    %v4825 = vsel %vm3678, %v4521, %v4824
    %v4826 = vsel %vm3680, %v4527, %v4825
    %v4827 = vsel %vm3682, %v4533, %v4826
    %v4828 = vsel %vm3684, %v4539, %v4827
    %v4829 = vsel %vm3686, %v4545, %v4828
    %v4830 = vsel %vm3674, %v4557, %v4551
    %v4831 = vsel %vm3676, %v4563, %v4830
    %v4832 = vsel %vm3678, %v4569, %v4831
    %v4833 = vsel %vm3680, %v4575, %v4832
    %v4834 = vsel %vm3682, %v4581, %v4833
    %v4835 = vsel %vm3684, %v4587, %v4834
    %v4836 = vsel %vm3686, %v4593, %v4835
    %v4837 = vsel %vm3674, %v4605, %v4599
    %v4838 = vsel %vm3676, %v4611, %v4837
    %v4839 = vsel %vm3678, %v4617, %v4838
    %v4840 = vsel %vm3680, %v4623, %v4839
    %v4841 = vsel %vm3682, %v4629, %v4840
    %v4842 = vsel %vm3684, %v4635, %v4841
    %v4843 = vsel %vm3686, %v4641, %v4842
    %v4844 = vsel %vm3674, %v4653, %v4647
    %v4845 = vsel %vm3676, %v4659, %v4844
    %v4846 = vsel %vm3678, %v4665, %v4845
    %v4847 = vsel %vm3680, %v4671, %v4846
    %v4848 = vsel %vm3682, %v4677, %v4847
    %v4849 = vsel %vm3684, %v4683, %v4848
    %v4850 = vsel %vm3686, %v4689, %v4849
    %v4851 = vsel %vm3674, %v4701, %v4695
    %v4852 = vsel %vm3676, %v4707, %v4851
    %v4853 = vsel %vm3678, %v4713, %v4852
    %v4854 = vsel %vm3680, %v4719, %v4853
    %v4855 = vsel %vm3682, %v4725, %v4854
    %v4856 = vsel %vm3684, %v4731, %v4855
    %v4857 = vsel %vm3686, %v4737, %v4856
    %v4866 = vld [vmem:[#allocation4] sm:$0xff]
    %v4867 = vld [vmem:[#allocation4 + $0x8] sm:$0xff]
    %v4868 = vld [vmem:[#allocation4 + $0x10] sm:$0xff]
    %v4869 = vld [vmem:[#allocation4 + $0x18] sm:$0xff]
    %v4870 = vld [vmem:[#allocation4 + $0x20] sm:$0xff]
    %v4871 = vld [vmem:[#allocation4 + $0x28] sm:$0xff]
    %v4872 = vld [vmem:[#allocation4 + $0x30] sm:$0xff]
    %v4873 = vld [vmem:[#allocation4 + $0x38] sm:$0xff]
    %v4874 = vld [vmem:[#allocation4 + $0x40] sm:$0xff]
    %v4875 = vld [vmem:[#allocation4 + $0x48] sm:$0xff]
    %v4876 = vld [vmem:[#allocation4 + $0x50] sm:$0xff]
    %v4877 = vld [vmem:[#allocation4 + $0x58] sm:$0xff]
    %v4878 = vld [vmem:[#allocation4 + $0x60] sm:$0xff]
    %v4879 = vld [vmem:[#allocation4 + $0x68] sm:$0xff]
    %v4880 = vld [vmem:[#allocation4 + $0x70] sm:$0xff]
    %v4881 = vld [vmem:[#allocation4 + $0x78] sm:$0xff]
    %v4882 = vld [vmem:[#allocation4 + $0x80] sm:$0xff]
    %v4883 = vld [vmem:[#allocation4 + $0x88] sm:$0xff]
    %v4884 = vld [vmem:[#allocation4 + $0x90] sm:$0xff]
    %v4885 = vld [vmem:[#allocation4 + $0x98] sm:$0xff]
    %v4886 = vld [vmem:[#allocation4 + $0xa0] sm:$0xff]
    %v4887 = vld [vmem:[#allocation4 + $0xa8] sm:$0xff]
    %v4888 = vld [vmem:[#allocation4 + $0xb0] sm:$0xff]
    %v4889 = vld [vmem:[#allocation4 + $0xb8] sm:$0xff]
    %v4890 = vld [vmem:[#allocation4 + $0xc0] sm:$0xff]
    %v4891 = vld [vmem:[#allocation4 + $0xc8] sm:$0xff]
    %v4892 = vld [vmem:[#allocation4 + $0xd0] sm:$0xff]
    %v4893 = vld [vmem:[#allocation4 + $0xd8] sm:$0xff]
    %v4894 = vld [vmem:[#allocation4 + $0xe0] sm:$0xff]
    %v4895 = vld [vmem:[#allocation4 + $0xe8] sm:$0xff]
    %v4896 = vld [vmem:[#allocation4 + $0xf0] sm:$0xff]
    %v4897 = vld [vmem:[#allocation4 + $0xf8] sm:$0xff]
    %4898 = vmatprep.subr.mxu0 0.0
    %4899 = vmatpush1.msra.mxu0 %v4866
    %4900 = vmatprep.subr.mxu0 0.0
    %4901 = vmatpush1.msra.mxu0 %v4867
    %4902 = vmatprep.subr.mxu0 0.0
    %4903 = vmatpush1.msra.mxu0 %v4868
    %4904 = vmatprep.subr.mxu0 0.0
    %4905 = vmatpush1.msra.mxu0 %v4869
    %4906 = vmatprep.subr.mxu0 0.0
    %4907 = vmatpush1.msra.mxu0 %v4870
    %4908 = vmatprep.subr.mxu0 0.0
    %4909 = vmatpush1.msra.mxu0 %v4871
    %4910 = vmatprep.subr.mxu0 0.0
    %4911 = vmatpush1.msra.mxu0 %v4872
    %4912 = vmatprep.subr.mxu0 0.0
    %4913 = vmatpush1.msra.mxu0 %v4873
    %4914 = vmatprep.subr.mxu0 0.0
    %4915 = vmatpush1.msra.mxu0 %v4874
    %4916 = vmatprep.subr.mxu0 0.0
    %4917 = vmatpush1.msra.mxu0 %v4875
    %4918 = vmatprep.subr.mxu0 0.0
    %4919 = vmatpush1.msra.mxu0 %v4876
    %4920 = vmatprep.subr.mxu0 0.0
    %4921 = vmatpush1.msra.mxu0 %v4877
    %4922 = vmatprep.subr.mxu0 0.0
    %4923 = vmatpush1.msra.mxu0 %v4878
    %4924 = vmatprep.subr.mxu0 0.0
    %4925 = vmatpush1.msra.mxu0 %v4879
    %4926 = vmatprep.subr.mxu0 0.0
    %4927 = vmatpush1.msra.mxu0 %v4880
    %4928 = vmatprep.subr.mxu0 0.0
    %4929 = vmatpush1.msra.mxu0 %v4881
    %4930 = vmatprep.subr.mxu0 0.0
    %4931 = vmatpush1.msra.mxu0 %v4882
    %4932 = vmatprep.subr.mxu0 0.0
    %4933 = vmatpush1.msra.mxu0 %v4883
    %4934 = vmatprep.subr.mxu0 0.0
    %4935 = vmatpush1.msra.mxu0 %v4884
    %4936 = vmatprep.subr.mxu0 0.0
    %4937 = vmatpush1.msra.mxu0 %v4885
    %4938 = vmatprep.subr.mxu0 0.0
    %4939 = vmatpush1.msra.mxu0 %v4886
    %4940 = vmatprep.subr.mxu0 0.0
    %4941 = vmatpush1.msra.mxu0 %v4887
    %4942 = vmatprep.subr.mxu0 0.0
    %4943 = vmatpush1.msra.mxu0 %v4888
    %4944 = vmatprep.subr.mxu0 0.0
    %4945 = vmatpush1.msra.mxu0 %v4889
    %4946 = vmatprep.subr.mxu0 0.0
    %4947 = vmatpush1.msra.mxu0 %v4890
    %4948 = vmatprep.subr.mxu0 0.0
    %4949 = vmatpush1.msra.mxu0 %v4891
    %4950 = vmatprep.subr.mxu0 0.0
    %4951 = vmatpush1.msra.mxu0 %v4892
    %4952 = vmatprep.subr.mxu0 0.0
    %4953 = vmatpush1.msra.mxu0 %v4893
    %4954 = vmatprep.subr.mxu0 0.0
    %4955 = vmatpush1.msra.mxu0 %v4894
    %4956 = vmatprep.subr.mxu0 0.0
    %4957 = vmatpush1.msra.mxu0 %v4895
    %4958 = vmatprep.subr.mxu0 0.0
    %4959 = vmatpush1.msra.mxu0 %v4896
    %4960 = vmatprep.subr.mxu0 0.0
    %4961 = vmatpush1.msra.mxu0 %v4897
    %4962 = vmatprep.mubr.f32.mxu0 %v4808
    %4963 = vmatmul.mubr.f32.gmra.mrb[0].mxu0 %v2409
    %v4964 = vpop.f32.mrb[0].mxu0
    %v4965 = vadd.f32 0.0, %v4964
    %v4966 = vpop.f32.mrb[0].mxu0
    %4967 = vmatprep.mubr.f32.mxu0 %v4815
    %4968 = vmatmul.mubr.f32.gmra.mrb[0].mxu0 %v2410
    %v4969 = vpop.f32.mrb[0].mxu0
    %v4970 = vadd.f32 0.0, %v4969
    %v4971 = vpop.f32.mrb[0].mxu0
    %4972 = vmatprep.mubr.f32.mxu0 %v4822
    %4973 = vmatmul.mubr.f32.gmra.mrb[0].mxu0 %v2411
    %v4974 = vpop.f32.mrb[0].mxu0
    %v4975 = vadd.f32 0.0, %v4974
    %v4976 = vpop.f32.mrb[0].mxu0
    %4977 = vmatprep.mubr.f32.mxu0 %v4829
    %4978 = vmatmul.mubr.f32.gmra.mrb[0].mxu0 %v2412
    %v4979 = vpop.f32.mrb[0].mxu0
    %v4980 = vadd.f32 0.0, %v4979
    %v4981 = vpop.f32.mrb[0].mxu0
    %4982 = vmatprep.mubr.f32.mxu0 %v4836
    %4983 = vmatmul.mubr.f32.gmra.mrb[0].mxu0 %v2413
    %v4984 = vpop.f32.mrb[0].mxu0
    %v4985 = vadd.f32 0.0, %v4984
    %v4986 = vpop.f32.mrb[0].mxu0
    %4987 = vmatprep.mubr.f32.mxu0 %v4843
    %4988 = vmatmul.mubr.f32.gmra.mrb[0].mxu0 %v2414
    %v4989 = vpop.f32.mrb[0].mxu0
    %v4990 = vadd.f32 0.0, %v4989
    %v4991 = vpop.f32.mrb[0].mxu0
    %4992 = vmatprep.mubr.f32.mxu0 %v4850
    %4993 = vmatmul.mubr.f32.gmra.mrb[0].mxu0 %v2415
    %v4994 = vpop.f32.mrb[0].mxu0
    %v4995 = vadd.f32 0.0, %v4994
    %v4996 = vpop.f32.mrb[0].mxu0
    %4997 = vmatprep.mubr.f32.mxu0 %v4857
    %4998 = vmatmul.mubr.f32.gmra.mrb[0].mxu0 %v2416
    %v4999 = vpop.f32.mrb[0].mxu0
    %v5000 = vadd.f32 0.0, %v4999
    %v5001 = vpop.f32.mrb[0].mxu0
    %5002 = vdwg.mxu0
    %v5003 = vmax.f32 %v4965, 0.0
    %v5004 = vmax.f32 %v4970, 0.0
    %v5005 = vmax.f32 %v4975, 0.0
    %v5006 = vmax.f32 %v4980, 0.0
    %v5007 = vmax.f32 %v4985, 0.0
    %v5008 = vmax.f32 %v4990, 0.0
    %v5009 = vmax.f32 %v4995, 0.0
    %v5010 = vmax.f32 %v5000, 0.0
    %v5011 = vld [vmem:[#allocation7] sm:$0xff]
    %v5012 = vld [vmem:[#allocation7 + $0x8] sm:$0xff]
    %v5013 = vld [vmem:[#allocation7 + $0x10] sm:$0xff]
    %v5014 = vld [vmem:[#allocation7 + $0x18] sm:$0xff]
    %v5015 = vld [vmem:[#allocation7 + $0x20] sm:$0xff]
    %v5016 = vld [vmem:[#allocation7 + $0x28] sm:$0xff]
    %v5017 = vld [vmem:[#allocation7 + $0x30] sm:$0xff]
    %v5018 = vld [vmem:[#allocation7 + $0x38] sm:$0xff]
    %v5019 = vld [vmem:[#allocation7 + $0x40] sm:$0xff]
    %v5020 = vld [vmem:[#allocation7 + $0x48] sm:$0xff]
    %v5021 = vld [vmem:[#allocation7 + $0x50] sm:$0xff]
    %v5022 = vld [vmem:[#allocation7 + $0x58] sm:$0xff]
    %v5023 = vld [vmem:[#allocation7 + $0x60] sm:$0xff]
    %v5024 = vld [vmem:[#allocation7 + $0x68] sm:$0xff]
    %v5025 = vld [vmem:[#allocation7 + $0x70] sm:$0xff]
    %v5026 = vld [vmem:[#allocation7 + $0x78] sm:$0xff]
    %5027 = vmatprep.subr.mxu0 0.0
    %5028 = vmatpush1.msra.mxu0 %v5011
    %5029 = vmatprep.subr.mxu0 0.0
    %5030 = vmatpush1.msra.mxu0 %v5012
    %5031 = vmatprep.subr.mxu0 0.0
    %5032 = vmatpush1.msra.mxu0 %v5013
    %5033 = vmatprep.subr.mxu0 0.0
    %5034 = vmatpush1.msra.mxu0 %v5014
    %5035 = vmatprep.subr.mxu0 0.0
    %5036 = vmatpush1.msra.mxu0 %v5015
    %5037 = vmatprep.subr.mxu0 0.0
    %5038 = vmatpush1.msra.mxu0 %v5016
    %5039 = vmatprep.subr.mxu0 0.0
    %5040 = vmatpush1.msra.mxu0 %v5017
    %5041 = vmatprep.subr.mxu0 0.0
    %5042 = vmatpush1.msra.mxu0 %v5018
    %5043 = vmatprep.subr.mxu0 0.0
    %5044 = vmatpush1.msra.mxu0 %v5019
    %5045 = vmatprep.subr.mxu0 0.0
    %5046 = vmatpush1.msra.mxu0 %v5020
    %5047 = vmatprep.subr.mxu0 0.0
    %5048 = vmatpush1.msra.mxu0 %v5021
    %5049 = vmatprep.subr.mxu0 0.0
    %5050 = vmatpush1.msra.mxu0 %v5022
    %5051 = vmatprep.subr.mxu0 0.0
    %5052 = vmatpush1.msra.mxu0 %v5023
    %5053 = vmatprep.subr.mxu0 0.0
    %5054 = vmatpush1.msra.mxu0 %v5024
    %5055 = vmatprep.subr.mxu0 0.0
    %5056 = vmatpush1.msra.mxu0 %v5025
    %5057 = vmatprep.subr.mxu0 0.0
    %5058 = vmatpush1.msra.mxu0 %v5026
    %5059 = vmatprep.subr.mxu0 0.0
    %5060 = vmatpush1.msra.mxu0 0.0
    %5061 = vmatprep.subr.mxu0 0.0
    %5062 = vmatpush1.msra.mxu0 0.0
    %5063 = vmatprep.subr.mxu0 0.0
    %5064 = vmatpush1.msra.mxu0 0.0
    %5065 = vmatprep.subr.mxu0 0.0
    %5066 = vmatpush1.msra.mxu0 0.0
    %5067 = vmatprep.subr.mxu0 0.0
    %5068 = vmatpush1.msra.mxu0 0.0
    %5069 = vmatprep.subr.mxu0 0.0
    %5070 = vmatpush1.msra.mxu0 0.0
    %5071 = vmatprep.subr.mxu0 0.0
    %5072 = vmatpush1.msra.mxu0 0.0
    %5073 = vmatprep.subr.mxu0 0.0
    %5074 = vmatpush1.msra.mxu0 0.0
    %5075 = vmatprep.subr.mxu0 0.0
    %5076 = vmatpush1.msra.mxu0 0.0
    %5077 = vmatprep.subr.mxu0 0.0
    %5078 = vmatpush1.msra.mxu0 0.0
    %5079 = vmatprep.subr.mxu0 0.0
    %5080 = vmatpush1.msra.mxu0 0.0
    %5081 = vmatprep.subr.mxu0 0.0
    %5082 = vmatpush1.msra.mxu0 0.0
    %5083 = vmatprep.subr.mxu0 0.0
    %5084 = vmatpush1.msra.mxu0 0.0
    %5085 = vmatprep.subr.mxu0 0.0
    %5086 = vmatpush1.msra.mxu0 0.0
    %5087 = vmatprep.subr.mxu0 0.0
    %5088 = vmatpush1.msra.mxu0 0.0
    %5089 = vmatprep.subr.mxu0 0.0
    %5090 = vmatpush1.msra.mxu0 0.0
    %5091 = vmatprep.mubr.f32.mxu0 0.0
    %5092 = vmatmul.mubr.f32.gmra.mrb[0].mxu0 %v5003
    %v5093 = vpop.f32.mrb[0].mxu0
    %v5094 = vadd.f32 0.0, %v5093
    %v5095 = vpop.f32.mrb[0].mxu0
    %5096 = vmatprep.mubr.f32.mxu0 0.0
    %5097 = vmatmul.mubr.f32.gmra.mrb[0].mxu0 %v5004
    %v5098 = vpop.f32.mrb[0].mxu0
    %v5099 = vadd.f32 0.0, %v5098
    %v5100 = vpop.f32.mrb[0].mxu0
    %5101 = vmatprep.mubr.f32.mxu0 0.0
    %5102 = vmatmul.mubr.f32.gmra.mrb[0].mxu0 %v5005
    %v5103 = vpop.f32.mrb[0].mxu0
    %v5104 = vadd.f32 0.0, %v5103
    %v5105 = vpop.f32.mrb[0].mxu0
    %5106 = vmatprep.mubr.f32.mxu0 0.0
    %5107 = vmatmul.mubr.f32.gmra.mrb[0].mxu0 %v5006
    %v5108 = vpop.f32.mrb[0].mxu0
    %v5109 = vadd.f32 0.0, %v5108
    %v5110 = vpop.f32.mrb[0].mxu0
    %5111 = vmatprep.mubr.f32.mxu0 0.0
    %5112 = vmatmul.mubr.f32.gmra.mrb[0].mxu0 %v5007
    %v5113 = vpop.f32.mrb[0].mxu0
    %v5114 = vadd.f32 0.0, %v5113
    %v5115 = vpop.f32.mrb[0].mxu0
    %5116 = vmatprep.mubr.f32.mxu0 0.0
    %5117 = vmatmul.mubr.f32.gmra.mrb[0].mxu0 %v5008
    %v5118 = vpop.f32.mrb[0].mxu0
    %v5119 = vadd.f32 0.0, %v5118
    %v5120 = vpop.f32.mrb[0].mxu0
    %5121 = vmatprep.mubr.f32.mxu0 0.0
    %5122 = vmatmul.mubr.f32.gmra.mrb[0].mxu0 %v5009
    %v5123 = vpop.f32.mrb[0].mxu0
    %v5124 = vadd.f32 0.0, %v5123
    %v5125 = vpop.f32.mrb[0].mxu0
    %5126 = vmatprep.mubr.f32.mxu0 0.0
    %5127 = vmatmul.mubr.f32.gmra.mrb[0].mxu0 %v5010
    %v5128 = vpop.f32.mrb[0].mxu0
    %v5129 = vadd.f32 0.0, %v5128
    %v5130 = vpop.f32.mrb[0].mxu0
    %5131 = vdwg.mxu0
    %5132 = vst [vmem:[#allocation9] sm:$0xff] %v5094
    %5133 = vst [vmem:[#allocation9 + $0x8] sm:$0xff] %v5099
    %5134 = vst [vmem:[#allocation9 + $0x10] sm:$0xff] %v5104
    %5135 = vst [vmem:[#allocation9 + $0x18] sm:$0xff] %v5109
    %5136 = vst [vmem:[#allocation9 + $0x20] sm:$0xff] %v5114
    %5137 = vst [vmem:[#allocation9 + $0x28] sm:$0xff] %v5119
    %5138 = vst [vmem:[#allocation9 + $0x30] sm:$0xff] %v5124
    %5139 = vst [vmem:[#allocation9 + $0x38] sm:$0xff] %v5129
    %5140 = vst.msk [vmem:[%s13] sm:$0xff] %vm3753, %v3834
    %5141 = vst.msk [vmem:[%s13 + $0x8] sm:$0xff] %vm3753, %v3835
    %5142 = vst.msk [vmem:[%s13 + $0x10] sm:$0xff] %vm3753, %v3836
    %5143 = vst.msk [vmem:[%s13 + $0x18] sm:$0xff] %vm3753, %v3837
    %5144 = vst.msk [vmem:[%s13 + $0x20] sm:$0xff] %vm3753, %v3838
    %5145 = vst.msk [vmem:[%s13 + $0x28] sm:$0xff] %vm3753, %v3839
    %5146 = vst.msk [vmem:[%s13 + $0x30] sm:$0xff] %vm3753, %v3840
    %5147 = vst.msk [vmem:[%s13 + $0x38] sm:$0xff] %vm3753, %v3841
    // Predicated region
    $region58: #{luong_decoder_forward.1} parent=1 // pred_check
      _
    $region59: #{luong_decoder_forward.1} parent=1 // pred_check_branch
      %5149 = sbr.rel (0) target = $region61
    $region60: #{luong_decoder_forward.1} parent=1 // pred_region
      %s5151 = ssub.s32 1024, 1024
      %5152 = vsyncadd [#allocation6], %s5151
      %s5153 = sshll.u32 [#allocation9], 4
      %s5154 = int_to_ptr.vmem [resolvable:$true] %s5153
      %5159 = dma.vmem_to_hbm [thread:$0]  %s5154, 1024, %s12, [#allocation6], 128, 128, 8
    $region61: #{luong_decoder_forward.1} parent=1 // pred_fallthru
      _
    // Predicated region
    $region62: #{luong_decoder_forward.1} parent=1 // pred_check
      _
    $region63: #{luong_decoder_forward.1} parent=1 // pred_check_branch
      %5161 = sbr.rel (0) target = $region65
    $region64: #{luong_decoder_forward.1} parent=1 // pred_region
      _
    $region65: #{luong_decoder_forward.1} parent=1 // pred_fallthru
      _
    // Predicated region
    $region66: #{luong_decoder_forward.1} parent=1 // pred_check
      _
    $region67: #{luong_decoder_forward.1} parent=1 // pred_check_branch
      %5163 = sbr.rel (0) target = $region69
    $region68: #{luong_decoder_forward.1} parent=1 // pred_region
      %5164 = dma.done [#allocation6], 1024
    $region69: #{luong_decoder_forward.1} parent=1 // pred_fallthru
      _
    // Predicated region
    $region70: #{luong_decoder_forward.1} parent=1 // pred_check
      _
    $region71: #{luong_decoder_forward.1} parent=1 // pred_check_branch
      %5166 = sbr.rel (0) target = $region73
    $region72: #{luong_decoder_forward.1} parent=1 // pred_region
      _
    $region73: #{luong_decoder_forward.1} parent=1 // pred_fallthru
      _
    %5167 = vsyncpa [#allocation5], 1
    %5168 = vsyncpa [#allocation8], 1
    %5169 = vsyncpa [#allocation6], 1

</llo_original>
